<compile_context>
chip_gen: v7x
topology: tpu7x:2x2x1
jax: 0.10.0
libtpu: 0.0.40
codegen_flags: <defaults>
</compile_context>

<pallas_src>
import functools
import math

import jax
import jax.numpy as jnp
from jax.experimental import pallas as pl
from jax.experimental.pallas import tpu as pltpu

LN_EPS = 1e-5        # Persimmon layer_norm_eps
MASK_VALUE = -1e30   # finite "minus infinity" for the causal mask
_FULLK_BYTE_BUDGET = 24 << 20   # double-buffered bf16 x+w blocks for full-K


# ---------------------------------------------------------------------------
# small helpers
# ---------------------------------------------------------------------------
def _layer_norm_f32(v, w, b):
    # PyTorch nn.LayerNorm semantics (biased variance over last dim), f32 stats.
    v = v.astype(jnp.float32)
    mu = jnp.mean(v, axis=-1, keepdims=True)
    var = jnp.mean((v - mu) ** 2, axis=-1, keepdims=True)
    return (v - mu) * jax.lax.rsqrt(var + LN_EPS) * w + b


def _tile_lane(dim, target):
    # Lane (last) block dim: multiple of 128 or the full dim.
    if dim <= target or dim % 128 != 0:
        return dim
    t = (target // 128) * 128
    while dim % t != 0:
        t -= 128
    return t


def _tile_sublane(dim, target):
    # Sublane (second-to-last) block dim: multiple of 8 or the full dim.
    if dim <= target or dim % 8 != 0:
        return dim
    t = (target // 8) * 8
    while dim % t != 0:
        t -= 8
    return t


def _compiler_params(dims, block_bytes, extra_bytes=0):
    # Double-buffered pipeline blocks + in-kernel f32 temporaries + headroom.
    est = 2 * int(sum(block_bytes)) + int(extra_bytes)
    limit = int(min(max(est + (16 << 20), 24 << 20), 56 << 20))
    return pltpu.CompilerParams(dimension_semantics=dims,
                                vmem_limit_bytes=limit)


# ---------------------------------------------------------------------------
# tiled matmul kernels (bf16 in, f32 math, bf16/f32 out)
#   full-K path: x block (tm, K) with index (i, 0) -> x DMA'd once per M-tile
#   (Pallas elides the re-copy because the block index is constant across j).
#   Optional fused LayerNorm on the LHS tile, fused bias/residual/relu^2.
# ---------------------------------------------------------------------------
def _mm_fullk_kernel(*refs, activation, has_ln, has_res):
    it = iter(refs)
    x_ref = next(it)
    w_ref = next(it)
    b_ref = next(it)
    lnw_ref = next(it) if has_ln else None
    lnb_ref = next(it) if has_ln else None
    r_ref = next(it) if has_res else None
    o_ref = next(it)

    x = x_ref[...]
    if has_ln:
        # LN recomputed per N-tile is cheap VPU work under MXU slack.
        x = _layer_norm_f32(x, lnw_ref[...], lnb_ref[...]).astype(jnp.bfloat16)
    y = jnp.dot(x, w_ref[...], preferred_element_type=jnp.float32) + b_ref[...]
    if has_res:
        y = y + r_ref[...].astype(jnp.float32)
    if activation == "relu2":                 # Persimmon hidden_act = relu(x)^2
        y = jnp.maximum(y, 0.0)
        y = y * y
    o_ref[...] = y.astype(o_ref.dtype)


def _mm_tiled_kernel(*refs, activation, has_res):
    it = iter(refs)
    x_ref = next(it)
    w_ref = next(it)
    b_ref = next(it)
    r_ref = next(it) if has_res else None
    o_ref = next(it)
    acc_ref = next(it)

    @pl.when(pl.program_id(2) == 0)
    def _():
        acc_ref[...] = jnp.zeros_like(acc_ref)

    acc_ref[...] += jnp.dot(x_ref[...], w_ref[...],
                            preferred_element_type=jnp.float32)

    @pl.when(pl.program_id(2) == pl.num_programs(2) - 1)
    def _():
        y = acc_ref[...] + b_ref[...]
        if has_res:
            y = y + r_ref[...].astype(jnp.float32)
        if activation == "relu2":
            y = jnp.maximum(y, 0.0)
            y = y * y
        o_ref[...] = y.astype(o_ref.dtype)


def _matmul(x, w, b, *, residual=None, ln=None, activation=None,
            out_dtype=jnp.bfloat16, tm_target=512, tn_target=512):
    """y = [LN](x) @ w + b (+ residual) (+ relu^2)."""
    M, K = x.shape
    K2, N = w.shape
    assert K == K2
    has_ln = ln is not None
    has_res = residual is not None

    tm = _tile_sublane(M, tm_target)
    tn = _tile_lane(N, tn_target)
    use_full_k = 2 * 2 * K * (tm + tn) <= _FULLK_BYTE_BUDGET
    if has_ln and not use_full_k:
        raise ValueError("LayerNorm fusion requires a full-K LHS block")

    if use_full_k:
        grid = (M // tm, N // tn)          # NOTE: >=2 blocks on a parallel axis
        in_specs = [pl.BlockSpec((tm, K), lambda i, j: (i, 0)),
                    pl.BlockSpec((K, tn), lambda i, j: (0, j)),
                    pl.BlockSpec((1, tn), lambda i, j: (0, j))]
        args = [x, w, b]
        block_bytes = [tm * K * 2, K * tn * 2, tn * 4]
        if has_ln:
            in_specs += [pl.BlockSpec((1, K), lambda i, j: (0, 0)),
                         pl.BlockSpec((1, K), lambda i, j: (0, 0))]
            args += [ln[0], ln[1]]
            block_bytes += [K * 4, K * 4]
        if has_res:
            in_specs.append(pl.BlockSpec((tm, tn), lambda i, j: (i, j)))
            args.append(residual)
            block_bytes.append(tm * tn * 2)
        block_bytes.append(tm * tn * 2)    # output block
        extra = tm * (K if has_ln else tn) * 4 + tm * tn * 4
        kernel = functools.partial(_mm_fullk_kernel, activation=activation,
                                   has_ln=has_ln, has_res=has_res)
        return pl.pallas_call(
            kernel,
            out_shape=jax.ShapeDtypeStruct((M, N), out_dtype),
            grid=grid,
            in_specs=in_specs,
            out_specs=pl.BlockSpec((tm, tn), lambda i, j: (i, j)),
            compiler_params=_compiler_params(("parallel", "parallel"),
                                             block_bytes, extra),
        )(*args)

    # --- tiled-K fallback (dense_4h_to_h, K = 4*H): f32 VMEM accumulator ----
    tn = _tile_lane(N, 1024)
    tk = _tile_lane(K, 2048)
    grid = (M // tm, N // tn, K // tk)
    in_specs = [pl.BlockSpec((tm, tk), lambda i, j, k: (i, k)),
                pl.BlockSpec((tk, tn), lambda i, j, k: (k, j)),
                pl.BlockSpec((1, tn), lambda i, j, k: (0, j))]
    args = [x, w, b]
    block_bytes = [tm * tk * 2, tk * tn * 2, tn * 4]
    if has_res:
        in_specs.append(pl.BlockSpec((tm, tn), lambda i, j, k: (i, j)))
        args.append(residual)
        block_bytes.append(tm * tn * 2)
    block_bytes.append(tm * tn * 2)
    kernel = functools.partial(_mm_tiled_kernel, activation=activation,
                               has_res=has_res)
    return pl.pallas_call(
        kernel,
        out_shape=jax.ShapeDtypeStruct((M, N), out_dtype),
        grid=grid,
        in_specs=in_specs,
        out_specs=pl.BlockSpec((tm, tn), lambda i, j, k: (i, j)),
        scratch_shapes=[pltpu.VMEM((tm, tn), jnp.float32)],
        compiler_params=_compiler_params(("parallel", "parallel", "arbitrary"),
                                         block_bytes, tm * tn * 4),
    )(*args)


# ---------------------------------------------------------------------------
# standalone LayerNorm (only used for the final model LayerNorm)
# ---------------------------------------------------------------------------
def _layernorm_kernel(x_ref, w_ref, b_ref, o_ref):
    o_ref[...] = _layer_norm_f32(x_ref[...], w_ref[...],
                                 b_ref[...]).astype(o_ref.dtype)


def _layernorm(x, w, b, *, out_dtype=jnp.float32, tm_target=256):
    M, H = x.shape
    tm = _tile_sublane(M, tm_target)
    block_bytes = [tm * H * 2, H * 4, H * 4, tm * H * 4]
    return pl.pallas_call(
        _layernorm_kernel,
        out_shape=jax.ShapeDtypeStruct((M, H), out_dtype),
        grid=(M // tm,),
        in_specs=[pl.BlockSpec((tm, H), lambda i: (i, 0)),
                  pl.BlockSpec((1, H), lambda i: (0, 0)),
                  pl.BlockSpec((1, H), lambda i: (0, 0))],
        out_specs=pl.BlockSpec((tm, H), lambda i: (i, 0)),
        compiler_params=_compiler_params(("parallel",), block_bytes,
                                         2 * tm * H * 4),
    )(x, w, b)


# ---------------------------------------------------------------------------
# q/k prep: reads the (M, 3H) fused QKV buffer directly (no host transposes),
# applies per-head LayerNorm + partial rotary, folds the 1/sqrt(HD) score scale
# into q, and writes lane-dense (M, H) q / k / v buffers.
# ---------------------------------------------------------------------------
def _qkv_prep_kernel(qkv_ref, cos_ref, sin_ref, qw_ref, qb_ref, kw_ref, kb_ref,
                     qo_ref, ko_ref, vo_ref,
                     *, num_heads, head_dim, rot_dim, scale):
    cos = cos_ref[...]                      # (tm, HD): 1.0 past rot_dim
    sin = sin_ref[...]                      # (tm, HD): 0.0 past rot_dim
    qw = qw_ref[...]
    qb = qb_ref[...]
    kw = kw_ref[...]
    kb = kb_ref[...]
    H = num_heads * head_dim
    half = rot_dim // 2

    def ln_rope(xh, w, b):
        xn = _layer_norm_f32(xh, w, b)      # (tm, HD) f32
        # rotate_half on the first rot_dim lanes: [-x2, x1]; pass-through lanes
        # are multiplied by sin == 0 so their content does not matter.
        parts = [-xn[:, half:rot_dim], xn[:, :half]]
        if rot_dim < head_dim:
            parts.append(xn[:, rot_dim:])
        xr = jnp.concatenate(parts, axis=-1)
        return xn * cos + xr * sin

    # v: plain copy out of the fused buffer (bias already added by the matmul).
    vo_ref[...] = qkv_ref[:, 2 * H:3 * H]

    for h in range(num_heads):
        lo = h * head_dim
        hi = lo + head_dim
        qo_ref[:, lo:hi] = (ln_rope(qkv_ref[:, lo:hi], qw, qb)
                            * scale).astype(qo_ref.dtype)
        ko_ref[:, lo:hi] = ln_rope(qkv_ref[:, H + lo:H + hi],
                                   kw, kb).astype(ko_ref.dtype)


def _qkv_prep(qkv, cos, sin, qw, qb, kw, kb, *, num_heads, head_dim, rot_dim,
              tm_target=128):
    M, three_h = qkv.shape
    H = num_heads * head_dim
    assert three_h == 3 * H
    tm = _tile_sublane(M, tm_target)
    scale = 1.0 / math.sqrt(head_dim)

    qkv_spec = pl.BlockSpec((tm, 3 * H), lambda i: (i, 0))
    pos_spec = pl.BlockSpec((tm, head_dim), lambda i: (i, 0))
    vec_spec = pl.BlockSpec((1, head_dim), lambda i: (0, 0))
    out_spec = pl.BlockSpec((tm, H), lambda i: (i, 0))
    out_sd = jax.ShapeDtypeStruct((M, H), jnp.bfloat16)

    block_bytes = [tm * 3 * H * 2, tm * head_dim * 4, tm * head_dim * 4,
                   4 * head_dim * 4, 3 * tm * H * 2]
    return pl.pallas_call(
        functools.partial(_qkv_prep_kernel, num_heads=num_heads,
                          head_dim=head_dim, rot_dim=rot_dim, scale=scale),
        out_shape=(out_sd, out_sd, out_sd),
        grid=(M // tm,),
        in_specs=[qkv_spec, pos_spec, pos_spec,
                  vec_spec, vec_spec, vec_spec, vec_spec],
        out_specs=(out_spec, out_spec, out_spec),
        compiler_params=_compiler_params(("parallel",), block_bytes,
                                         6 * tm * head_dim * 4),
    )(qkv, cos, sin, qw, qb, kw, kb)


# ---------------------------------------------------------------------------
# causal attention: grid = (batch, head_groups, q_tiles).  K/V for the whole
# sequence are resident per (batch, head_group) -- their block index does not
# depend on the q-tile axis, so the re-DMA is elided and KV is read once.
# Softmax is exact (f32, full-S row).  q is pre-scaled by 1/sqrt(HD).
# ---------------------------------------------------------------------------
def _attn_kernel(q_ref, k_ref, v_ref, o_ref, *, hpb, head_dim, tq, seq):
    qi = pl.program_id(2)
    rows = jax.lax.broadcasted_iota(jnp.int32, (tq, seq), 0) + qi * tq
    cols = jax.lax.broadcasted_iota(jnp.int32, (tq, seq), 1)
    causal = cols <= rows                    # built once, reused across heads

    for h in range(hpb):
        sl = slice(h * head_dim, (h + 1) * head_dim)
        q = q_ref[:, sl]                     # (tq, HD) bf16, pre-scaled
        k = k_ref[:, sl]                     # (S, HD)  bf16
        v = v_ref[:, sl]                     # (S, HD)  bf16
        s = jax.lax.dot_general(q, k, (((1,), (1,)), ((), ())),
                                preferred_element_type=jnp.float32)
        s = jnp.where(causal, s, MASK_VALUE)
        m = jnp.max(s, axis=-1, keepdims=True)
        p = jnp.exp(s - m)                   # masked cols underflow to exact 0
        denom = jnp.sum(p, axis=-1, keepdims=True)
        o = jnp.dot(p.astype(v.dtype), v, preferred_element_type=jnp.float32)
        o_ref[:, sl] = (o / denom).astype(o_ref.dtype)


def _attention(q, k, v, *, batch, seq, num_heads, head_dim, tq_target=256):
    M, H = q.shape
    assert M == batch * seq and H == num_heads * head_dim
    tq = _tile_sublane(seq, tq_target)
    n_q = seq // tq
    # Pack heads so every lane-dim block is >= 128 lanes (lane-dense stores).
    hpb = min(num_heads, max(1, 256 // head_dim))
    while num_heads % hpb:
        hpb -= 1
    n_g = num_heads // hpb
    cols = hpb * head_dim

    q_spec = pl.BlockSpec((tq, cols), lambda b, g, i: (b * n_q + i, g))
    kv_spec = pl.BlockSpec((seq, cols), lambda b, g, i: (b, g))
    block_bytes = [tq * cols * 2, seq * cols * 2, seq * cols * 2, tq * cols * 2]
    return pl.pallas_call(
        functools.partial(_attn_kernel, hpb=hpb, head_dim=head_dim,
                          tq=tq, seq=seq),
        out_shape=jax.ShapeDtypeStruct((M, H), jnp.bfloat16),
        grid=(batch, n_g, n_q),
        in_specs=[q_spec, kv_spec, kv_spec],
        out_specs=pl.BlockSpec((tq, cols), lambda b, g, i: (b * n_q + i, g)),
        compiler_params=_compiler_params(("parallel", "parallel", "parallel"),
                                         block_bytes, 4 * tq * seq * 4),
    )(q, k, v)


# ---------------------------------------------------------------------------
# Model (parameter setup + glue)
# ---------------------------------------------------------------------------
class FuyuModelWrapperPallas:
    """Pallas equivalent of FuyuModelWrapper.forward (Persimmon decoder stack)."""

    def __init__(self, config, key):
        self.config = config
        H = config["hidden_size"]
        I = config["intermediate_size"]
        NH = config["num_heads"]
        HD = H // NH
        self.hidden_size = H
        self.num_heads = NH
        self.head_dim = HD
        self.rot_dim = int(HD * config["partial_rotary_factor"])
        self.rope_theta = config["rope_theta"]

        def nrm(k, shape):
            return (jax.random.normal(k, shape, jnp.float32) * 0.02).astype(
                jnp.bfloat16)

        layers = []
        for lk in jax.random.split(key, config["num_layers"]):
            ks = jax.random.split(lk, 4)
            layers.append(dict(
                ln1_w=jnp.ones((1, H), jnp.float32),
                ln1_b=jnp.zeros((1, H), jnp.float32),
                # fused query_key_value: columns [q | k | v], head-major within
                # each block (a real checkpoint's interleaved layout would need
                # a one-time column permutation at load).
                w_qkv=nrm(ks[0], (H, 3 * H)),
                b_qkv=jnp.zeros((1, 3 * H), jnp.float32),
                qln_w=jnp.ones((1, HD), jnp.float32),
                qln_b=jnp.zeros((1, HD), jnp.float32),
                kln_w=jnp.ones((1, HD), jnp.float32),
                kln_b=jnp.zeros((1, HD), jnp.float32),
                w_o=nrm(ks[1], (H, H)),
                b_o=jnp.zeros((1, H), jnp.float32),
                ln2_w=jnp.ones((1, H), jnp.float32),
                ln2_b=jnp.zeros((1, H), jnp.float32),
                w_fc1=nrm(ks[2], (H, I)),            # dense_h_to_4h
                b_fc1=jnp.zeros((1, I), jnp.float32),
                w_fc2=nrm(ks[3], (I, H)),            # dense_4h_to_h
                b_fc2=jnp.zeros((1, H), jnp.float32),
            ))
        self.params = dict(
            layers=layers,
            final_ln_w=jnp.ones((1, H), jnp.float32),
            final_ln_b=jnp.zeros((1, H), jnp.float32),
        )
        self._forward_jit = jax.jit(self._forward)

    def _build_rotary(self, B, S):
        HD, rd = self.head_dim, self.rot_dim
        # position_ids = arange(0, S) per batch row-block (past length == 0)
        positions = jnp.arange(S, dtype=jnp.float32)
        inv_freq = 1.0 / (self.rope_theta **
                          (jnp.arange(0, rd, 2, dtype=jnp.float32) / rd))
        freqs = positions[:, None] * inv_freq[None, :]
        emb = jnp.concatenate([freqs, freqs], axis=-1)          # (S, rd)
        cos = jnp.cos(emb)
        sin = jnp.sin(emb)
        if rd < HD:   # pad so pass-through dims are identity under cos/sin mix
            cos = jnp.concatenate(
                [cos, jnp.ones((S, HD - rd), jnp.float32)], axis=-1)
            sin = jnp.concatenate(
                [sin, jnp.zeros((S, HD - rd), jnp.float32)], axis=-1)
        return jnp.tile(cos, (B, 1)), jnp.tile(sin, (B, 1))      # (B*S, HD)

    def _forward(self, params, inputs_embeds):
        B, S, H = inputs_embeds.shape
        NH, HD = self.num_heads, self.head_dim
        M = B * S
        cos, sin = self._build_rotary(B, S)

        x = inputs_embeds.astype(jnp.bfloat16).reshape(M, H)
        for lp in params["layers"]:
            # ---- self attention block (LN1 fused into the QKV matmul) ----
            qkv = _matmul(x, lp["w_qkv"], lp["b_qkv"],
                          ln=(lp["ln1_w"], lp["ln1_b"]))         # (M, 3H)
            qn, kn, vv = _qkv_prep(qkv, cos, sin,
                                   lp["qln_w"], lp["qln_b"],
                                   lp["kln_w"], lp["kln_b"],
                                   num_heads=NH, head_dim=HD,
                                   rot_dim=self.rot_dim)
            attn = _attention(qn, kn, vv, batch=B, seq=S,
                              num_heads=NH, head_dim=HD)         # (M, H)
            x = _matmul(attn, lp["w_o"], lp["b_o"], residual=x)  # + residual 1

            # ---- MLP block (LN2 fused into fc1, relu^2 activation) ----
            mlp = _matmul(x, lp["w_fc1"], lp["b_fc1"],
                          ln=(lp["ln2_w"], lp["ln2_b"]), activation="relu2")
            x = _matmul(mlp, lp["w_fc2"], lp["b_fc2"], residual=x)  # + res 2

        x = _layernorm(x, params["final_ln_w"], params["final_ln_b"],
                       out_dtype=jnp.float32)
        # return_dict=False -> tuple; last_hidden_state first.
        # TODO(synk): past_key_values (use_cache) / attentions / hidden_states
        # lists and attention_mask / padding handling are not materialized.
        return (x.reshape(B, S, H),)

    def __call__(self, inputs_embeds):
        return tuple(self._forward_jit(self.params, inputs_embeds))


if __name__ == "__main__":
    key = jax.random.PRNGKey(0)
    B, S, H, NH, n_layers = 2, 8, 32, 4, 2
    config = dict(
        hidden_size=H,
        num_heads=NH,
        num_layers=n_layers,
        intermediate_size=4 * H,
        partial_rotary_factor=0.5,   # Persimmon/Fuyu default
        rope_theta=25000.0,          # Persimmon default
    )
    k_in, k_par = jax.random.split(key)
    inputs_embeds = jax.random.normal(k_in, (B, S, H), jnp.float32)

    model = FuyuModelWrapperPallas(config, k_par)
    outputs = model(inputs_embeds)
    outputs = jax.block_until_ready(outputs)

    last_hidden = outputs[0]
    assert last_hidden.shape == (B, S, H)
    assert last_hidden.dtype == jnp.float32
    assert bool(jnp.all(jnp.isfinite(last_hidden)))
    print("KERNEL_OK")
</pallas_src>

<mosaic_0001>
module attributes {stable_mosaic.version = 11 : i64} {
  func.func @_attn_kernel(%arg0: i32, %arg1: i32, %arg2: i32, %arg3: memref<8x32xbf16, #tpu.memory_space<vmem>>, %arg4: memref<8x32xbf16, #tpu.memory_space<vmem>>, %arg5: memref<8x32xbf16, #tpu.memory_space<vmem>>, %arg6: memref<8x32xbf16, #tpu.memory_space<vmem>>) attributes {dimension_semantics = [#tpu.dimension_semantics<parallel>, #tpu.dimension_semantics<parallel>, #tpu.dimension_semantics<parallel>], iteration_bounds = array<i64: 2, 1, 1>, scalar_prefetch = 0 : i64, scratch_operands = 0 : i64, tpu.core_type = #tpu.core_type<tc>, window_params = [{transform_indices = @transform_0, window_bounds = array<i64: 8, 32>}, {transform_indices = @transform_1, window_bounds = array<i64: 8, 32>}, {transform_indices = @transform_2, window_bounds = array<i64: 8, 32>}, {transform_indices = @transform_3, window_bounds = array<i64: 8, 32>}]} {
    %0 = tpu.iota {dimensions = array<i32: 0>} : vector<8x8xi32>
    %c8_i32 = arith.constant 8 : i32
    %1 = arith.muli %arg2, %c8_i32 : i32
    %2 = vector.broadcast %1 : i32 to vector<8x8xi32>
    %3 = arith.addi %0, %2 : vector<8x8xi32>
    %4 = tpu.iota {dimensions = array<i32: 1>} : vector<8x8xi32>
    %5 = arith.cmpi sle, %4, %3 : vector<8x8xi32>
    %c0 = arith.constant 0 : index
    %c0_0 = arith.constant 0 : index
    %6 = vector.load %arg3[%c0, %c0_0] : memref<8x32xbf16, #tpu.memory_space<vmem>>, vector<8x8xbf16>
    %c0_1 = arith.constant 0 : index
    %c0_2 = arith.constant 0 : index
    %7 = vector.load %arg4[%c0_1, %c0_2] : memref<8x32xbf16, #tpu.memory_space<vmem>>, vector<8x8xbf16>
    %c0_3 = arith.constant 0 : index
    %c0_4 = arith.constant 0 : index
    %8 = vector.load %arg5[%c0_3, %c0_4] : memref<8x32xbf16, #tpu.memory_space<vmem>>, vector<8x8xbf16>
    %cst = arith.constant dense<0.000000e+00> : vector<8x8xf32>
    %9 = tpu.matmul %6, %7, %cst {dimension_numbers = #tpu.dot_dimension_numbers<[1], [1], [0], [0], [0, 0, 1, 0], [], []>} : vector<8x8xbf16>, vector<8x8xbf16>, vector<8x8xf32> -> vector<8x8xf32>
    %cst_5 = arith.constant -1.000000e+30 : f32
    %10 = vector.broadcast %cst_5 : f32 to vector<8x8xf32>
    %11 = arith.select %5, %9, %10 : vector<8x8xi1>, vector<8x8xf32>
    %cst_6 = arith.constant dense<0xFF800000> : vector<8xf32>
    %12 = vector.multi_reduction <maximumf>, %11, %cst_6 [1] : vector<8x8xf32> to vector<8xf32>
    %13 = vector.shape_cast %12 : vector<8xf32> to vector<8x1xf32>
    %14 = vector.broadcast %13 : vector<8x1xf32> to vector<8x8xf32>
    %15 = arith.subf %11, %14 : vector<8x8xf32>
    %16 = math.exp %15 : vector<8x8xf32>
    %cst_7 = arith.constant dense<0.000000e+00> : vector<8xf32>
    %17 = vector.multi_reduction <add>, %16, %cst_7 [1] : vector<8x8xf32> to vector<8xf32>
    %18 = vector.shape_cast %17 : vector<8xf32> to vector<8x1xf32>
    %19 = arith.truncf %16 : vector<8x8xf32> to vector<8x8xbf16>
    %cst_8 = arith.constant dense<0.000000e+00> : vector<8x8xf32>
    %20 = tpu.matmul %19, %8, %cst_8 {dimension_numbers = #tpu.dot_dimension_numbers<[1], [0], [0], [1], [0, 0, 1, 1], [], []>} : vector<8x8xbf16>, vector<8x8xbf16>, vector<8x8xf32> -> vector<8x8xf32>
    %21 = vector.broadcast %18 : vector<8x1xf32> to vector<8x8xf32>
    %22 = arith.divf %20, %21 : vector<8x8xf32>
    %23 = arith.truncf %22 : vector<8x8xf32> to vector<8x8xbf16>
    %c0_9 = arith.constant 0 : index
    %c0_10 = arith.constant 0 : index
    %24 = vector.load %arg6[%c0_9, %c0_10] : memref<8x32xbf16, #tpu.memory_space<vmem>>, vector<8x8xbf16>
    tpu.vector_store %arg6[%c0_9, %c0_10], %23 {strides = array<i32>} : memref<8x32xbf16, #tpu.memory_space<vmem>>, vector<8x8xbf16>,
    %c0_11 = arith.constant 0 : index
    %c8 = arith.constant 8 : index
    %25 = vector.load %arg3[%c0_11, %c8] : memref<8x32xbf16, #tpu.memory_space<vmem>>, vector<8x8xbf16>
    %c0_12 = arith.constant 0 : index
    %c8_13 = arith.constant 8 : index
    %26 = vector.load %arg4[%c0_12, %c8_13] : memref<8x32xbf16, #tpu.memory_space<vmem>>, vector<8x8xbf16>
    %c0_14 = arith.constant 0 : index
    %c8_15 = arith.constant 8 : index
    %27 = vector.load %arg5[%c0_14, %c8_15] : memref<8x32xbf16, #tpu.memory_space<vmem>>, vector<8x8xbf16>
    %cst_16 = arith.constant dense<0.000000e+00> : vector<8x8xf32>
    %28 = tpu.matmul %25, %26, %cst_16 {dimension_numbers = #tpu.dot_dimension_numbers<[1], [1], [0], [0], [0, 0, 1, 0], [], []>} : vector<8x8xbf16>, vector<8x8xbf16>, vector<8x8xf32> -> vector<8x8xf32>
    %cst_17 = arith.constant -1.000000e+30 : f32
    %29 = vector.broadcast %cst_17 : f32 to vector<8x8xf32>
    %30 = arith.select %5, %28, %29 : vector<8x8xi1>, vector<8x8xf32>
    %cst_18 = arith.constant dense<0xFF800000> : vector<8xf32>
    %31 = vector.multi_reduction <maximumf>, %30, %cst_18 [1] : vector<8x8xf32> to vector<8xf32>
    %32 = vector.shape_cast %31 : vector<8xf32> to vector<8x1xf32>
    %33 = vector.broadcast %32 : vector<8x1xf32> to vector<8x8xf32>
    %34 = arith.subf %30, %33 : vector<8x8xf32>
    %35 = math.exp %34 : vector<8x8xf32>
    %cst_19 = arith.constant dense<0.000000e+00> : vector<8xf32>
    %36 = vector.multi_reduction <add>, %35, %cst_19 [1] : vector<8x8xf32> to vector<8xf32>
    %37 = vector.shape_cast %36 : vector<8xf32> to vector<8x1xf32>
    %38 = arith.truncf %35 : vector<8x8xf32> to vector<8x8xbf16>
    %cst_20 = arith.constant dense<0.000000e+00> : vector<8x8xf32>
    %39 = tpu.matmul %38, %27, %cst_20 {dimension_numbers = #tpu.dot_dimension_numbers<[1], [0], [0], [1], [0, 0, 1, 1], [], []>} : vector<8x8xbf16>, vector<8x8xbf16>, vector<8x8xf32> -> vector<8x8xf32>
    %40 = vector.broadcast %37 : vector<8x1xf32> to vector<8x8xf32>
    %41 = arith.divf %39, %40 : vector<8x8xf32>
    %42 = arith.truncf %41 : vector<8x8xf32> to vector<8x8xbf16>
    %c0_21 = arith.constant 0 : index
    %c8_22 = arith.constant 8 : index
    %43 = vector.load %arg6[%c0_21, %c8_22] : memref<8x32xbf16, #tpu.memory_space<vmem>>, vector<8x8xbf16>
    tpu.vector_store %arg6[%c0_21, %c8_22], %42 {strides = array<i32>} : memref<8x32xbf16, #tpu.memory_space<vmem>>, vector<8x8xbf16>,
    %c0_23 = arith.constant 0 : index
    %c16 = arith.constant 16 : index
    %44 = vector.load %arg3[%c0_23, %c16] : memref<8x32xbf16, #tpu.memory_space<vmem>>, vector<8x8xbf16>
    %c0_24 = arith.constant 0 : index
    %c16_25 = arith.constant 16 : index
    %45 = vector.load %arg4[%c0_24, %c16_25] : memref<8x32xbf16, #tpu.memory_space<vmem>>, vector<8x8xbf16>
    %c0_26 = arith.constant 0 : index
    %c16_27 = arith.constant 16 : index
    %46 = vector.load %arg5[%c0_26, %c16_27] : memref<8x32xbf16, #tpu.memory_space<vmem>>, vector<8x8xbf16>
    %cst_28 = arith.constant dense<0.000000e+00> : vector<8x8xf32>
    %47 = tpu.matmul %44, %45, %cst_28 {dimension_numbers = #tpu.dot_dimension_numbers<[1], [1], [0], [0], [0, 0, 1, 0], [], []>} : vector<8x8xbf16>, vector<8x8xbf16>, vector<8x8xf32> -> vector<8x8xf32>
    %cst_29 = arith.constant -1.000000e+30 : f32
    %48 = vector.broadcast %cst_29 : f32 to vector<8x8xf32>
    %49 = arith.select %5, %47, %48 : vector<8x8xi1>, vector<8x8xf32>
    %cst_30 = arith.constant dense<0xFF800000> : vector<8xf32>
    %50 = vector.multi_reduction <maximumf>, %49, %cst_30 [1] : vector<8x8xf32> to vector<8xf32>
    %51 = vector.shape_cast %50 : vector<8xf32> to vector<8x1xf32>
    %52 = vector.broadcast %51 : vector<8x1xf32> to vector<8x8xf32>
    %53 = arith.subf %49, %52 : vector<8x8xf32>
    %54 = math.exp %53 : vector<8x8xf32>
    %cst_31 = arith.constant dense<0.000000e+00> : vector<8xf32>
    %55 = vector.multi_reduction <add>, %54, %cst_31 [1] : vector<8x8xf32> to vector<8xf32>
    %56 = vector.shape_cast %55 : vector<8xf32> to vector<8x1xf32>
    %57 = arith.truncf %54 : vector<8x8xf32> to vector<8x8xbf16>
    %cst_32 = arith.constant dense<0.000000e+00> : vector<8x8xf32>
    %58 = tpu.matmul %57, %46, %cst_32 {dimension_numbers = #tpu.dot_dimension_numbers<[1], [0], [0], [1], [0, 0, 1, 1], [], []>} : vector<8x8xbf16>, vector<8x8xbf16>, vector<8x8xf32> -> vector<8x8xf32>
    %59 = vector.broadcast %56 : vector<8x1xf32> to vector<8x8xf32>
    %60 = arith.divf %58, %59 : vector<8x8xf32>
    %61 = arith.truncf %60 : vector<8x8xf32> to vector<8x8xbf16>
    %c0_33 = arith.constant 0 : index
    %c16_34 = arith.constant 16 : index
    %62 = vector.load %arg6[%c0_33, %c16_34] : memref<8x32xbf16, #tpu.memory_space<vmem>>, vector<8x8xbf16>
    tpu.vector_store %arg6[%c0_33, %c16_34], %61 {strides = array<i32>} : memref<8x32xbf16, #tpu.memory_space<vmem>>, vector<8x8xbf16>,
    %c0_35 = arith.constant 0 : index
    %c24 = arith.constant 24 : index
    %63 = vector.load %arg3[%c0_35, %c24] : memref<8x32xbf16, #tpu.memory_space<vmem>>, vector<8x8xbf16>
    %c0_36 = arith.constant 0 : index
    %c24_37 = arith.constant 24 : index
    %64 = vector.load %arg4[%c0_36, %c24_37] : memref<8x32xbf16, #tpu.memory_space<vmem>>, vector<8x8xbf16>
    %c0_38 = arith.constant 0 : index
    %c24_39 = arith.constant 24 : index
    %65 = vector.load %arg5[%c0_38, %c24_39] : memref<8x32xbf16, #tpu.memory_space<vmem>>, vector<8x8xbf16>
    %cst_40 = arith.constant dense<0.000000e+00> : vector<8x8xf32>
    %66 = tpu.matmul %63, %64, %cst_40 {dimension_numbers = #tpu.dot_dimension_numbers<[1], [1], [0], [0], [0, 0, 1, 0], [], []>} : vector<8x8xbf16>, vector<8x8xbf16>, vector<8x8xf32> -> vector<8x8xf32>
    %cst_41 = arith.constant -1.000000e+30 : f32
    %67 = vector.broadcast %cst_41 : f32 to vector<8x8xf32>
    %68 = arith.select %5, %66, %67 : vector<8x8xi1>, vector<8x8xf32>
    %cst_42 = arith.constant dense<0xFF800000> : vector<8xf32>
    %69 = vector.multi_reduction <maximumf>, %68, %cst_42 [1] : vector<8x8xf32> to vector<8xf32>
    %70 = vector.shape_cast %69 : vector<8xf32> to vector<8x1xf32>
    %71 = vector.broadcast %70 : vector<8x1xf32> to vector<8x8xf32>
    %72 = arith.subf %68, %71 : vector<8x8xf32>
    %73 = math.exp %72 : vector<8x8xf32>
    %cst_43 = arith.constant dense<0.000000e+00> : vector<8xf32>
    %74 = vector.multi_reduction <add>, %73, %cst_43 [1] : vector<8x8xf32> to vector<8xf32>
    %75 = vector.shape_cast %74 : vector<8xf32> to vector<8x1xf32>
    %76 = arith.truncf %73 : vector<8x8xf32> to vector<8x8xbf16>
    %cst_44 = arith.constant dense<0.000000e+00> : vector<8x8xf32>
    %77 = tpu.matmul %76, %65, %cst_44 {dimension_numbers = #tpu.dot_dimension_numbers<[1], [0], [0], [1], [0, 0, 1, 1], [], []>} : vector<8x8xbf16>, vector<8x8xbf16>, vector<8x8xf32> -> vector<8x8xf32>
    %78 = vector.broadcast %75 : vector<8x1xf32> to vector<8x8xf32>
    %79 = arith.divf %77, %78 : vector<8x8xf32>
    %80 = arith.truncf %79 : vector<8x8xf32> to vector<8x8xbf16>
    %c0_45 = arith.constant 0 : index
    %c24_46 = arith.constant 24 : index
    %81 = vector.load %arg6[%c0_45, %c24_46] : memref<8x32xbf16, #tpu.memory_space<vmem>>, vector<8x8xbf16>
    tpu.vector_store %arg6[%c0_45, %c24_46], %80 {strides = array<i32>} : memref<8x32xbf16, #tpu.memory_space<vmem>>, vector<8x8xbf16>,
    return
  }
  func.func @transform_0(%arg0: i32, %arg1: i32, %arg2: i32) -> (i32, i32) {
    %c1_i32 = arith.constant 1 : i32
    %0 = arith.muli %arg0, %c1_i32 : i32
    %1 = arith.addi %0, %arg2 : i32
    %c0_i32 = arith.constant 0 : i32
    return %1, %arg1 : i32, i32
  }
  func.func @transform_1(%arg0: i32, %arg1: i32, %arg2: i32) -> (i32, i32) {
    %c0_i32 = arith.constant 0 : i32
    return %arg0, %arg1 : i32, i32
  }
  func.func @transform_2(%arg0: i32, %arg1: i32, %arg2: i32) -> (i32, i32) {
    %c0_i32 = arith.constant 0 : i32
    return %arg0, %arg1 : i32, i32
  }
  func.func @transform_3(%arg0: i32, %arg1: i32, %arg2: i32) -> (i32, i32) {
    %c1_i32 = arith.constant 1 : i32
    %0 = arith.muli %arg0, %c1_i32 : i32
    %1 = arith.addi %0, %arg2 : i32
    %c0_i32 = arith.constant 0 : i32
    return %1, %arg1 : i32, i32
  }
}

module attributes {stable_mosaic.version = 11 : i64} {
  func.func @_mm_fullk_kernel(%arg0: i32, %arg1: i32, %arg2: memref<16x32xbf16, #tpu.memory_space<vmem>>, %arg3: memref<32x96xbf16, #tpu.memory_space<vmem>>, %arg4: memref<1x96xf32, #tpu.memory_space<vmem>>, %arg5: memref<1x32xf32, #tpu.memory_space<vmem>>, %arg6: memref<1x32xf32, #tpu.memory_space<vmem>>, %arg7: memref<16x96xbf16, #tpu.memory_space<vmem>>) attributes {dimension_semantics = [#tpu.dimension_semantics<parallel>, #tpu.dimension_semantics<parallel>], iteration_bounds = array<i64: 1, 1>, scalar_prefetch = 0 : i64, scratch_operands = 0 : i64, tpu.core_type = #tpu.core_type<tc>, window_params = [{transform_indices = @transform_0, window_bounds = array<i64: 16, 32>}, {transform_indices = @transform_1, window_bounds = array<i64: 32, 96>}, {transform_indices = @transform_2, window_bounds = array<i64: 1, 96>}, {pipeline_mode = #tpu.pipeline_mode<synchronous>, transform_indices = @transform_3, window_bounds = array<i64: 1, 32>}, {pipeline_mode = #tpu.pipeline_mode<synchronous>, transform_indices = @transform_4, window_bounds = array<i64: 1, 32>}, {transform_indices = @transform_5, window_bounds = array<i64: 16, 96>}]} {
    %c0 = arith.constant 0 : index
    %c0_0 = arith.constant 0 : index
    %0 = vector.load %arg2[%c0, %c0_0] : memref<16x32xbf16, #tpu.memory_space<vmem>>, vector<16x32xbf16>
    %c0_1 = arith.constant 0 : index
    %c0_2 = arith.constant 0 : index
    %1 = vector.load %arg5[%c0_1, %c0_2] : memref<1x32xf32, #tpu.memory_space<vmem>>, vector<1x32xf32>
    %c0_3 = arith.constant 0 : index
    %c0_4 = arith.constant 0 : index
    %2 = vector.load %arg6[%c0_3, %c0_4] : memref<1x32xf32, #tpu.memory_space<vmem>>, vector<1x32xf32>
    %3 = arith.extf %0 : vector<16x32xbf16> to vector<16x32xf32>
    %cst = arith.constant dense<0.000000e+00> : vector<16xf32>
    %4 = vector.multi_reduction <add>, %3, %cst [1] : vector<16x32xf32> to vector<16xf32>
    %5 = vector.shape_cast %4 : vector<16xf32> to vector<16x1xf32>
    %cst_5 = arith.constant 3.200000e+01 : f32
    %6 = vector.broadcast %cst_5 : f32 to vector<16x1xf32>
    %7 = arith.divf %5, %6 : vector<16x1xf32>
    %8 = vector.broadcast %7 : vector<16x1xf32> to vector<16x32xf32>
    %9 = arith.subf %3, %8 : vector<16x32xf32>
    %10 = arith.mulf %9, %9 : vector<16x32xf32>
    %cst_6 = arith.constant dense<0.000000e+00> : vector<16xf32>
    %11 = vector.multi_reduction <add>, %10, %cst_6 [1] : vector<16x32xf32> to vector<16xf32>
    %12 = vector.shape_cast %11 : vector<16xf32> to vector<16x1xf32>
    %cst_7 = arith.constant 3.200000e+01 : f32
    %13 = vector.broadcast %cst_7 : f32 to vector<16x1xf32>
    %14 = arith.divf %12, %13 : vector<16x1xf32>
    %15 = vector.broadcast %7 : vector<16x1xf32> to vector<16x32xf32>
    %16 = arith.subf %3, %15 : vector<16x32xf32>
    %cst_8 = arith.constant 9.99999974E-6 : f32
    %17 = vector.broadcast %cst_8 : f32 to vector<16x1xf32>
    %18 = arith.addf %14, %17 : vector<16x1xf32>
    %19 = math.rsqrt %18 : vector<16x1xf32>
    %20 = vector.broadcast %19 : vector<16x1xf32> to vector<16x32xf32>
    %21 = arith.mulf %16, %20 : vector<16x32xf32>
    %22 = vector.broadcast %1 : vector<1x32xf32> to vector<16x32xf32>
    %23 = arith.mulf %21, %22 : vector<16x32xf32>
    %24 = vector.broadcast %2 : vector<1x32xf32> to vector<16x32xf32>
    %25 = arith.addf %23, %24 : vector<16x32xf32>
    %26 = arith.truncf %25 : vector<16x32xf32> to vector<16x32xbf16>
    %c0_9 = arith.constant 0 : index
    %c0_10 = arith.constant 0 : index
    %27 = vector.load %arg3[%c0_9, %c0_10] : memref<32x96xbf16, #tpu.memory_space<vmem>>, vector<32x96xbf16>
    %cst_11 = arith.constant dense<0.000000e+00> : vector<16x96xf32>
    %28 = tpu.matmul %26, %27, %cst_11 {dimension_numbers = #tpu.dot_dimension_numbers<[1], [0], [0], [1], [0, 0, 1, 1], [], []>} : vector<16x32xbf16>, vector<32x96xbf16>, vector<16x96xf32> -> vector<16x96xf32>
    %c0_12 = arith.constant 0 : index
    %c0_13 = arith.constant 0 : index
    %29 = vector.load %arg4[%c0_12, %c0_13] : memref<1x96xf32, #tpu.memory_space<vmem>>, vector<1x96xf32>
    %30 = vector.broadcast %29 : vector<1x96xf32> to vector<16x96xf32>
    %31 = arith.addf %28, %30 : vector<16x96xf32>
    %32 = arith.truncf %31 : vector<16x96xf32> to vector<16x96xbf16>
    %c0_14 = arith.constant 0 : index
    %c0_15 = arith.constant 0 : index
    %33 = vector.load %arg7[%c0_14, %c0_15] : memref<16x96xbf16, #tpu.memory_space<vmem>>, vector<16x96xbf16>
    tpu.vector_store %arg7[%c0_14, %c0_15], %32 {strides = array<i32>} : memref<16x96xbf16, #tpu.memory_space<vmem>>, vector<16x96xbf16>,
    return
  }
  func.func @transform_0(%arg0: i32, %arg1: i32) -> (i32, i32) {
    %c0_i32 = arith.constant 0 : i32
    %c0_i32_0 = arith.constant 0 : i32
    return %arg0, %c0_i32 : i32, i32
  }
  func.func @transform_1(%arg0: i32, %arg1: i32) -> (i32, i32) {
    %c0_i32 = arith.constant 0 : i32
    %c0_i32_0 = arith.constant 0 : i32
    return %c0_i32, %arg1 : i32, i32
  }
  func.func @transform_2(%arg0: i32, %arg1: i32) -> (i32, i32) {
    %c0_i32 = arith.constant 0 : i32
    %c0_i32_0 = arith.constant 0 : i32
    return %c0_i32, %arg1 : i32, i32
  }
  func.func @transform_3(%arg0: i32, %arg1: i32) -> (i32, i32) {
    %c0_i32 = arith.constant 0 : i32
    %c0_i32_0 = arith.constant 0 : i32
    %c0_i32_1 = arith.constant 0 : i32
    return %c0_i32, %c0_i32_0 : i32, i32
  }
  func.func @transform_4(%arg0: i32, %arg1: i32) -> (i32, i32) {
    %c0_i32 = arith.constant 0 : i32
    %c0_i32_0 = arith.constant 0 : i32
    %c0_i32_1 = arith.constant 0 : i32
    return %c0_i32, %c0_i32_0 : i32, i32
  }
  func.func @transform_5(%arg0: i32, %arg1: i32) -> (i32, i32) {
    %c0_i32 = arith.constant 0 : i32
    return %arg0, %arg1 : i32, i32
  }
}

module attributes {stable_mosaic.version = 11 : i64} {
  func.func @_mm_fullk_kernel(%arg0: i32, %arg1: i32, %arg2: memref<16x32xbf16, #tpu.memory_space<vmem>>, %arg3: memref<32x32xbf16, #tpu.memory_space<vmem>>, %arg4: memref<1x32xf32, #tpu.memory_space<vmem>>, %arg5: memref<16x32xbf16, #tpu.memory_space<vmem>>, %arg6: memref<16x32xbf16, #tpu.memory_space<vmem>>) attributes {dimension_semantics = [#tpu.dimension_semantics<parallel>, #tpu.dimension_semantics<parallel>], iteration_bounds = array<i64: 1, 1>, scalar_prefetch = 0 : i64, scratch_operands = 0 : i64, tpu.core_type = #tpu.core_type<tc>, window_params = [{transform_indices = @transform_0, window_bounds = array<i64: 16, 32>}, {transform_indices = @transform_1, window_bounds = array<i64: 32, 32>}, {transform_indices = @transform_2, window_bounds = array<i64: 1, 32>}, {transform_indices = @transform_3, window_bounds = array<i64: 16, 32>}, {transform_indices = @transform_4, window_bounds = array<i64: 16, 32>}]} {
    %c0 = arith.constant 0 : index
    %c0_0 = arith.constant 0 : index
    %0 = vector.load %arg2[%c0, %c0_0] : memref<16x32xbf16, #tpu.memory_space<vmem>>, vector<16x32xbf16>
    %c0_1 = arith.constant 0 : index
    %c0_2 = arith.constant 0 : index
    %1 = vector.load %arg3[%c0_1, %c0_2] : memref<32x32xbf16, #tpu.memory_space<vmem>>, vector<32x32xbf16>
    %cst = arith.constant dense<0.000000e+00> : vector<16x32xf32>
    %2 = tpu.matmul %0, %1, %cst {dimension_numbers = #tpu.dot_dimension_numbers<[1], [0], [0], [1], [0, 0, 1, 1], [], []>} : vector<16x32xbf16>, vector<32x32xbf16>, vector<16x32xf32> -> vector<16x32xf32>
    %c0_3 = arith.constant 0 : index
    %c0_4 = arith.constant 0 : index
    %3 = vector.load %arg4[%c0_3, %c0_4] : memref<1x32xf32, #tpu.memory_space<vmem>>, vector<1x32xf32>
    %4 = vector.broadcast %3 : vector<1x32xf32> to vector<16x32xf32>
    %5 = arith.addf %2, %4 : vector<16x32xf32>
    %c0_5 = arith.constant 0 : index
    %c0_6 = arith.constant 0 : index
    %6 = vector.load %arg5[%c0_5, %c0_6] : memref<16x32xbf16, #tpu.memory_space<vmem>>, vector<16x32xbf16>
    %7 = arith.extf %6 : vector<16x32xbf16> to vector<16x32xf32>
    %8 = arith.addf %5, %7 : vector<16x32xf32>
    %9 = arith.truncf %8 : vector<16x32xf32> to vector<16x32xbf16>
    %c0_7 = arith.constant 0 : index
    %c0_8 = arith.constant 0 : index
    %10 = vector.load %arg6[%c0_7, %c0_8] : memref<16x32xbf16, #tpu.memory_space<vmem>>, vector<16x32xbf16>
    tpu.vector_store %arg6[%c0_7, %c0_8], %9 {strides = array<i32>} : memref<16x32xbf16, #tpu.memory_space<vmem>>, vector<16x32xbf16>,
    return
  }
  func.func @transform_0(%arg0: i32, %arg1: i32) -> (i32, i32) {
    %c0_i32 = arith.constant 0 : i32
    %c0_i32_0 = arith.constant 0 : i32
    return %arg0, %c0_i32 : i32, i32
  }
  func.func @transform_1(%arg0: i32, %arg1: i32) -> (i32, i32) {
    %c0_i32 = arith.constant 0 : i32
    %c0_i32_0 = arith.constant 0 : i32
    return %c0_i32, %arg1 : i32, i32
  }
  func.func @transform_2(%arg0: i32, %arg1: i32) -> (i32, i32) {
    %c0_i32 = arith.constant 0 : i32
    %c0_i32_0 = arith.constant 0 : i32
    return %c0_i32, %arg1 : i32, i32
  }
  func.func @transform_3(%arg0: i32, %arg1: i32) -> (i32, i32) {
    %c0_i32 = arith.constant 0 : i32
    return %arg0, %arg1 : i32, i32
  }
  func.func @transform_4(%arg0: i32, %arg1: i32) -> (i32, i32) {
    %c0_i32 = arith.constant 0 : i32
    return %arg0, %arg1 : i32, i32
  }
}

module attributes {stable_mosaic.version = 11 : i64} {
  func.func @_qkv_prep_kernel(%arg0: i32, %arg1: memref<16x96xbf16, #tpu.memory_space<vmem>>, %arg2: memref<16x8xf32, #tpu.memory_space<vmem>>, %arg3: memref<16x8xf32, #tpu.memory_space<vmem>>, %arg4: memref<1x8xf32, #tpu.memory_space<vmem>>, %arg5: memref<1x8xf32, #tpu.memory_space<vmem>>, %arg6: memref<1x8xf32, #tpu.memory_space<vmem>>, %arg7: memref<1x8xf32, #tpu.memory_space<vmem>>, %arg8: memref<16x32xbf16, #tpu.memory_space<vmem>>, %arg9: memref<16x32xbf16, #tpu.memory_space<vmem>>, %arg10: memref<16x32xbf16, #tpu.memory_space<vmem>>) attributes {dimension_semantics = [#tpu.dimension_semantics<parallel>], iteration_bounds = array<i64: 1>, scalar_prefetch = 0 : i64, scratch_operands = 0 : i64, tpu.core_type = #tpu.core_type<tc>, window_params = [{transform_indices = @transform_0, window_bounds = array<i64: 16, 96>}, {transform_indices = @transform_1, window_bounds = array<i64: 16, 8>}, {transform_indices = @transform_2, window_bounds = array<i64: 16, 8>}, {pipeline_mode = #tpu.pipeline_mode<synchronous>, transform_indices = @transform_3, window_bounds = array<i64: 1, 8>}, {pipeline_mode = #tpu.pipeline_mode<synchronous>, transform_indices = @transform_4, window_bounds = array<i64: 1, 8>}, {pipeline_mode = #tpu.pipeline_mode<synchronous>, transform_indices = @transform_5, window_bounds = array<i64: 1, 8>}, {pipeline_mode = #tpu.pipeline_mode<synchronous>, transform_indices = @transform_6, window_bounds = array<i64: 1, 8>}, {transform_indices = @transform_7, window_bounds = array<i64: 16, 32>}, {transform_indices = @transform_8, window_bounds = array<i64: 16, 32>}, {transform_indices = @transform_9, window_bounds = array<i64: 16, 32>}]} {
    %c0 = arith.constant 0 : index
    %c0_0 = arith.constant 0 : index
    %0 = vector.load %arg2[%c0, %c0_0] : memref<16x8xf32, #tpu.memory_space<vmem>>, vector<16x8xf32>
    %c0_1 = arith.constant 0 : index
    %c0_2 = arith.constant 0 : index
    %1 = vector.load %arg3[%c0_1, %c0_2] : memref<16x8xf32, #tpu.memory_space<vmem>>, vector<16x8xf32>
    %c0_3 = arith.constant 0 : index
    %c0_4 = arith.constant 0 : index
    %2 = vector.load %arg4[%c0_3, %c0_4] : memref<1x8xf32, #tpu.memory_space<vmem>>, vector<1x8xf32>
    %c0_5 = arith.constant 0 : index
    %c0_6 = arith.constant 0 : index
    %3 = vector.load %arg5[%c0_5, %c0_6] : memref<1x8xf32, #tpu.memory_space<vmem>>, vector<1x8xf32>
    %c0_7 = arith.constant 0 : index
    %c0_8 = arith.constant 0 : index
    %4 = vector.load %arg6[%c0_7, %c0_8] : memref<1x8xf32, #tpu.memory_space<vmem>>, vector<1x8xf32>
    %c0_9 = arith.constant 0 : index
    %c0_10 = arith.constant 0 : index
    %5 = vector.load %arg7[%c0_9, %c0_10] : memref<1x8xf32, #tpu.memory_space<vmem>>, vector<1x8xf32>
    %c0_11 = arith.constant 0 : index
    %c64 = arith.constant 64 : index
    %6 = vector.load %arg1[%c0_11, %c64] : memref<16x96xbf16, #tpu.memory_space<vmem>>, vector<16x32xbf16>
    %c0_12 = arith.constant 0 : index
    %c0_13 = arith.constant 0 : index
    %7 = vector.load %arg10[%c0_12, %c0_13] : memref<16x32xbf16, #tpu.memory_space<vmem>>, vector<16x32xbf16>
    tpu.vector_store %arg10[%c0_12, %c0_13], %6 {strides = array<i32>} : memref<16x32xbf16, #tpu.memory_space<vmem>>, vector<16x32xbf16>,
    %c0_14 = arith.constant 0 : index
    %c0_15 = arith.constant 0 : index
    %8 = vector.load %arg1[%c0_14, %c0_15] : memref<16x96xbf16, #tpu.memory_space<vmem>>, vector<16x8xbf16>
    %9 = arith.extf %8 : vector<16x8xbf16> to vector<16x8xf32>
    %cst = arith.constant dense<0.000000e+00> : vector<16xf32>
    %10 = vector.multi_reduction <add>, %9, %cst [1] : vector<16x8xf32> to vector<16xf32>
    %11 = vector.shape_cast %10 : vector<16xf32> to vector<16x1xf32>
    %cst_16 = arith.constant 8.000000e+00 : f32
    %12 = vector.broadcast %cst_16 : f32 to vector<16x1xf32>
    %13 = arith.divf %11, %12 : vector<16x1xf32>
    %14 = vector.broadcast %13 : vector<16x1xf32> to vector<16x8xf32>
    %15 = arith.subf %9, %14 : vector<16x8xf32>
    %16 = arith.mulf %15, %15 : vector<16x8xf32>
    %cst_17 = arith.constant dense<0.000000e+00> : vector<16xf32>
    %17 = vector.multi_reduction <add>, %16, %cst_17 [1] : vector<16x8xf32> to vector<16xf32>
    %18 = vector.shape_cast %17 : vector<16xf32> to vector<16x1xf32>
    %cst_18 = arith.constant 8.000000e+00 : f32
    %19 = vector.broadcast %cst_18 : f32 to vector<16x1xf32>
    %20 = arith.divf %18, %19 : vector<16x1xf32>
    %21 = vector.broadcast %13 : vector<16x1xf32> to vector<16x8xf32>
    %22 = arith.subf %9, %21 : vector<16x8xf32>
    %cst_19 = arith.constant 9.99999974E-6 : f32
    %23 = vector.broadcast %cst_19 : f32 to vector<16x1xf32>
    %24 = arith.addf %20, %23 : vector<16x1xf32>
    %25 = math.rsqrt %24 : vector<16x1xf32>
    %26 = vector.broadcast %25 : vector<16x1xf32> to vector<16x8xf32>
    %27 = arith.mulf %22, %26 : vector<16x8xf32>
    %28 = vector.broadcast %2 : vector<1x8xf32> to vector<16x8xf32>
    %29 = arith.mulf %27, %28 : vector<16x8xf32>
    %30 = vector.broadcast %3 : vector<1x8xf32> to vector<16x8xf32>
    %31 = arith.addf %29, %30 : vector<16x8xf32>
    %32 = vector.extract_strided_slice %31 {offsets = [0, 2], sizes = [16, 2], strides = [1, 1]} : vector<16x8xf32> to vector<16x2xf32>
    %cst_20 = arith.constant 0.000000e+00 : f32
    %33 = vector.broadcast %cst_20 : f32 to vector<16x2xf32>
    %34 = arith.subf %33, %32 : vector<16x2xf32>
    %35 = vector.extract_strided_slice %31 {offsets = [0, 0], sizes = [16, 2], strides = [1, 1]} : vector<16x8xf32> to vector<16x2xf32>
    %36 = vector.extract_strided_slice %31 {offsets = [0, 4], sizes = [16, 4], strides = [1, 1]} : vector<16x8xf32> to vector<16x4xf32>
    %37 = tpu.concatenate %34, %35, %36 in 1 : vector<16x2xf32>, vector<16x2xf32>, vector<16x4xf32> -> vector<16x8xf32>
    %38 = arith.mulf %31, %0 : vector<16x8xf32>
    %39 = arith.mulf %37, %1 : vector<16x8xf32>
    %40 = arith.addf %38, %39 : vector<16x8xf32>
    %cst_21 = arith.constant 0.353553385 : f32
    %41 = vector.broadcast %cst_21 : f32 to vector<16x8xf32>
    %42 = arith.mulf %40, %41 : vector<16x8xf32>
    %43 = arith.truncf %42 : vector<16x8xf32> to vector<16x8xbf16>
    %c0_22 = arith.constant 0 : index
    %c0_23 = arith.constant 0 : index
    %44 = vector.load %arg8[%c0_22, %c0_23] : memref<16x32xbf16, #tpu.memory_space<vmem>>, vector<16x8xbf16>
    tpu.vector_store %arg8[%c0_22, %c0_23], %43 {strides = array<i32>} : memref<16x32xbf16, #tpu.memory_space<vmem>>, vector<16x8xbf16>,
    %c0_24 = arith.constant 0 : index
    %c32 = arith.constant 32 : index
    %45 = vector.load %arg1[%c0_24, %c32] : memref<16x96xbf16, #tpu.memory_space<vmem>>, vector<16x8xbf16>
    %46 = arith.extf %45 : vector<16x8xbf16> to vector<16x8xf32>
    %cst_25 = arith.constant dense<0.000000e+00> : vector<16xf32>
    %47 = vector.multi_reduction <add>, %46, %cst_25 [1] : vector<16x8xf32> to vector<16xf32>
    %48 = vector.shape_cast %47 : vector<16xf32> to vector<16x1xf32>
    %cst_26 = arith.constant 8.000000e+00 : f32
    %49 = vector.broadcast %cst_26 : f32 to vector<16x1xf32>
    %50 = arith.divf %48, %49 : vector<16x1xf32>
    %51 = vector.broadcast %50 : vector<16x1xf32> to vector<16x8xf32>
    %52 = arith.subf %46, %51 : vector<16x8xf32>
    %53 = arith.mulf %52, %52 : vector<16x8xf32>
    %cst_27 = arith.constant dense<0.000000e+00> : vector<16xf32>
    %54 = vector.multi_reduction <add>, %53, %cst_27 [1] : vector<16x8xf32> to vector<16xf32>
    %55 = vector.shape_cast %54 : vector<16xf32> to vector<16x1xf32>
    %cst_28 = arith.constant 8.000000e+00 : f32
    %56 = vector.broadcast %cst_28 : f32 to vector<16x1xf32>
    %57 = arith.divf %55, %56 : vector<16x1xf32>
    %58 = vector.broadcast %50 : vector<16x1xf32> to vector<16x8xf32>
    %59 = arith.subf %46, %58 : vector<16x8xf32>
    %cst_29 = arith.constant 9.99999974E-6 : f32
    %60 = vector.broadcast %cst_29 : f32 to vector<16x1xf32>
    %61 = arith.addf %57, %60 : vector<16x1xf32>
    %62 = math.rsqrt %61 : vector<16x1xf32>
    %63 = vector.broadcast %62 : vector<16x1xf32> to vector<16x8xf32>
    %64 = arith.mulf %59, %63 : vector<16x8xf32>
    %65 = vector.broadcast %4 : vector<1x8xf32> to vector<16x8xf32>
    %66 = arith.mulf %64, %65 : vector<16x8xf32>
    %67 = vector.broadcast %5 : vector<1x8xf32> to vector<16x8xf32>
    %68 = arith.addf %66, %67 : vector<16x8xf32>
    %69 = vector.extract_strided_slice %68 {offsets = [0, 2], sizes = [16, 2], strides = [1, 1]} : vector<16x8xf32> to vector<16x2xf32>
    %cst_30 = arith.constant 0.000000e+00 : f32
    %70 = vector.broadcast %cst_30 : f32 to vector<16x2xf32>
    %71 = arith.subf %70, %69 : vector<16x2xf32>
    %72 = vector.extract_strided_slice %68 {offsets = [0, 0], sizes = [16, 2], strides = [1, 1]} : vector<16x8xf32> to vector<16x2xf32>
    %73 = vector.extract_strided_slice %68 {offsets = [0, 4], sizes = [16, 4], strides = [1, 1]} : vector<16x8xf32> to vector<16x4xf32>
    %74 = tpu.concatenate %71, %72, %73 in 1 : vector<16x2xf32>, vector<16x2xf32>, vector<16x4xf32> -> vector<16x8xf32>
    %75 = arith.mulf %68, %0 : vector<16x8xf32>
    %76 = arith.mulf %74, %1 : vector<16x8xf32>
    %77 = arith.addf %75, %76 : vector<16x8xf32>
    %78 = arith.truncf %77 : vector<16x8xf32> to vector<16x8xbf16>
    %c0_31 = arith.constant 0 : index
    %c0_32 = arith.constant 0 : index
    %79 = vector.load %arg9[%c0_31, %c0_32] : memref<16x32xbf16, #tpu.memory_space<vmem>>, vector<16x8xbf16>
    tpu.vector_store %arg9[%c0_31, %c0_32], %78 {strides = array<i32>} : memref<16x32xbf16, #tpu.memory_space<vmem>>, vector<16x8xbf16>,
    %c0_33 = arith.constant 0 : index
    %c8 = arith.constant 8 : index
    %80 = vector.load %arg1[%c0_33, %c8] : memref<16x96xbf16, #tpu.memory_space<vmem>>, vector<16x8xbf16>
    %81 = arith.extf %80 : vector<16x8xbf16> to vector<16x8xf32>
    %cst_34 = arith.constant dense<0.000000e+00> : vector<16xf32>
    %82 = vector.multi_reduction <add>, %81, %cst_34 [1] : vector<16x8xf32> to vector<16xf32>
    %83 = vector.shape_cast %82 : vector<16xf32> to vector<16x1xf32>
    %cst_35 = arith.constant 8.000000e+00 : f32
    %84 = vector.broadcast %cst_35 : f32 to vector<16x1xf32>
    %85 = arith.divf %83, %84 : vector<16x1xf32>
    %86 = vector.broadcast %85 : vector<16x1xf32> to vector<16x8xf32>
    %87 = arith.subf %81, %86 : vector<16x8xf32>
    %88 = arith.mulf %87, %87 : vector<16x8xf32>
    %cst_36 = arith.constant dense<0.000000e+00> : vector<16xf32>
    %89 = vector.multi_reduction <add>, %88, %cst_36 [1] : vector<16x8xf32> to vector<16xf32>
    %90 = vector.shape_cast %89 : vector<16xf32> to vector<16x1xf32>
    %cst_37 = arith.constant 8.000000e+00 : f32
    %91 = vector.broadcast %cst_37 : f32 to vector<16x1xf32>
    %92 = arith.divf %90, %91 : vector<16x1xf32>
    %93 = vector.broadcast %85 : vector<16x1xf32> to vector<16x8xf32>
    %94 = arith.subf %81, %93 : vector<16x8xf32>
    %cst_38 = arith.constant 9.99999974E-6 : f32
    %95 = vector.broadcast %cst_38 : f32 to vector<16x1xf32>
    %96 = arith.addf %92, %95 : vector<16x1xf32>
    %97 = math.rsqrt %96 : vector<16x1xf32>
    %98 = vector.broadcast %97 : vector<16x1xf32> to vector<16x8xf32>
    %99 = arith.mulf %94, %98 : vector<16x8xf32>
    %100 = vector.broadcast %2 : vector<1x8xf32> to vector<16x8xf32>
    %101 = arith.mulf %99, %100 : vector<16x8xf32>
    %102 = vector.broadcast %3 : vector<1x8xf32> to vector<16x8xf32>
    %103 = arith.addf %101, %102 : vector<16x8xf32>
    %104 = vector.extract_strided_slice %103 {offsets = [0, 2], sizes = [16, 2], strides = [1, 1]} : vector<16x8xf32> to vector<16x2xf32>
    %cst_39 = arith.constant 0.000000e+00 : f32
    %105 = vector.broadcast %cst_39 : f32 to vector<16x2xf32>
    %106 = arith.subf %105, %104 : vector<16x2xf32>
    %107 = vector.extract_strided_slice %103 {offsets = [0, 0], sizes = [16, 2], strides = [1, 1]} : vector<16x8xf32> to vector<16x2xf32>
    %108 = vector.extract_strided_slice %103 {offsets = [0, 4], sizes = [16, 4], strides = [1, 1]} : vector<16x8xf32> to vector<16x4xf32>
    %109 = tpu.concatenate %106, %107, %108 in 1 : vector<16x2xf32>, vector<16x2xf32>, vector<16x4xf32> -> vector<16x8xf32>
    %110 = arith.mulf %103, %0 : vector<16x8xf32>
    %111 = arith.mulf %109, %1 : vector<16x8xf32>
    %112 = arith.addf %110, %111 : vector<16x8xf32>
    %cst_40 = arith.constant 0.353553385 : f32
    %113 = vector.broadcast %cst_40 : f32 to vector<16x8xf32>
    %114 = arith.mulf %112, %113 : vector<16x8xf32>
    %115 = arith.truncf %114 : vector<16x8xf32> to vector<16x8xbf16>
    %c0_41 = arith.constant 0 : index
    %c8_42 = arith.constant 8 : index
    %116 = vector.load %arg8[%c0_41, %c8_42] : memref<16x32xbf16, #tpu.memory_space<vmem>>, vector<16x8xbf16>
    tpu.vector_store %arg8[%c0_41, %c8_42], %115 {strides = array<i32>} : memref<16x32xbf16, #tpu.memory_space<vmem>>, vector<16x8xbf16>,
    %c0_43 = arith.constant 0 : index
    %c40 = arith.constant 40 : index
    %117 = vector.load %arg1[%c0_43, %c40] : memref<16x96xbf16, #tpu.memory_space<vmem>>, vector<16x8xbf16>
    %118 = arith.extf %117 : vector<16x8xbf16> to vector<16x8xf32>
    %cst_44 = arith.constant dense<0.000000e+00> : vector<16xf32>
    %119 = vector.multi_reduction <add>, %118, %cst_44 [1] : vector<16x8xf32> to vector<16xf32>
    %120 = vector.shape_cast %119 : vector<16xf32> to vector<16x1xf32>
    %cst_45 = arith.constant 8.000000e+00 : f32
    %121 = vector.broadcast %cst_45 : f32 to vector<16x1xf32>
    %122 = arith.divf %120, %121 : vector<16x1xf32>
    %123 = vector.broadcast %122 : vector<16x1xf32> to vector<16x8xf32>
    %124 = arith.subf %118, %123 : vector<16x8xf32>
    %125 = arith.mulf %124, %124 : vector<16x8xf32>
    %cst_46 = arith.constant dense<0.000000e+00> : vector<16xf32>
    %126 = vector.multi_reduction <add>, %125, %cst_46 [1] : vector<16x8xf32> to vector<16xf32>
    %127 = vector.shape_cast %126 : vector<16xf32> to vector<16x1xf32>
    %cst_47 = arith.constant 8.000000e+00 : f32
    %128 = vector.broadcast %cst_47 : f32 to vector<16x1xf32>
    %129 = arith.divf %127, %128 : vector<16x1xf32>
    %130 = vector.broadcast %122 : vector<16x1xf32> to vector<16x8xf32>
    %131 = arith.subf %118, %130 : vector<16x8xf32>
    %cst_48 = arith.constant 9.99999974E-6 : f32
    %132 = vector.broadcast %cst_48 : f32 to vector<16x1xf32>
    %133 = arith.addf %129, %132 : vector<16x1xf32>
    %134 = math.rsqrt %133 : vector<16x1xf32>
    %135 = vector.broadcast %134 : vector<16x1xf32> to vector<16x8xf32>
    %136 = arith.mulf %131, %135 : vector<16x8xf32>
    %137 = vector.broadcast %4 : vector<1x8xf32> to vector<16x8xf32>
    %138 = arith.mulf %136, %137 : vector<16x8xf32>
    %139 = vector.broadcast %5 : vector<1x8xf32> to vector<16x8xf32>
    %140 = arith.addf %138, %139 : vector<16x8xf32>
    %141 = vector.extract_strided_slice %140 {offsets = [0, 2], sizes = [16, 2], strides = [1, 1]} : vector<16x8xf32> to vector<16x2xf32>
    %cst_49 = arith.constant 0.000000e+00 : f32
    %142 = vector.broadcast %cst_49 : f32 to vector<16x2xf32>
    %143 = arith.subf %142, %141 : vector<16x2xf32>
    %144 = vector.extract_strided_slice %140 {offsets = [0, 0], sizes = [16, 2], strides = [1, 1]} : vector<16x8xf32> to vector<16x2xf32>
    %145 = vector.extract_strided_slice %140 {offsets = [0, 4], sizes = [16, 4], strides = [1, 1]} : vector<16x8xf32> to vector<16x4xf32>
    %146 = tpu.concatenate %143, %144, %145 in 1 : vector<16x2xf32>, vector<16x2xf32>, vector<16x4xf32> -> vector<16x8xf32>
    %147 = arith.mulf %140, %0 : vector<16x8xf32>
    %148 = arith.mulf %146, %1 : vector<16x8xf32>
    %149 = arith.addf %147, %148 : vector<16x8xf32>
    %150 = arith.truncf %149 : vector<16x8xf32> to vector<16x8xbf16>
    %c0_50 = arith.constant 0 : index
    %c8_51 = arith.constant 8 : index
    %151 = vector.load %arg9[%c0_50, %c8_51] : memref<16x32xbf16, #tpu.memory_space<vmem>>, vector<16x8xbf16>
    tpu.vector_store %arg9[%c0_50, %c8_51], %150 {strides = array<i32>} : memref<16x32xbf16, #tpu.memory_space<vmem>>, vector<16x8xbf16>,
    %c0_52 = arith.constant 0 : index
    %c16 = arith.constant 16 : index
    %152 = vector.load %arg1[%c0_52, %c16] : memref<16x96xbf16, #tpu.memory_space<vmem>>, vector<16x8xbf16>
    %153 = arith.extf %152 : vector<16x8xbf16> to vector<16x8xf32>
    %cst_53 = arith.constant dense<0.000000e+00> : vector<16xf32>
    %154 = vector.multi_reduction <add>, %153, %cst_53 [1] : vector<16x8xf32> to vector<16xf32>
    %155 = vector.shape_cast %154 : vector<16xf32> to vector<16x1xf32>
    %cst_54 = arith.constant 8.000000e+00 : f32
    %156 = vector.broadcast %cst_54 : f32 to vector<16x1xf32>
    %157 = arith.divf %155, %156 : vector<16x1xf32>
    %158 = vector.broadcast %157 : vector<16x1xf32> to vector<16x8xf32>
    %159 = arith.subf %153, %158 : vector<16x8xf32>
    %160 = arith.mulf %159, %159 : vector<16x8xf32>
    %cst_55 = arith.constant dense<0.000000e+00> : vector<16xf32>
    %161 = vector.multi_reduction <add>, %160, %cst_55 [1] : vector<16x8xf32> to vector<16xf32>
    %162 = vector.shape_cast %161 : vector<16xf32> to vector<16x1xf32>
    %cst_56 = arith.constant 8.000000e+00 : f32
    %163 = vector.broadcast %cst_56 : f32 to vector<16x1xf32>
    %164 = arith.divf %162, %163 : vector<16x1xf32>
    %165 = vector.broadcast %157 : vector<16x1xf32> to vector<16x8xf32>
    %166 = arith.subf %153, %165 : vector<16x8xf32>
    %cst_57 = arith.constant 9.99999974E-6 : f32
    %167 = vector.broadcast %cst_57 : f32 to vector<16x1xf32>
    %168 = arith.addf %164, %167 : vector<16x1xf32>
    %169 = math.rsqrt %168 : vector<16x1xf32>
    %170 = vector.broadcast %169 : vector<16x1xf32> to vector<16x8xf32>
    %171 = arith.mulf %166, %170 : vector<16x8xf32>
    %172 = vector.broadcast %2 : vector<1x8xf32> to vector<16x8xf32>
    %173 = arith.mulf %171, %172 : vector<16x8xf32>
    %174 = vector.broadcast %3 : vector<1x8xf32> to vector<16x8xf32>
    %175 = arith.addf %173, %174 : vector<16x8xf32>
    %176 = vector.extract_strided_slice %175 {offsets = [0, 2], sizes = [16, 2], strides = [1, 1]} : vector<16x8xf32> to vector<16x2xf32>
    %cst_58 = arith.constant 0.000000e+00 : f32
    %177 = vector.broadcast %cst_58 : f32 to vector<16x2xf32>
    %178 = arith.subf %177, %176 : vector<16x2xf32>
    %179 = vector.extract_strided_slice %175 {offsets = [0, 0], sizes = [16, 2], strides = [1, 1]} : vector<16x8xf32> to vector<16x2xf32>
    %180 = vector.extract_strided_slice %175 {offsets = [0, 4], sizes = [16, 4], strides = [1, 1]} : vector<16x8xf32> to vector<16x4xf32>
    %181 = tpu.concatenate %178, %179, %180 in 1 : vector<16x2xf32>, vector<16x2xf32>, vector<16x4xf32> -> vector<16x8xf32>
    %182 = arith.mulf %175, %0 : vector<16x8xf32>
    %183 = arith.mulf %181, %1 : vector<16x8xf32>
    %184 = arith.addf %182, %183 : vector<16x8xf32>
    %cst_59 = arith.constant 0.353553385 : f32
    %185 = vector.broadcast %cst_59 : f32 to vector<16x8xf32>
    %186 = arith.mulf %184, %185 : vector<16x8xf32>
    %187 = arith.truncf %186 : vector<16x8xf32> to vector<16x8xbf16>
    %c0_60 = arith.constant 0 : index
    %c16_61 = arith.constant 16 : index
    %188 = vector.load %arg8[%c0_60, %c16_61] : memref<16x32xbf16, #tpu.memory_space<vmem>>, vector<16x8xbf16>
    tpu.vector_store %arg8[%c0_60, %c16_61], %187 {strides = array<i32>} : memref<16x32xbf16, #tpu.memory_space<vmem>>, vector<16x8xbf16>,
    %c0_62 = arith.constant 0 : index
    %c48 = arith.constant 48 : index
    %189 = vector.load %arg1[%c0_62, %c48] : memref<16x96xbf16, #tpu.memory_space<vmem>>, vector<16x8xbf16>
    %190 = arith.extf %189 : vector<16x8xbf16> to vector<16x8xf32>
    %cst_63 = arith.constant dense<0.000000e+00> : vector<16xf32>
    %191 = vector.multi_reduction <add>, %190, %cst_63 [1] : vector<16x8xf32> to vector<16xf32>
    %192 = vector.shape_cast %191 : vector<16xf32> to vector<16x1xf32>
    %cst_64 = arith.constant 8.000000e+00 : f32
    %193 = vector.broadcast %cst_64 : f32 to vector<16x1xf32>
    %194 = arith.divf %192, %193 : vector<16x1xf32>
    %195 = vector.broadcast %194 : vector<16x1xf32> to vector<16x8xf32>
    %196 = arith.subf %190, %195 : vector<16x8xf32>
    %197 = arith.mulf %196, %196 : vector<16x8xf32>
    %cst_65 = arith.constant dense<0.000000e+00> : vector<16xf32>
    %198 = vector.multi_reduction <add>, %197, %cst_65 [1] : vector<16x8xf32> to vector<16xf32>
    %199 = vector.shape_cast %198 : vector<16xf32> to vector<16x1xf32>
    %cst_66 = arith.constant 8.000000e+00 : f32
    %200 = vector.broadcast %cst_66 : f32 to vector<16x1xf32>
    %201 = arith.divf %199, %200 : vector<16x1xf32>
    %202 = vector.broadcast %194 : vector<16x1xf32> to vector<16x8xf32>
    %203 = arith.subf %190, %202 : vector<16x8xf32>
    %cst_67 = arith.constant 9.99999974E-6 : f32
    %204 = vector.broadcast %cst_67 : f32 to vector<16x1xf32>
    %205 = arith.addf %201, %204 : vector<16x1xf32>
    %206 = math.rsqrt %205 : vector<16x1xf32>
    %207 = vector.broadcast %206 : vector<16x1xf32> to vector<16x8xf32>
    %208 = arith.mulf %203, %207 : vector<16x8xf32>
    %209 = vector.broadcast %4 : vector<1x8xf32> to vector<16x8xf32>
    %210 = arith.mulf %208, %209 : vector<16x8xf32>
    %211 = vector.broadcast %5 : vector<1x8xf32> to vector<16x8xf32>
    %212 = arith.addf %210, %211 : vector<16x8xf32>
    %213 = vector.extract_strided_slice %212 {offsets = [0, 2], sizes = [16, 2], strides = [1, 1]} : vector<16x8xf32> to vector<16x2xf32>
    %cst_68 = arith.constant 0.000000e+00 : f32
    %214 = vector.broadcast %cst_68 : f32 to vector<16x2xf32>
    %215 = arith.subf %214, %213 : vector<16x2xf32>
    %216 = vector.extract_strided_slice %212 {offsets = [0, 0], sizes = [16, 2], strides = [1, 1]} : vector<16x8xf32> to vector<16x2xf32>
    %217 = vector.extract_strided_slice %212 {offsets = [0, 4], sizes = [16, 4], strides = [1, 1]} : vector<16x8xf32> to vector<16x4xf32>
    %218 = tpu.concatenate %215, %216, %217 in 1 : vector<16x2xf32>, vector<16x2xf32>, vector<16x4xf32> -> vector<16x8xf32>
    %219 = arith.mulf %212, %0 : vector<16x8xf32>
    %220 = arith.mulf %218, %1 : vector<16x8xf32>
    %221 = arith.addf %219, %220 : vector<16x8xf32>
    %222 = arith.truncf %221 : vector<16x8xf32> to vector<16x8xbf16>
    %c0_69 = arith.constant 0 : index
    %c16_70 = arith.constant 16 : index
    %223 = vector.load %arg9[%c0_69, %c16_70] : memref<16x32xbf16, #tpu.memory_space<vmem>>, vector<16x8xbf16>
    tpu.vector_store %arg9[%c0_69, %c16_70], %222 {strides = array<i32>} : memref<16x32xbf16, #tpu.memory_space<vmem>>, vector<16x8xbf16>,
    %c0_71 = arith.constant 0 : index
    %c24 = arith.constant 24 : index
    %224 = vector.load %arg1[%c0_71, %c24] : memref<16x96xbf16, #tpu.memory_space<vmem>>, vector<16x8xbf16>
    %225 = arith.extf %224 : vector<16x8xbf16> to vector<16x8xf32>
    %cst_72 = arith.constant dense<0.000000e+00> : vector<16xf32>
    %226 = vector.multi_reduction <add>, %225, %cst_72 [1] : vector<16x8xf32> to vector<16xf32>
    %227 = vector.shape_cast %226 : vector<16xf32> to vector<16x1xf32>
    %cst_73 = arith.constant 8.000000e+00 : f32
    %228 = vector.broadcast %cst_73 : f32 to vector<16x1xf32>
    %229 = arith.divf %227, %228 : vector<16x1xf32>
    %230 = vector.broadcast %229 : vector<16x1xf32> to vector<16x8xf32>
    %231 = arith.subf %225, %230 : vector<16x8xf32>
    %232 = arith.mulf %231, %231 : vector<16x8xf32>
    %cst_74 = arith.constant dense<0.000000e+00> : vector<16xf32>
    %233 = vector.multi_reduction <add>, %232, %cst_74 [1] : vector<16x8xf32> to vector<16xf32>
    %234 = vector.shape_cast %233 : vector<16xf32> to vector<16x1xf32>
    %cst_75 = arith.constant 8.000000e+00 : f32
    %235 = vector.broadcast %cst_75 : f32 to vector<16x1xf32>
    %236 = arith.divf %234, %235 : vector<16x1xf32>
    %237 = vector.broadcast %229 : vector<16x1xf32> to vector<16x8xf32>
    %238 = arith.subf %225, %237 : vector<16x8xf32>
    %cst_76 = arith.constant 9.99999974E-6 : f32
    %239 = vector.broadcast %cst_76 : f32 to vector<16x1xf32>
    %240 = arith.addf %236, %239 : vector<16x1xf32>
    %241 = math.rsqrt %240 : vector<16x1xf32>
    %242 = vector.broadcast %241 : vector<16x1xf32> to vector<16x8xf32>
    %243 = arith.mulf %238, %242 : vector<16x8xf32>
    %244 = vector.broadcast %2 : vector<1x8xf32> to vector<16x8xf32>
    %245 = arith.mulf %243, %244 : vector<16x8xf32>
    %246 = vector.broadcast %3 : vector<1x8xf32> to vector<16x8xf32>
    %247 = arith.addf %245, %246 : vector<16x8xf32>
    %248 = vector.extract_strided_slice %247 {offsets = [0, 2], sizes = [16, 2], strides = [1, 1]} : vector<16x8xf32> to vector<16x2xf32>
    %cst_77 = arith.constant 0.000000e+00 : f32
    %249 = vector.broadcast %cst_77 : f32 to vector<16x2xf32>
    %250 = arith.subf %249, %248 : vector<16x2xf32>
    %251 = vector.extract_strided_slice %247 {offsets = [0, 0], sizes = [16, 2], strides = [1, 1]} : vector<16x8xf32> to vector<16x2xf32>
    %252 = vector.extract_strided_slice %247 {offsets = [0, 4], sizes = [16, 4], strides = [1, 1]} : vector<16x8xf32> to vector<16x4xf32>
    %253 = tpu.concatenate %250, %251, %252 in 1 : vector<16x2xf32>, vector<16x2xf32>, vector<16x4xf32> -> vector<16x8xf32>
    %254 = arith.mulf %247, %0 : vector<16x8xf32>
    %255 = arith.mulf %253, %1 : vector<16x8xf32>
    %256 = arith.addf %254, %255 : vector<16x8xf32>
    %cst_78 = arith.constant 0.353553385 : f32
    %257 = vector.broadcast %cst_78 : f32 to vector<16x8xf32>
    %258 = arith.mulf %256, %257 : vector<16x8xf32>
    %259 = arith.truncf %258 : vector<16x8xf32> to vector<16x8xbf16>
    %c0_79 = arith.constant 0 : index
    %c24_80 = arith.constant 24 : index
    %260 = vector.load %arg8[%c0_79, %c24_80] : memref<16x32xbf16, #tpu.memory_space<vmem>>, vector<16x8xbf16>
    tpu.vector_store %arg8[%c0_79, %c24_80], %259 {strides = array<i32>} : memref<16x32xbf16, #tpu.memory_space<vmem>>, vector<16x8xbf16>,
    %c0_81 = arith.constant 0 : index
    %c56 = arith.constant 56 : index
    %261 = vector.load %arg1[%c0_81, %c56] : memref<16x96xbf16, #tpu.memory_space<vmem>>, vector<16x8xbf16>
    %262 = arith.extf %261 : vector<16x8xbf16> to vector<16x8xf32>
    %cst_82 = arith.constant dense<0.000000e+00> : vector<16xf32>
    %263 = vector.multi_reduction <add>, %262, %cst_82 [1] : vector<16x8xf32> to vector<16xf32>
    %264 = vector.shape_cast %263 : vector<16xf32> to vector<16x1xf32>
    %cst_83 = arith.constant 8.000000e+00 : f32
    %265 = vector.broadcast %cst_83 : f32 to vector<16x1xf32>
    %266 = arith.divf %264, %265 : vector<16x1xf32>
    %267 = vector.broadcast %266 : vector<16x1xf32> to vector<16x8xf32>
    %268 = arith.subf %262, %267 : vector<16x8xf32>
    %269 = arith.mulf %268, %268 : vector<16x8xf32>
    %cst_84 = arith.constant dense<0.000000e+00> : vector<16xf32>
    %270 = vector.multi_reduction <add>, %269, %cst_84 [1] : vector<16x8xf32> to vector<16xf32>
    %271 = vector.shape_cast %270 : vector<16xf32> to vector<16x1xf32>
    %cst_85 = arith.constant 8.000000e+00 : f32
    %272 = vector.broadcast %cst_85 : f32 to vector<16x1xf32>
    %273 = arith.divf %271, %272 : vector<16x1xf32>
    %274 = vector.broadcast %266 : vector<16x1xf32> to vector<16x8xf32>
    %275 = arith.subf %262, %274 : vector<16x8xf32>
    %cst_86 = arith.constant 9.99999974E-6 : f32
    %276 = vector.broadcast %cst_86 : f32 to vector<16x1xf32>
    %277 = arith.addf %273, %276 : vector<16x1xf32>
    %278 = math.rsqrt %277 : vector<16x1xf32>
    %279 = vector.broadcast %278 : vector<16x1xf32> to vector<16x8xf32>
    %280 = arith.mulf %275, %279 : vector<16x8xf32>
    %281 = vector.broadcast %4 : vector<1x8xf32> to vector<16x8xf32>
    %282 = arith.mulf %280, %281 : vector<16x8xf32>
    %283 = vector.broadcast %5 : vector<1x8xf32> to vector<16x8xf32>
    %284 = arith.addf %282, %283 : vector<16x8xf32>
    %285 = vector.extract_strided_slice %284 {offsets = [0, 2], sizes = [16, 2], strides = [1, 1]} : vector<16x8xf32> to vector<16x2xf32>
    %cst_87 = arith.constant 0.000000e+00 : f32
    %286 = vector.broadcast %cst_87 : f32 to vector<16x2xf32>
    %287 = arith.subf %286, %285 : vector<16x2xf32>
    %288 = vector.extract_strided_slice %284 {offsets = [0, 0], sizes = [16, 2], strides = [1, 1]} : vector<16x8xf32> to vector<16x2xf32>
    %289 = vector.extract_strided_slice %284 {offsets = [0, 4], sizes = [16, 4], strides = [1, 1]} : vector<16x8xf32> to vector<16x4xf32>
    %290 = tpu.concatenate %287, %288, %289 in 1 : vector<16x2xf32>, vector<16x2xf32>, vector<16x4xf32> -> vector<16x8xf32>
    %291 = arith.mulf %284, %0 : vector<16x8xf32>
    %292 = arith.mulf %290, %1 : vector<16x8xf32>
    %293 = arith.addf %291, %292 : vector<16x8xf32>
    %294 = arith.truncf %293 : vector<16x8xf32> to vector<16x8xbf16>
    %c0_88 = arith.constant 0 : index
    %c24_89 = arith.constant 24 : index
    %295 = vector.load %arg9[%c0_88, %c24_89] : memref<16x32xbf16, #tpu.memory_space<vmem>>, vector<16x8xbf16>
    tpu.vector_store %arg9[%c0_88, %c24_89], %294 {strides = array<i32>} : memref<16x32xbf16, #tpu.memory_space<vmem>>, vector<16x8xbf16>,
    return
  }
  func.func @transform_0(%arg0: i32) -> (i32, i32) {
    %c0_i32 = arith.constant 0 : i32
    %c0_i32_0 = arith.constant 0 : i32
    return %arg0, %c0_i32 : i32, i32
  }
  func.func @transform_1(%arg0: i32) -> (i32, i32) {
    %c0_i32 = arith.constant 0 : i32
    %c0_i32_0 = arith.constant 0 : i32
    return %arg0, %c0_i32 : i32, i32
  }
  func.func @transform_2(%arg0: i32) -> (i32, i32) {
    %c0_i32 = arith.constant 0 : i32
    %c0_i32_0 = arith.constant 0 : i32
    return %arg0, %c0_i32 : i32, i32
  }
  func.func @transform_3(%arg0: i32) -> (i32, i32) {
    %c0_i32 = arith.constant 0 : i32
    %c0_i32_0 = arith.constant 0 : i32
    %c0_i32_1 = arith.constant 0 : i32
    return %c0_i32, %c0_i32_0 : i32, i32
  }
  func.func @transform_4(%arg0: i32) -> (i32, i32) {
    %c0_i32 = arith.constant 0 : i32
    %c0_i32_0 = arith.constant 0 : i32
    %c0_i32_1 = arith.constant 0 : i32
    return %c0_i32, %c0_i32_0 : i32, i32
  }
  func.func @transform_5(%arg0: i32) -> (i32, i32) {
    %c0_i32 = arith.constant 0 : i32
    %c0_i32_0 = arith.constant 0 : i32
    %c0_i32_1 = arith.constant 0 : i32
    return %c0_i32, %c0_i32_0 : i32, i32
  }
  func.func @transform_6(%arg0: i32) -> (i32, i32) {
    %c0_i32 = arith.constant 0 : i32
    %c0_i32_0 = arith.constant 0 : i32
    %c0_i32_1 = arith.constant 0 : i32
    return %c0_i32, %c0_i32_0 : i32, i32
  }
  func.func @transform_7(%arg0: i32) -> (i32, i32) {
    %c0_i32 = arith.constant 0 : i32
    %c0_i32_0 = arith.constant 0 : i32
    return %arg0, %c0_i32 : i32, i32
  }
  func.func @transform_8(%arg0: i32) -> (i32, i32) {
    %c0_i32 = arith.constant 0 : i32
    %c0_i32_0 = arith.constant 0 : i32
    return %arg0, %c0_i32 : i32, i32
  }
  func.func @transform_9(%arg0: i32) -> (i32, i32) {
    %c0_i32 = arith.constant 0 : i32
    %c0_i32_0 = arith.constant 0 : i32
    return %arg0, %c0_i32 : i32, i32
  }
}

module attributes {stable_mosaic.version = 11 : i64} {
  func.func @_layernorm_kernel(%arg0: i32, %arg1: memref<16x32xbf16, #tpu.memory_space<vmem>>, %arg2: memref<1x32xf32, #tpu.memory_space<vmem>>, %arg3: memref<1x32xf32, #tpu.memory_space<vmem>>, %arg4: memref<16x32xf32, #tpu.memory_space<vmem>>) attributes {dimension_semantics = [#tpu.dimension_semantics<parallel>], iteration_bounds = array<i64: 1>, scalar_prefetch = 0 : i64, scratch_operands = 0 : i64, tpu.core_type = #tpu.core_type<tc>, window_params = [{transform_indices = @transform_0, window_bounds = array<i64: 16, 32>}, {pipeline_mode = #tpu.pipeline_mode<synchronous>, transform_indices = @transform_1, window_bounds = array<i64: 1, 32>}, {pipeline_mode = #tpu.pipeline_mode<synchronous>, transform_indices = @transform_2, window_bounds = array<i64: 1, 32>}, {transform_indices = @transform_3, window_bounds = array<i64: 16, 32>}]} {
    %c0 = arith.constant 0 : index
    %c0_0 = arith.constant 0 : index
    %0 = vector.load %arg1[%c0, %c0_0] : memref<16x32xbf16, #tpu.memory_space<vmem>>, vector<16x32xbf16>
    %c0_1 = arith.constant 0 : index
    %c0_2 = arith.constant 0 : index
    %1 = vector.load %arg2[%c0_1, %c0_2] : memref<1x32xf32, #tpu.memory_space<vmem>>, vector<1x32xf32>
    %c0_3 = arith.constant 0 : index
    %c0_4 = arith.constant 0 : index
    %2 = vector.load %arg3[%c0_3, %c0_4] : memref<1x32xf32, #tpu.memory_space<vmem>>, vector<1x32xf32>
    %3 = arith.extf %0 : vector<16x32xbf16> to vector<16x32xf32>
    %cst = arith.constant dense<0.000000e+00> : vector<16xf32>
    %4 = vector.multi_reduction <add>, %3, %cst [1] : vector<16x32xf32> to vector<16xf32>
    %5 = vector.shape_cast %4 : vector<16xf32> to vector<16x1xf32>
    %cst_5 = arith.constant 3.200000e+01 : f32
    %6 = vector.broadcast %cst_5 : f32 to vector<16x1xf32>
    %7 = arith.divf %5, %6 : vector<16x1xf32>
    %8 = vector.broadcast %7 : vector<16x1xf32> to vector<16x32xf32>
    %9 = arith.subf %3, %8 : vector<16x32xf32>
    %10 = arith.mulf %9, %9 : vector<16x32xf32>
    %cst_6 = arith.constant dense<0.000000e+00> : vector<16xf32>
    %11 = vector.multi_reduction <add>, %10, %cst_6 [1] : vector<16x32xf32> to vector<16xf32>
    %12 = vector.shape_cast %11 : vector<16xf32> to vector<16x1xf32>
    %cst_7 = arith.constant 3.200000e+01 : f32
    %13 = vector.broadcast %cst_7 : f32 to vector<16x1xf32>
    %14 = arith.divf %12, %13 : vector<16x1xf32>
    %15 = vector.broadcast %7 : vector<16x1xf32> to vector<16x32xf32>
    %16 = arith.subf %3, %15 : vector<16x32xf32>
    %cst_8 = arith.constant 9.99999974E-6 : f32
    %17 = vector.broadcast %cst_8 : f32 to vector<16x1xf32>
    %18 = arith.addf %14, %17 : vector<16x1xf32>
    %19 = math.rsqrt %18 : vector<16x1xf32>
    %20 = vector.broadcast %19 : vector<16x1xf32> to vector<16x32xf32>
    %21 = arith.mulf %16, %20 : vector<16x32xf32>
    %22 = vector.broadcast %1 : vector<1x32xf32> to vector<16x32xf32>
    %23 = arith.mulf %21, %22 : vector<16x32xf32>
    %24 = vector.broadcast %2 : vector<1x32xf32> to vector<16x32xf32>
    %25 = arith.addf %23, %24 : vector<16x32xf32>
    %c0_9 = arith.constant 0 : index
    %c0_10 = arith.constant 0 : index
    %26 = vector.load %arg4[%c0_9, %c0_10] : memref<16x32xf32, #tpu.memory_space<vmem>>, vector<16x32xf32>
    tpu.vector_store %arg4[%c0_9, %c0_10], %25 {strides = array<i32>} : memref<16x32xf32, #tpu.memory_space<vmem>>, vector<16x32xf32>,
    return
  }
  func.func @transform_0(%arg0: i32) -> (i32, i32) {
    %c0_i32 = arith.constant 0 : i32
    %c0_i32_0 = arith.constant 0 : i32
    return %arg0, %c0_i32 : i32, i32
  }
  func.func @transform_1(%arg0: i32) -> (i32, i32) {
    %c0_i32 = arith.constant 0 : i32
    %c0_i32_0 = arith.constant 0 : i32
    %c0_i32_1 = arith.constant 0 : i32
    return %c0_i32, %c0_i32_0 : i32, i32
  }
  func.func @transform_2(%arg0: i32) -> (i32, i32) {
    %c0_i32 = arith.constant 0 : i32
    %c0_i32_0 = arith.constant 0 : i32
    %c0_i32_1 = arith.constant 0 : i32
    return %c0_i32, %c0_i32_0 : i32, i32
  }
  func.func @transform_3(%arg0: i32) -> (i32, i32) {
    %c0_i32 = arith.constant 0 : i32
    %c0_i32_0 = arith.constant 0 : i32
    return %arg0, %c0_i32 : i32, i32
  }
}

module attributes {stable_mosaic.version = 11 : i64} {
  func.func @_mm_fullk_kernel(%arg0: i32, %arg1: i32, %arg2: memref<16x128xbf16, #tpu.memory_space<vmem>>, %arg3: memref<128x32xbf16, #tpu.memory_space<vmem>>, %arg4: memref<1x32xf32, #tpu.memory_space<vmem>>, %arg5: memref<16x32xbf16, #tpu.memory_space<vmem>>, %arg6: memref<16x32xbf16, #tpu.memory_space<vmem>>) attributes {dimension_semantics = [#tpu.dimension_semantics<parallel>, #tpu.dimension_semantics<parallel>], iteration_bounds = array<i64: 1, 1>, scalar_prefetch = 0 : i64, scratch_operands = 0 : i64, tpu.core_type = #tpu.core_type<tc>, window_params = [{transform_indices = @transform_0, window_bounds = array<i64: 16, 128>}, {transform_indices = @transform_1, window_bounds = array<i64: 128, 32>}, {transform_indices = @transform_2, window_bounds = array<i64: 1, 32>}, {transform_indices = @transform_3, window_bounds = array<i64: 16, 32>}, {transform_indices = @transform_4, window_bounds = array<i64: 16, 32>}]} {
    %c0 = arith.constant 0 : index
    %c0_0 = arith.constant 0 : index
    %0 = vector.load %arg2[%c0, %c0_0] : memref<16x128xbf16, #tpu.memory_space<vmem>>, vector<16x128xbf16>
    %c0_1 = arith.constant 0 : index
    %c0_2 = arith.constant 0 : index
    %1 = vector.load %arg3[%c0_1, %c0_2] : memref<128x32xbf16, #tpu.memory_space<vmem>>, vector<128x32xbf16>
    %cst = arith.constant dense<0.000000e+00> : vector<16x32xf32>
    %2 = tpu.matmul %0, %1, %cst {dimension_numbers = #tpu.dot_dimension_numbers<[1], [0], [0], [1], [0, 0, 1, 1], [], []>} : vector<16x128xbf16>, vector<128x32xbf16>, vector<16x32xf32> -> vector<16x32xf32>
    %c0_3 = arith.constant 0 : index
    %c0_4 = arith.constant 0 : index
    %3 = vector.load %arg4[%c0_3, %c0_4] : memref<1x32xf32, #tpu.memory_space<vmem>>, vector<1x32xf32>
    %4 = vector.broadcast %3 : vector<1x32xf32> to vector<16x32xf32>
    %5 = arith.addf %2, %4 : vector<16x32xf32>
    %c0_5 = arith.constant 0 : index
    %c0_6 = arith.constant 0 : index
    %6 = vector.load %arg5[%c0_5, %c0_6] : memref<16x32xbf16, #tpu.memory_space<vmem>>, vector<16x32xbf16>
    %7 = arith.extf %6 : vector<16x32xbf16> to vector<16x32xf32>
    %8 = arith.addf %5, %7 : vector<16x32xf32>
    %9 = arith.truncf %8 : vector<16x32xf32> to vector<16x32xbf16>
    %c0_7 = arith.constant 0 : index
    %c0_8 = arith.constant 0 : index
    %10 = vector.load %arg6[%c0_7, %c0_8] : memref<16x32xbf16, #tpu.memory_space<vmem>>, vector<16x32xbf16>
    tpu.vector_store %arg6[%c0_7, %c0_8], %9 {strides = array<i32>} : memref<16x32xbf16, #tpu.memory_space<vmem>>, vector<16x32xbf16>,
    return
  }
  func.func @transform_0(%arg0: i32, %arg1: i32) -> (i32, i32) {
    %c0_i32 = arith.constant 0 : i32
    %c0_i32_0 = arith.constant 0 : i32
    return %arg0, %c0_i32 : i32, i32
  }
  func.func @transform_1(%arg0: i32, %arg1: i32) -> (i32, i32) {
    %c0_i32 = arith.constant 0 : i32
    %c0_i32_0 = arith.constant 0 : i32
    return %c0_i32, %arg1 : i32, i32
  }
  func.func @transform_2(%arg0: i32, %arg1: i32) -> (i32, i32) {
    %c0_i32 = arith.constant 0 : i32
    %c0_i32_0 = arith.constant 0 : i32
    return %c0_i32, %arg1 : i32, i32
  }
  func.func @transform_3(%arg0: i32, %arg1: i32) -> (i32, i32) {
    %c0_i32 = arith.constant 0 : i32
    return %arg0, %arg1 : i32, i32
  }
  func.func @transform_4(%arg0: i32, %arg1: i32) -> (i32, i32) {
    %c0_i32 = arith.constant 0 : i32
    return %arg0, %arg1 : i32, i32
  }
}

module attributes {stable_mosaic.version = 11 : i64} {
  func.func @_mm_fullk_kernel(%arg0: i32, %arg1: i32, %arg2: memref<16x32xbf16, #tpu.memory_space<vmem>>, %arg3: memref<32x128xbf16, #tpu.memory_space<vmem>>, %arg4: memref<1x128xf32, #tpu.memory_space<vmem>>, %arg5: memref<1x32xf32, #tpu.memory_space<vmem>>, %arg6: memref<1x32xf32, #tpu.memory_space<vmem>>, %arg7: memref<16x128xbf16, #tpu.memory_space<vmem>>) attributes {dimension_semantics = [#tpu.dimension_semantics<parallel>, #tpu.dimension_semantics<parallel>], iteration_bounds = array<i64: 1, 1>, scalar_prefetch = 0 : i64, scratch_operands = 0 : i64, tpu.core_type = #tpu.core_type<tc>, window_params = [{transform_indices = @transform_0, window_bounds = array<i64: 16, 32>}, {transform_indices = @transform_1, window_bounds = array<i64: 32, 128>}, {transform_indices = @transform_2, window_bounds = array<i64: 1, 128>}, {pipeline_mode = #tpu.pipeline_mode<synchronous>, transform_indices = @transform_3, window_bounds = array<i64: 1, 32>}, {pipeline_mode = #tpu.pipeline_mode<synchronous>, transform_indices = @transform_4, window_bounds = array<i64: 1, 32>}, {transform_indices = @transform_5, window_bounds = array<i64: 16, 128>}]} {
    %c0 = arith.constant 0 : index
    %c0_0 = arith.constant 0 : index
    %0 = vector.load %arg2[%c0, %c0_0] : memref<16x32xbf16, #tpu.memory_space<vmem>>, vector<16x32xbf16>
    %c0_1 = arith.constant 0 : index
    %c0_2 = arith.constant 0 : index
    %1 = vector.load %arg5[%c0_1, %c0_2] : memref<1x32xf32, #tpu.memory_space<vmem>>, vector<1x32xf32>
    %c0_3 = arith.constant 0 : index
    %c0_4 = arith.constant 0 : index
    %2 = vector.load %arg6[%c0_3, %c0_4] : memref<1x32xf32, #tpu.memory_space<vmem>>, vector<1x32xf32>
    %3 = arith.extf %0 : vector<16x32xbf16> to vector<16x32xf32>
    %cst = arith.constant dense<0.000000e+00> : vector<16xf32>
    %4 = vector.multi_reduction <add>, %3, %cst [1] : vector<16x32xf32> to vector<16xf32>
    %5 = vector.shape_cast %4 : vector<16xf32> to vector<16x1xf32>
    %cst_5 = arith.constant 3.200000e+01 : f32
    %6 = vector.broadcast %cst_5 : f32 to vector<16x1xf32>
    %7 = arith.divf %5, %6 : vector<16x1xf32>
    %8 = vector.broadcast %7 : vector<16x1xf32> to vector<16x32xf32>
    %9 = arith.subf %3, %8 : vector<16x32xf32>
    %10 = arith.mulf %9, %9 : vector<16x32xf32>
    %cst_6 = arith.constant dense<0.000000e+00> : vector<16xf32>
    %11 = vector.multi_reduction <add>, %10, %cst_6 [1] : vector<16x32xf32> to vector<16xf32>
    %12 = vector.shape_cast %11 : vector<16xf32> to vector<16x1xf32>
    %cst_7 = arith.constant 3.200000e+01 : f32
    %13 = vector.broadcast %cst_7 : f32 to vector<16x1xf32>
    %14 = arith.divf %12, %13 : vector<16x1xf32>
    %15 = vector.broadcast %7 : vector<16x1xf32> to vector<16x32xf32>
    %16 = arith.subf %3, %15 : vector<16x32xf32>
    %cst_8 = arith.constant 9.99999974E-6 : f32
    %17 = vector.broadcast %cst_8 : f32 to vector<16x1xf32>
    %18 = arith.addf %14, %17 : vector<16x1xf32>
    %19 = math.rsqrt %18 : vector<16x1xf32>
    %20 = vector.broadcast %19 : vector<16x1xf32> to vector<16x32xf32>
    %21 = arith.mulf %16, %20 : vector<16x32xf32>
    %22 = vector.broadcast %1 : vector<1x32xf32> to vector<16x32xf32>
    %23 = arith.mulf %21, %22 : vector<16x32xf32>
    %24 = vector.broadcast %2 : vector<1x32xf32> to vector<16x32xf32>
    %25 = arith.addf %23, %24 : vector<16x32xf32>
    %26 = arith.truncf %25 : vector<16x32xf32> to vector<16x32xbf16>
    %c0_9 = arith.constant 0 : index
    %c0_10 = arith.constant 0 : index
    %27 = vector.load %arg3[%c0_9, %c0_10] : memref<32x128xbf16, #tpu.memory_space<vmem>>, vector<32x128xbf16>
    %cst_11 = arith.constant dense<0.000000e+00> : vector<16x128xf32>
    %28 = tpu.matmul %26, %27, %cst_11 {dimension_numbers = #tpu.dot_dimension_numbers<[1], [0], [0], [1], [0, 0, 1, 1], [], []>} : vector<16x32xbf16>, vector<32x128xbf16>, vector<16x128xf32> -> vector<16x128xf32>
    %c0_12 = arith.constant 0 : index
    %c0_13 = arith.constant 0 : index
    %29 = vector.load %arg4[%c0_12, %c0_13] : memref<1x128xf32, #tpu.memory_space<vmem>>, vector<1x128xf32>
    %30 = vector.broadcast %29 : vector<1x128xf32> to vector<16x128xf32>
    %31 = arith.addf %28, %30 : vector<16x128xf32>
    %cst_14 = arith.constant 0.000000e+00 : f32
    %32 = vector.broadcast %cst_14 : f32 to vector<16x128xf32>
    %33 = arith.maximumf %31, %32 : vector<16x128xf32>
    %34 = arith.mulf %33, %33 : vector<16x128xf32>
    %35 = arith.truncf %34 : vector<16x128xf32> to vector<16x128xbf16>
    %c0_15 = arith.constant 0 : index
    %c0_16 = arith.constant 0 : index
    %36 = vector.load %arg7[%c0_15, %c0_16] : memref<16x128xbf16, #tpu.memory_space<vmem>>, vector<16x128xbf16>
    tpu.vector_store %arg7[%c0_15, %c0_16], %35 {strides = array<i32>} : memref<16x128xbf16, #tpu.memory_space<vmem>>, vector<16x128xbf16>,
    return
  }
  func.func @transform_0(%arg0: i32, %arg1: i32) -> (i32, i32) {
    %c0_i32 = arith.constant 0 : i32
    %c0_i32_0 = arith.constant 0 : i32
    return %arg0, %c0_i32 : i32, i32
  }
  func.func @transform_1(%arg0: i32, %arg1: i32) -> (i32, i32) {
    %c0_i32 = arith.constant 0 : i32
    %c0_i32_0 = arith.constant 0 : i32
    return %c0_i32, %arg1 : i32, i32
  }
  func.func @transform_2(%arg0: i32, %arg1: i32) -> (i32, i32) {
    %c0_i32 = arith.constant 0 : i32
    %c0_i32_0 = arith.constant 0 : i32
    return %c0_i32, %arg1 : i32, i32
  }
  func.func @transform_3(%arg0: i32, %arg1: i32) -> (i32, i32) {
    %c0_i32 = arith.constant 0 : i32
    %c0_i32_0 = arith.constant 0 : i32
    %c0_i32_1 = arith.constant 0 : i32
    return %c0_i32, %c0_i32_0 : i32, i32
  }
  func.func @transform_4(%arg0: i32, %arg1: i32) -> (i32, i32) {
    %c0_i32 = arith.constant 0 : i32
    %c0_i32_0 = arith.constant 0 : i32
    %c0_i32_1 = arith.constant 0 : i32
    return %c0_i32, %c0_i32_0 : i32, i32
  }
  func.func @transform_5(%arg0: i32, %arg1: i32) -> (i32, i32) {
    %c0_i32 = arith.constant 0 : i32
    return %arg0, %arg1 : i32, i32
  }
}

</mosaic_0001>

<llo_original>
// kernel: _forward.15
$region0: #{_forward.15}
  #allocation0 [shape = 'u32[]', space=smem, size = 0x4, offset = 0x4, fixed_abs, tag = 'smem constant byte address 0x4 - core index']
  #allocation1 [shape = 'u32[144,128]{1,0:T(1,128)}', space=vmem, size = 0x12000, scoped, tag = 'internal scratch']
  %s0 = inlined_call_operand.vmem [shape: bf16[16,32], index: 0, kind: input, shape index: {}]
  %s1 = inlined_call_operand.vmem [shape: bf16[16,32], index: 1, kind: input, shape index: {}]
  %s2 = inlined_call_operand.vmem [shape: bf16[16,32], index: 2, kind: input, shape index: {}]
  %s3 = inlined_call_operand.vmem [shape: bf16[16,32], index: 3, kind: output, shape index: {}]
  %s4 = sld [smem:[#allocation0]]
  $region45: #{_forward.15} parent=0
    _
  %s6 = ssub.s32 1, %s4
  %s7 = scalar_select 0, %s6, %s4
  loop: start=0, step=1, limit=4
  $region2: #{_forward.15} parent=0 // loop_pre_header
    _
  $region3: #{_forward.15} parent=0 // loop_header
    %s9 = sphi 0, %s13
    %p10 = scmp.ge.s32.totalorder %s9, 4
    %s16 = sphi 0, %s35
    %s17 = sphi 0, %s31
    %s18 = sphi 0, %s27
    %s19 = sphi 0, %s16
    %s20 = sphi 0, %s17
    %s21 = sphi 0, %s18
    %s22 = sphi 0, %s19
    %s23 = sphi 0, %s20
    %s24 = sphi 0, %s21
    %s42 = sphi 0, %s44
    %s45 = sphi 0, %s42
    %s46 = sphi 0, %s45
    %s62 = sphi 0, %s46
    %s70 = sphi 0, %s72
    %s73 = sphi 0, %s70
    %s74 = sphi 0, %s73
    %s90 = sphi 0, %s74
    %s98 = sphi 0, %s100
    %s101 = sphi 0, %s98
    %s102 = sphi 0, %s101
    %s118 = sphi 0, %s102
    %s128 = sphi 0, %s130
    %s131 = sphi 0, %s128
    %s132 = sphi 0, %s131
    %s148 = sphi 0, %s132
  $region4: #{_forward.15} parent=0 // loop_header_branch
    %12 = sbr.rel (%p10) target = $region8
  $region5: #{_forward.15} parent=0 // loop_body
    %s14 = ssub.s32 %s9, 1
    %s15 = ssub.s32 %s9, 2
    %s25 = sadd.s32 1, %s18
    %p26 = scmp.ge.s32.totalorder %s25, 1
    %s27 = scalar_select %p26, 0, %s25
    %s28 = sadd.s32 1, %s17
    %s29 = scalar_select %p26, %s28, %s17
    %p30 = scmp.ge.s32.totalorder %s29, 1
    %s31 = scalar_select %p30, 0, %s29
    %s32 = sadd.s32 1, %s16
    %s33 = scalar_select %p30, %s32, %s16
    %p34 = scmp.ge.s32.totalorder %s33, 2
    %s35 = scalar_select %p34, 0, %s33
    %s36 = sadd.s32 %s16, %s18
    %s37 = sadd.s32 %s35, %s27
    %s38 = ssub.s32 %s36, %s37
    %s39 = ssub.s32 %s17, %s31
    %s40 = sor.u32 %s38, %s39
    %p41 = scmp.eq.s32.totalorder %s40, 0
    %s43 = sadd.s32 %s42, 1
    %s44 = scalar_select %p41, %s42, %s43
    %p47 = pneg %p41
    %p48 = scmp.eq.s32.totalorder %s9, 1
    %p49 = por %p47, %p48
    %p50 = scmp.ne.s32.totalorder %s42, %s45
    %p51 = scmp.eq.s32.totalorder %s9, 0
    %p52 = por %p50, %p51
    %p53 = scmp.ne.s32.totalorder %s42, %s45
    %p54 = scmp.eq.s32.totalorder %s14, 1
    %p55 = por %p53, %p54
    %p56 = scmp.ne.s32.totalorder %s45, %s46
    %p57 = scmp.eq.s32.totalorder %s14, 0
    %p58 = por %p56, %p57
    %p59 = scmp.ne.s32.totalorder %s45, %s46
    %p60 = scmp.eq.s32.totalorder %s15, 1
    %p61 = por %p59, %p60
    %p63 = scmp.ne.s32.totalorder %s46, %s62
    %p64 = scmp.eq.s32.totalorder %s15, 0
    %p65 = por %p63, %p64
    %s66 = ssub.s32 %s16, %s35
    %s67 = ssub.s32 %s17, %s31
    %s68 = sor.u32 %s66, %s67
    %p69 = scmp.eq.s32.totalorder %s68, 0
    %s71 = sadd.s32 %s70, 1
    %s72 = scalar_select %p69, %s70, %s71
    %p75 = pneg %p69
    %p76 = scmp.eq.s32.totalorder %s9, 1
    %p77 = por %p75, %p76
    %p78 = scmp.ne.s32.totalorder %s70, %s73
    %p79 = scmp.eq.s32.totalorder %s9, 0
    %p80 = por %p78, %p79
    %p81 = scmp.ne.s32.totalorder %s70, %s73
    %p82 = scmp.eq.s32.totalorder %s14, 1
    %p83 = por %p81, %p82
    %p84 = scmp.ne.s32.totalorder %s73, %s74
    %p85 = scmp.eq.s32.totalorder %s14, 0
    %p86 = por %p84, %p85
    %p87 = scmp.ne.s32.totalorder %s73, %s74
    %p88 = scmp.eq.s32.totalorder %s15, 1
    %p89 = por %p87, %p88
    %p91 = scmp.ne.s32.totalorder %s74, %s90
    %p92 = scmp.eq.s32.totalorder %s15, 0
    %p93 = por %p91, %p92
    %s94 = ssub.s32 %s16, %s35
    %s95 = ssub.s32 %s17, %s31
    %s96 = sor.u32 %s94, %s95
    %p97 = scmp.eq.s32.totalorder %s96, 0
    %s99 = sadd.s32 %s98, 1
    %s100 = scalar_select %p97, %s98, %s99
    %p103 = pneg %p97
    %p104 = scmp.eq.s32.totalorder %s9, 1
    %p105 = por %p103, %p104
    %p106 = scmp.ne.s32.totalorder %s98, %s101
    %p107 = scmp.eq.s32.totalorder %s9, 0
    %p108 = por %p106, %p107
    %p109 = scmp.ne.s32.totalorder %s98, %s101
    %p110 = scmp.eq.s32.totalorder %s14, 1
    %p111 = por %p109, %p110
    %p112 = scmp.ne.s32.totalorder %s101, %s102
    %p113 = scmp.eq.s32.totalorder %s14, 0
    %p114 = por %p112, %p113
    %p115 = scmp.ne.s32.totalorder %s101, %s102
    %p116 = scmp.eq.s32.totalorder %s15, 1
    %p117 = por %p115, %p116
    %p119 = scmp.ne.s32.totalorder %s102, %s118
    %p120 = scmp.eq.s32.totalorder %s15, 0
    %p121 = por %p119, %p120
    %s122 = sadd.s32 %s16, %s18
    %s123 = sadd.s32 %s35, %s27
    %s124 = ssub.s32 %s122, %s123
    %s125 = ssub.s32 %s17, %s31
    %s126 = sor.u32 %s124, %s125
    %p127 = scmp.eq.s32.totalorder %s126, 0
    %s129 = sadd.s32 %s128, 1
    %s130 = scalar_select %p127, %s128, %s129
    %p133 = pneg %p127
    %p134 = scmp.eq.s32.totalorder %s9, 1
    %p135 = por %p133, %p134
    %p136 = scmp.ne.s32.totalorder %s128, %s131
    %p137 = scmp.eq.s32.totalorder %s9, 0
    %p138 = por %p136, %p137
    %p139 = scmp.ne.s32.totalorder %s128, %s131
    %p140 = scmp.eq.s32.totalorder %s14, 1
    %p141 = por %p139, %p140
    %p142 = scmp.ne.s32.totalorder %s131, %s132
    %p143 = scmp.eq.s32.totalorder %s14, 0
    %p144 = por %p142, %p143
    %p145 = scmp.ne.s32.totalorder %s131, %s132
    %p146 = scmp.eq.s32.totalorder %s15, 1
    %p147 = por %p145, %p146
    %p149 = scmp.ne.s32.totalorder %s132, %s148
    %p150 = scmp.eq.s32.totalorder %s15, 0
    %p151 = por %p149, %p150
    %p152 = scmp.le.s32.totalorder 1, %s9
    %p153 = scmp.lt.s32.totalorder %s9, 3
    %p154 = pnand %p152, %p153
    %p155 = pneg %p154
    // Predicated region
    $region9: #{_forward.15} parent=5 // pred_check
      _
    $region10: #{_forward.15} parent=5 // pred_check_branch
      %157 = sbr.rel (%p154) target = $region12
    $region11: #{_forward.15} parent=5 // pred_region
      %s158 = ssub.s32 %s9, 1
    $region12: #{_forward.15} parent=5 // pred_fallthru
      _
    %p159 = scmp.lt.s32.totalorder %s9, 2
    // Predicated region
    $region13: #{_forward.15} parent=5 // pred_check
      %p160 = pneg %p159
    $region14: #{_forward.15} parent=5 // pred_check_branch
      %162 = sbr.rel (%p160) target = $region16
    $region15: #{_forward.15} parent=5 // pred_region
      // Predicated region
      $region17: #{_forward.15} parent=15 // pred_check
        %p163 = pneg %p52
      $region18: #{_forward.15} parent=15 // pred_check_branch
        %165 = sbr.rel (%p163) target = $region20
      $region19: #{_forward.15} parent=15 // pred_region
        %s166 = sadd.s32 %s16, %s18
        %p167 = scmp.lt.s32.totalorder %s166, 1
        %s168 = scalar_select %p167, %s166, 1
        %p169 = scmp.lt.s32.totalorder %s17, 0
        %s170 = scalar_select %p169, %s17, 0
        %s171 = sadd.s32 %s170, %s168
        %s172 = smul.addr %s171, 4
        %s173 = scalar_lea.vmem %s0, %s172
        %s174 = sadd.s32 %s16, %s18
      $region20: #{_forward.15} parent=15 // pred_fallthru
        _
      // Predicated region
      $region21: #{_forward.15} parent=15 // pred_check
        %p175 = pneg %p80
      $region22: #{_forward.15} parent=15 // pred_check_branch
        %177 = sbr.rel (%p175) target = $region24
      $region23: #{_forward.15} parent=15 // pred_region
        %p178 = scmp.lt.s32.totalorder %s16, 1
        %s179 = scalar_select %p178, %s16, 1
        %p180 = scmp.lt.s32.totalorder %s17, 0
        %s181 = scalar_select %p180, %s17, 0
        %s182 = sadd.s32 %s181, %s179
        %s183 = smul.addr %s182, 4
        %s184 = scalar_lea.vmem %s1, %s183
      $region24: #{_forward.15} parent=15 // pred_fallthru
        _
      // Predicated region
      $region25: #{_forward.15} parent=15 // pred_check
        %p185 = pneg %p108
      $region26: #{_forward.15} parent=15 // pred_check_branch
        %187 = sbr.rel (%p185) target = $region28
      $region27: #{_forward.15} parent=15 // pred_region
        %p188 = scmp.lt.s32.totalorder %s16, 1
        %s189 = scalar_select %p188, %s16, 1
        %p190 = scmp.lt.s32.totalorder %s17, 0
        %s191 = scalar_select %p190, %s17, 0
        %s192 = sadd.s32 %s191, %s189
        %s193 = smul.addr %s192, 4
        %s194 = scalar_lea.vmem %s2, %s193
      $region28: #{_forward.15} parent=15 // pred_fallthru
        _
    $region16: #{_forward.15} parent=5 // pred_fallthru
      _
    %p195 = scmp.le.s32.totalorder 1, %s9
    %p196 = scmp.lt.s32.totalorder %s9, 3
    %p197 = pnand %p195, %p196
    %p198 = pneg %p197
    // Predicated region
    $region29: #{_forward.15} parent=5 // pred_check
      _
    $region30: #{_forward.15} parent=5 // pred_check_branch
      %200 = sbr.rel (%p197) target = $region32
    $region31: #{_forward.15} parent=5 // pred_region
      %s201 = ssub.s32 %s9, 1
      %s202 = sadd.s32 %s19, %s21
      %p203 = scmp.lt.s32.totalorder %s202, 1
      %s204 = scalar_select %p203, %s202, 1
      %p205 = scmp.lt.s32.totalorder %s20, 0
      %s206 = scalar_select %p205, %s20, 0
      %s207 = sadd.s32 %s206, %s204
      %s208 = smul.addr %s207, 4
      %s209 = scalar_lea.vmem %s0, %s208
      %p210 = pneg %p58
      %p211 = pneg %p55
      %p212 = scmp.lt.s32.totalorder %s19, 1
      %s213 = scalar_select %p212, %s19, 1
      %p214 = scmp.lt.s32.totalorder %s20, 0
      %s215 = scalar_select %p214, %s20, 0
      %s216 = sadd.s32 %s215, %s213
      %s217 = smul.addr %s216, 4
      %s218 = scalar_lea.vmem %s1, %s217
      %p219 = pneg %p86
      %p220 = pneg %p83
      %p221 = scmp.lt.s32.totalorder %s19, 1
      %s222 = scalar_select %p221, %s19, 1
      %p223 = scmp.lt.s32.totalorder %s20, 0
      %s224 = scalar_select %p223, %s20, 0
      %s225 = sadd.s32 %s224, %s222
      %s226 = smul.addr %s225, 4
      %s227 = scalar_lea.vmem %s2, %s226
      %p228 = pneg %p114
      %p229 = pneg %p111
      %p230 = pneg %p144
      %p231 = pneg %p141
      %s232 = sadd.s32 %s19, %s21
      %p233 = scmp.lt.s32.totalorder %s232, 1
      %s234 = scalar_select %p233, %s232, 1
      %p235 = scmp.lt.s32.totalorder %s20, 0
      %s236 = scalar_select %p235, %s20, 0
      %s237 = sadd.s32 %s236, %s234
      %s238 = smul.addr %s237, 4
      %s239 = scalar_lea.vmem %s3, %s238
      %s240 = sadd.s32 %s19, %s21
      %p241 = scmp.lt.s32.totalorder %s240, 1
      %s242 = scalar_select %p241, %s240, 1
      %p243 = scmp.lt.s32.totalorder %s20, 0
      %s244 = scalar_select %p243, %s20, 0
      %s245 = sadd.s32 %s244, %s242
      %s246 = smul.addr %s245, 4
      %s247 = scalar_lea.vmem %s0, %s246
      %s248 = sadd.s32 %s19, %s21
      %p249 = scmp.lt.s32.totalorder %s19, 1
      %s250 = scalar_select %p249, %s19, 1
      %p251 = scmp.lt.s32.totalorder %s20, 0
      %s252 = scalar_select %p251, %s20, 0
      %s253 = sadd.s32 %s252, %s250
      %s254 = smul.addr %s253, 4
      %s255 = scalar_lea.vmem %s1, %s254
      %p256 = scmp.lt.s32.totalorder %s19, 1
      %s257 = scalar_select %p256, %s19, 1
      %p258 = scmp.lt.s32.totalorder %s20, 0
      %s259 = scalar_select %p258, %s20, 0
      %s260 = sadd.s32 %s259, %s257
      %s261 = smul.addr %s260, 4
      %s262 = scalar_lea.vmem %s2, %s261
      %s263 = sadd.s32 %s19, %s21
      %p264 = scmp.lt.s32.totalorder %s263, 1
      %s265 = scalar_select %p264, %s263, 1
      %p266 = scmp.lt.s32.totalorder %s20, 0
      %s267 = scalar_select %p266, %s20, 0
      %s268 = sadd.s32 %s267, %s265
      %s269 = smul.addr %s268, 4
      %s270 = scalar_lea.vmem %s3, %s269
      %s271 = sadd.s32 %s19, %s21
      %v273 = vlaneseq
      %v274 = vshrl.u32 %v273, 7
      %s275 = smul.u32 %s21, 8
      %v276 = vstv %s275
      %v277 = vadd.s32 %v274, %v276
      %v278 = vlaneseq
      %v279 = vand.u32 %v278, 127
      %vm280 = vcmp.le.s32.totalorder %v279, %v277
      %v281 = vld [vmem:[%s247] sm:$0xf]
      %v282 = vld [vmem:[%s255] sm:$0xf]
      %v283 = vld [vmem:[%s262] sm:$0xf]
      %vm284 = vcmask 64512
      %v286 = vsel %vm284, %v281, 0
      %v289 = vsel %vm284, %v282, 0
      %291 = vmatprep.subr.bf16.mxu0 0
      %292 = vmatpush1.bf16.xpose.msra.mxu0 %v289
      %293 = vmatprep.subr.bf16.mxu0 0
      %294 = vmatpush1.bf16.xpose.msra.mxu0 0
      %295 = vmatprep.subr.bf16.mxu0 0
      %296 = vmatpush1.bf16.xpose.msra.mxu0 0
      %297 = vmatprep.subr.bf16.mxu0 0
      %298 = vmatpush1.bf16.xpose.msra.mxu0 0
      %299 = vmatprep.subr.bf16.mxu0 0
      %300 = vmatpush1.bf16.xpose.msra.mxu0 0
      %301 = vmatprep.subr.bf16.mxu0 0
      %302 = vmatpush1.bf16.xpose.msra.mxu0 0
      %303 = vmatprep.subr.bf16.mxu0 0
      %304 = vmatpush1.bf16.xpose.msra.mxu0 0
      %305 = vmatprep.subr.bf16.mxu0 0
      %306 = vmatpush1.bf16.xpose.msra.mxu0 0
      %307 = vmatprep.subr.bf16.mxu0 0
      %308 = vmatpush1.bf16.xpose.msra.mxu0 0
      %309 = vmatprep.subr.bf16.mxu0 0
      %310 = vmatpush1.bf16.xpose.msra.mxu0 0
      %311 = vmatprep.subr.bf16.mxu0 0
      %312 = vmatpush1.bf16.xpose.msra.mxu0 0
      %313 = vmatprep.subr.bf16.mxu0 0
      %314 = vmatpush1.bf16.xpose.msra.mxu0 0
      %315 = vmatprep.subr.bf16.mxu0 0
      %316 = vmatpush1.bf16.xpose.msra.mxu0 0
      %317 = vmatprep.subr.bf16.mxu0 0
      %318 = vmatpush1.bf16.xpose.msra.mxu0 0
      %319 = vmatprep.subr.bf16.mxu0 0
      %320 = vmatpush1.bf16.xpose.msra.mxu0 0
      %321 = vmatprep.subr.bf16.mxu0 0
      %322 = vmatpush1.bf16.xpose.msra.mxu0 0
      %323 = vmatprep.mubr.bf16.mxu0 0
      %324 = vmatmul.mubr.bf16.gmra.mrb[0].mxu0 %v286
      %v325 = vpop.f32.mrb[0].mxu0
      %v326 = vadd.f32 0.0, %v325
      %v327 = vpop.f32.mrb[0].mxu0
      %v328 = vpop.f32.mrb[0].mxu0
      %v329 = vpop.f32.mrb[0].mxu0
      %330 = vdwg.mxu0
      %v331 = vsel %vm280, %v326, -1e+30
      %v332 = vsel %vm284, %v331, -inf
      %333 = vmax.xlane.f32.xlu0 %v332
      %v334 = vpop.xlane.xlu0 %333
      %v335 = vsub.f32 %v331, %v334
      %v336 = vmul.f32 %v335, 1.442695
      %v337 = vpow.pop %v336
      %v338 = vsel %vm284, %v337, 0.0
      %339 = vadd.xlane.f32.xlu0 %v338
      %v340 = vpop.xlane.xlu0 %339
      %v341 = vpack.c.bf16 %v337, %v337
      %v343 = vsel %vm284, %v341, 0
      %vm345 = vcmask 1043456
      %v347 = vsel %vm345, %v283, 0
      %349 = vmatprep.subr.bf16.mxu0 0
      %350 = vmatpush1.bf16.msra.mxu0 %v347
      %351 = vmatprep.subr.bf16.mxu0 0
      %352 = vmatpush1.bf16.msra.mxu0 0
      %353 = vmatprep.subr.bf16.mxu0 0
      %354 = vmatpush1.bf16.msra.mxu0 0
      %355 = vmatprep.subr.bf16.mxu0 0
      %356 = vmatpush1.bf16.msra.mxu0 0
      %357 = vmatprep.subr.bf16.mxu0 0
      %358 = vmatpush1.bf16.msra.mxu0 0
      %359 = vmatprep.subr.bf16.mxu0 0
      %360 = vmatpush1.bf16.msra.mxu0 0
      %361 = vmatprep.subr.bf16.mxu0 0
      %362 = vmatpush1.bf16.msra.mxu0 0
      %363 = vmatprep.subr.bf16.mxu0 0
      %364 = vmatpush1.bf16.msra.mxu0 0
      %365 = vmatprep.subr.bf16.mxu0 0
      %366 = vmatpush1.bf16.msra.mxu0 0
      %367 = vmatprep.subr.bf16.mxu0 0
      %368 = vmatpush1.bf16.msra.mxu0 0
      %369 = vmatprep.subr.bf16.mxu0 0
      %370 = vmatpush1.bf16.msra.mxu0 0
      %371 = vmatprep.subr.bf16.mxu0 0
      %372 = vmatpush1.bf16.msra.mxu0 0
      %373 = vmatprep.subr.bf16.mxu0 0
      %374 = vmatpush1.bf16.msra.mxu0 0
      %375 = vmatprep.subr.bf16.mxu0 0
      %376 = vmatpush1.bf16.msra.mxu0 0
      %377 = vmatprep.subr.bf16.mxu0 0
      %378 = vmatpush1.bf16.msra.mxu0 0
      %379 = vmatprep.subr.bf16.mxu0 0
      %380 = vmatpush1.bf16.msra.mxu0 0
      %381 = vmatprep.mubr.bf16.mxu0 0
      %382 = vmatmul.mubr.bf16.gmra.mrb[0].mxu0 %v343
      %v383 = vpop.f32.mrb[0].mxu0
      %v384 = vadd.f32 0.0, %v383
      %v385 = vpop.f32.mrb[0].mxu0
      %v386 = vpop.f32.mrb[0].mxu0
      %v387 = vpop.f32.mrb[0].mxu0
      %388 = vdwg.mxu0
      %v389 = vrcp.pop %v340
      %v390 = vmul.f32 %v384, %v389
      %v391 = vpack.c.bf16 %v390, %v390
      %vm392 = vcmask 60416
      %393 = vst.msk [vmem:[%s270] sm:$0xf] %vm392, %v391
      %v394 = vld [vmem:[%s247] sm:$0xf]
      %v395 = vld [vmem:[%s255] sm:$0xf]
      %v396 = vld [vmem:[%s262] sm:$0xf]
      %v398 = vunpack.c.l.b16 %v394
      %v399 = vpack.c.b16 %v398, %v398
      %400 = vrot.lane.b32.xlu0 %v399, 120
      %v401 = vpop.permute.xlu0 %400
      %v403 = vunpack.c.l.b16 %v395
      %v404 = vpack.c.b16 %v403, %v403
      %405 = vrot.lane.b32.xlu0 %v404, 120
      %v406 = vpop.permute.xlu0 %405
      %v408 = vsel %vm284, %v401, 0
      %v411 = vsel %vm284, %v406, 0
      %413 = vmatprep.subr.bf16.mxu0 0
      %414 = vmatpush1.bf16.xpose.msra.mxu0 %v411
      %415 = vmatprep.subr.bf16.mxu0 0
      %416 = vmatpush1.bf16.xpose.msra.mxu0 0
      %417 = vmatprep.subr.bf16.mxu0 0
      %418 = vmatpush1.bf16.xpose.msra.mxu0 0
      %419 = vmatprep.subr.bf16.mxu0 0
      %420 = vmatpush1.bf16.xpose.msra.mxu0 0
      %421 = vmatprep.subr.bf16.mxu0 0
      %422 = vmatpush1.bf16.xpose.msra.mxu0 0
      %423 = vmatprep.subr.bf16.mxu0 0
      %424 = vmatpush1.bf16.xpose.msra.mxu0 0
      %425 = vmatprep.subr.bf16.mxu0 0
      %426 = vmatpush1.bf16.xpose.msra.mxu0 0
      %427 = vmatprep.subr.bf16.mxu0 0
      %428 = vmatpush1.bf16.xpose.msra.mxu0 0
      %429 = vmatprep.subr.bf16.mxu0 0
      %430 = vmatpush1.bf16.xpose.msra.mxu0 0
      %431 = vmatprep.subr.bf16.mxu0 0
      %432 = vmatpush1.bf16.xpose.msra.mxu0 0
      %433 = vmatprep.subr.bf16.mxu0 0
      %434 = vmatpush1.bf16.xpose.msra.mxu0 0
      %435 = vmatprep.subr.bf16.mxu0 0
      %436 = vmatpush1.bf16.xpose.msra.mxu0 0
      %437 = vmatprep.subr.bf16.mxu0 0
      %438 = vmatpush1.bf16.xpose.msra.mxu0 0
      %439 = vmatprep.subr.bf16.mxu0 0
      %440 = vmatpush1.bf16.xpose.msra.mxu0 0
      %441 = vmatprep.subr.bf16.mxu0 0
      %442 = vmatpush1.bf16.xpose.msra.mxu0 0
      %443 = vmatprep.subr.bf16.mxu0 0
      %444 = vmatpush1.bf16.xpose.msra.mxu0 0
      %445 = vmatprep.mubr.bf16.mxu0 0
      %446 = vmatmul.mubr.bf16.gmra.mrb[0].mxu0 %v408
      %v447 = vpop.f32.mrb[0].mxu0
      %v448 = vadd.f32 0.0, %v447
      %v449 = vpop.f32.mrb[0].mxu0
      %v450 = vpop.f32.mrb[0].mxu0
      %v451 = vpop.f32.mrb[0].mxu0
      %452 = vdwg.mxu0
      %v453 = vsel %vm280, %v448, -1e+30
      %v454 = vsel %vm284, %v453, -inf
      %455 = vmax.xlane.f32.xlu0 %v454
      %v456 = vpop.xlane.xlu0 %455
      %v457 = vsub.f32 %v453, %v456
      %v458 = vmul.f32 %v457, 1.442695
      %v459 = vpow.pop %v458
      %v460 = vsel %vm284, %v459, 0.0
      %461 = vadd.xlane.f32.xlu0 %v460
      %v462 = vpop.xlane.xlu0 %461
      %v463 = vpack.c.bf16 %v459, %v459
      %v465 = vunpack.c.l.b16 %v396
      %v466 = vpack.c.b16 %v465, %v465
      %467 = vrot.lane.b32.xlu0 %v466, 120
      %v468 = vpop.permute.xlu0 %467
      %v470 = vsel %vm284, %v463, 0
      %v473 = vsel %vm345, %v468, 0
      %475 = vmatprep.subr.bf16.mxu0 0
      %476 = vmatpush1.bf16.msra.mxu0 %v473
      %477 = vmatprep.subr.bf16.mxu0 0
      %478 = vmatpush1.bf16.msra.mxu0 0
      %479 = vmatprep.subr.bf16.mxu0 0
      %480 = vmatpush1.bf16.msra.mxu0 0
      %481 = vmatprep.subr.bf16.mxu0 0
      %482 = vmatpush1.bf16.msra.mxu0 0
      %483 = vmatprep.subr.bf16.mxu0 0
      %484 = vmatpush1.bf16.msra.mxu0 0
      %485 = vmatprep.subr.bf16.mxu0 0
      %486 = vmatpush1.bf16.msra.mxu0 0
      %487 = vmatprep.subr.bf16.mxu0 0
      %488 = vmatpush1.bf16.msra.mxu0 0
      %489 = vmatprep.subr.bf16.mxu0 0
      %490 = vmatpush1.bf16.msra.mxu0 0
      %491 = vmatprep.subr.bf16.mxu0 0
      %492 = vmatpush1.bf16.msra.mxu0 0
      %493 = vmatprep.subr.bf16.mxu0 0
      %494 = vmatpush1.bf16.msra.mxu0 0
      %495 = vmatprep.subr.bf16.mxu0 0
      %496 = vmatpush1.bf16.msra.mxu0 0
      %497 = vmatprep.subr.bf16.mxu0 0
      %498 = vmatpush1.bf16.msra.mxu0 0
      %499 = vmatprep.subr.bf16.mxu0 0
      %500 = vmatpush1.bf16.msra.mxu0 0
      %501 = vmatprep.subr.bf16.mxu0 0
      %502 = vmatpush1.bf16.msra.mxu0 0
      %503 = vmatprep.subr.bf16.mxu0 0
      %504 = vmatpush1.bf16.msra.mxu0 0
      %505 = vmatprep.subr.bf16.mxu0 0
      %506 = vmatpush1.bf16.msra.mxu0 0
      %507 = vmatprep.mubr.bf16.mxu0 0
      %508 = vmatmul.mubr.bf16.gmra.mrb[0].mxu0 %v470
      %v509 = vpop.f32.mrb[0].mxu0
      %v510 = vadd.f32 0.0, %v509
      %v511 = vpop.f32.mrb[0].mxu0
      %v512 = vpop.f32.mrb[0].mxu0
      %v513 = vpop.f32.mrb[0].mxu0
      %514 = vdwg.mxu0
      %v515 = vrcp.pop %v462
      %v516 = vmul.f32 %v510, %v515
      %v517 = vpack.c.bf16 %v516, %v516
      %v519 = vunpack.c.l.b16 %v517
      %v520 = vpack.c.b16 %v519, %v519
      %521 = vrot.lane.b32.xlu0 %v520, 8
      %v522 = vpop.permute.xlu0 %521
      %vm524 = vcmask 126016
      %525 = vst.msk [vmem:[%s270] sm:$0xf] %vm524, %v522
      %v526 = vld [vmem:[%s247] sm:$0xf]
      %v527 = vld [vmem:[%s255] sm:$0xf]
      %v528 = vld [vmem:[%s262] sm:$0xf]
      %v530 = vunpack.c.l.b16 %v526
      %v531 = vpack.c.b16 %v530, %v530
      %532 = vrot.lane.b32.xlu0 %v531, 112
      %v533 = vpop.permute.xlu0 %532
      %v535 = vunpack.c.l.b16 %v527
      %v536 = vpack.c.b16 %v535, %v535
      %537 = vrot.lane.b32.xlu0 %v536, 112
      %v538 = vpop.permute.xlu0 %537
      %v540 = vsel %vm284, %v533, 0
      %v543 = vsel %vm284, %v538, 0
      %545 = vmatprep.subr.bf16.mxu0 0
      %546 = vmatpush1.bf16.xpose.msra.mxu0 %v543
      %547 = vmatprep.subr.bf16.mxu0 0
      %548 = vmatpush1.bf16.xpose.msra.mxu0 0
      %549 = vmatprep.subr.bf16.mxu0 0
      %550 = vmatpush1.bf16.xpose.msra.mxu0 0
      %551 = vmatprep.subr.bf16.mxu0 0
      %552 = vmatpush1.bf16.xpose.msra.mxu0 0
      %553 = vmatprep.subr.bf16.mxu0 0
      %554 = vmatpush1.bf16.xpose.msra.mxu0 0
      %555 = vmatprep.subr.bf16.mxu0 0
      %556 = vmatpush1.bf16.xpose.msra.mxu0 0
      %557 = vmatprep.subr.bf16.mxu0 0
      %558 = vmatpush1.bf16.xpose.msra.mxu0 0
      %559 = vmatprep.subr.bf16.mxu0 0
      %560 = vmatpush1.bf16.xpose.msra.mxu0 0
      %561 = vmatprep.subr.bf16.mxu0 0
      %562 = vmatpush1.bf16.xpose.msra.mxu0 0
      %563 = vmatprep.subr.bf16.mxu0 0
      %564 = vmatpush1.bf16.xpose.msra.mxu0 0
      %565 = vmatprep.subr.bf16.mxu0 0
      %566 = vmatpush1.bf16.xpose.msra.mxu0 0
      %567 = vmatprep.subr.bf16.mxu0 0
      %568 = vmatpush1.bf16.xpose.msra.mxu0 0
      %569 = vmatprep.subr.bf16.mxu0 0
      %570 = vmatpush1.bf16.xpose.msra.mxu0 0
      %571 = vmatprep.subr.bf16.mxu0 0
      %572 = vmatpush1.bf16.xpose.msra.mxu0 0
      %573 = vmatprep.subr.bf16.mxu0 0
      %574 = vmatpush1.bf16.xpose.msra.mxu0 0
      %575 = vmatprep.subr.bf16.mxu0 0
      %576 = vmatpush1.bf16.xpose.msra.mxu0 0
      %577 = vmatprep.mubr.bf16.mxu0 0
      %578 = vmatmul.mubr.bf16.gmra.mrb[0].mxu0 %v540
      %v579 = vpop.f32.mrb[0].mxu0
      %v580 = vadd.f32 0.0, %v579
      %v581 = vpop.f32.mrb[0].mxu0
      %v582 = vpop.f32.mrb[0].mxu0
      %v583 = vpop.f32.mrb[0].mxu0
      %584 = vdwg.mxu0
      %v585 = vsel %vm280, %v580, -1e+30
      %v586 = vsel %vm284, %v585, -inf
      %587 = vmax.xlane.f32.xlu0 %v586
      %v588 = vpop.xlane.xlu0 %587
      %v589 = vsub.f32 %v585, %v588
      %v590 = vmul.f32 %v589, 1.442695
      %v591 = vpow.pop %v590
      %v592 = vsel %vm284, %v591, 0.0
      %593 = vadd.xlane.f32.xlu0 %v592
      %v594 = vpop.xlane.xlu0 %593
      %v595 = vpack.c.bf16 %v591, %v591
      %v597 = vunpack.c.l.b16 %v528
      %v598 = vpack.c.b16 %v597, %v597
      %599 = vrot.lane.b32.xlu0 %v598, 112
      %v600 = vpop.permute.xlu0 %599
      %v602 = vsel %vm284, %v595, 0
      %v605 = vsel %vm345, %v600, 0
      %607 = vmatprep.subr.bf16.mxu0 0
      %608 = vmatpush1.bf16.msra.mxu0 %v605
      %609 = vmatprep.subr.bf16.mxu0 0
      %610 = vmatpush1.bf16.msra.mxu0 0
      %611 = vmatprep.subr.bf16.mxu0 0
      %612 = vmatpush1.bf16.msra.mxu0 0
      %613 = vmatprep.subr.bf16.mxu0 0
      %614 = vmatpush1.bf16.msra.mxu0 0
      %615 = vmatprep.subr.bf16.mxu0 0
      %616 = vmatpush1.bf16.msra.mxu0 0
      %617 = vmatprep.subr.bf16.mxu0 0
      %618 = vmatpush1.bf16.msra.mxu0 0
      %619 = vmatprep.subr.bf16.mxu0 0
      %620 = vmatpush1.bf16.msra.mxu0 0
      %621 = vmatprep.subr.bf16.mxu0 0
      %622 = vmatpush1.bf16.msra.mxu0 0
      %623 = vmatprep.subr.bf16.mxu0 0
      %624 = vmatpush1.bf16.msra.mxu0 0
      %625 = vmatprep.subr.bf16.mxu0 0
      %626 = vmatpush1.bf16.msra.mxu0 0
      %627 = vmatprep.subr.bf16.mxu0 0
      %628 = vmatpush1.bf16.msra.mxu0 0
      %629 = vmatprep.subr.bf16.mxu0 0
      %630 = vmatpush1.bf16.msra.mxu0 0
      %631 = vmatprep.subr.bf16.mxu0 0
      %632 = vmatpush1.bf16.msra.mxu0 0
      %633 = vmatprep.subr.bf16.mxu0 0
      %634 = vmatpush1.bf16.msra.mxu0 0
      %635 = vmatprep.subr.bf16.mxu0 0
      %636 = vmatpush1.bf16.msra.mxu0 0
      %637 = vmatprep.subr.bf16.mxu0 0
      %638 = vmatpush1.bf16.msra.mxu0 0
      %639 = vmatprep.mubr.bf16.mxu0 0
      %640 = vmatmul.mubr.bf16.gmra.mrb[0].mxu0 %v602
      %v641 = vpop.f32.mrb[0].mxu0
      %v642 = vadd.f32 0.0, %v641
      %v643 = vpop.f32.mrb[0].mxu0
      %v644 = vpop.f32.mrb[0].mxu0
      %v645 = vpop.f32.mrb[0].mxu0
      %646 = vdwg.mxu0
      %v647 = vrcp.pop %v594
      %v648 = vmul.f32 %v642, %v647
      %v649 = vpack.c.bf16 %v648, %v648
      %v651 = vunpack.c.l.b16 %v649
      %v652 = vpack.c.b16 %v651, %v651
      %653 = vrot.lane.b32.xlu0 %v652, 16
      %v654 = vpop.permute.xlu0 %653
      %vm656 = vcmask 191616
      %657 = vst.msk [vmem:[%s270] sm:$0xf] %vm656, %v654
      %v658 = vld [vmem:[%s247] sm:$0xf]
      %v659 = vld [vmem:[%s255] sm:$0xf]
      %v660 = vld [vmem:[%s262] sm:$0xf]
      %v662 = vunpack.c.l.b16 %v658
      %v663 = vpack.c.b16 %v662, %v662
      %664 = vrot.lane.b32.xlu0 %v663, 104
      %v665 = vpop.permute.xlu0 %664
      %v667 = vunpack.c.l.b16 %v659
      %v668 = vpack.c.b16 %v667, %v667
      %669 = vrot.lane.b32.xlu0 %v668, 104
      %v670 = vpop.permute.xlu0 %669
      %v672 = vsel %vm284, %v665, 0
      %v675 = vsel %vm284, %v670, 0
      %677 = vmatprep.subr.bf16.mxu0 0
      %678 = vmatpush1.bf16.xpose.msra.mxu0 %v675
      %679 = vmatprep.subr.bf16.mxu0 0
      %680 = vmatpush1.bf16.xpose.msra.mxu0 0
      %681 = vmatprep.subr.bf16.mxu0 0
      %682 = vmatpush1.bf16.xpose.msra.mxu0 0
      %683 = vmatprep.subr.bf16.mxu0 0
      %684 = vmatpush1.bf16.xpose.msra.mxu0 0
      %685 = vmatprep.subr.bf16.mxu0 0
      %686 = vmatpush1.bf16.xpose.msra.mxu0 0
      %687 = vmatprep.subr.bf16.mxu0 0
      %688 = vmatpush1.bf16.xpose.msra.mxu0 0
      %689 = vmatprep.subr.bf16.mxu0 0
      %690 = vmatpush1.bf16.xpose.msra.mxu0 0
      %691 = vmatprep.subr.bf16.mxu0 0
      %692 = vmatpush1.bf16.xpose.msra.mxu0 0
      %693 = vmatprep.subr.bf16.mxu0 0
      %694 = vmatpush1.bf16.xpose.msra.mxu0 0
      %695 = vmatprep.subr.bf16.mxu0 0
      %696 = vmatpush1.bf16.xpose.msra.mxu0 0
      %697 = vmatprep.subr.bf16.mxu0 0
      %698 = vmatpush1.bf16.xpose.msra.mxu0 0
      %699 = vmatprep.subr.bf16.mxu0 0
      %700 = vmatpush1.bf16.xpose.msra.mxu0 0
      %701 = vmatprep.subr.bf16.mxu0 0
      %702 = vmatpush1.bf16.xpose.msra.mxu0 0
      %703 = vmatprep.subr.bf16.mxu0 0
      %704 = vmatpush1.bf16.xpose.msra.mxu0 0
      %705 = vmatprep.subr.bf16.mxu0 0
      %706 = vmatpush1.bf16.xpose.msra.mxu0 0
      %707 = vmatprep.subr.bf16.mxu0 0
      %708 = vmatpush1.bf16.xpose.msra.mxu0 0
      %709 = vmatprep.mubr.bf16.mxu0 0
      %710 = vmatmul.mubr.bf16.gmra.mrb[0].mxu0 %v672
      %v711 = vpop.f32.mrb[0].mxu0
      %v712 = vadd.f32 0.0, %v711
      %v713 = vpop.f32.mrb[0].mxu0
      %v714 = vpop.f32.mrb[0].mxu0
      %v715 = vpop.f32.mrb[0].mxu0
      %716 = vdwg.mxu0
      %v717 = vsel %vm280, %v712, -1e+30
      %v718 = vsel %vm284, %v717, -inf
      %719 = vmax.xlane.f32.xlu0 %v718
      %v720 = vpop.xlane.xlu0 %719
      %v721 = vsub.f32 %v717, %v720
      %v722 = vmul.f32 %v721, 1.442695
      %v723 = vpow.pop %v722
      %v724 = vsel %vm284, %v723, 0.0
      %725 = vadd.xlane.f32.xlu0 %v724
      %v726 = vpop.xlane.xlu0 %725
      %v727 = vpack.c.bf16 %v723, %v723
      %v729 = vunpack.c.l.b16 %v660
      %v730 = vpack.c.b16 %v729, %v729
      %731 = vrot.lane.b32.xlu0 %v730, 104
      %v732 = vpop.permute.xlu0 %731
      %v734 = vsel %vm284, %v727, 0
      %v737 = vsel %vm345, %v732, 0
      %739 = vmatprep.subr.bf16.mxu0 0
      %740 = vmatpush1.bf16.msra.mxu0 %v737
      %741 = vmatprep.subr.bf16.mxu0 0
      %742 = vmatpush1.bf16.msra.mxu0 0
      %743 = vmatprep.subr.bf16.mxu0 0
      %744 = vmatpush1.bf16.msra.mxu0 0
      %745 = vmatprep.subr.bf16.mxu0 0
      %746 = vmatpush1.bf16.msra.mxu0 0
      %747 = vmatprep.subr.bf16.mxu0 0
      %748 = vmatpush1.bf16.msra.mxu0 0
      %749 = vmatprep.subr.bf16.mxu0 0
      %750 = vmatpush1.bf16.msra.mxu0 0
      %751 = vmatprep.subr.bf16.mxu0 0
      %752 = vmatpush1.bf16.msra.mxu0 0
      %753 = vmatprep.subr.bf16.mxu0 0
      %754 = vmatpush1.bf16.msra.mxu0 0
      %755 = vmatprep.subr.bf16.mxu0 0
      %756 = vmatpush1.bf16.msra.mxu0 0
      %757 = vmatprep.subr.bf16.mxu0 0
      %758 = vmatpush1.bf16.msra.mxu0 0
      %759 = vmatprep.subr.bf16.mxu0 0
      %760 = vmatpush1.bf16.msra.mxu0 0
      %761 = vmatprep.subr.bf16.mxu0 0
      %762 = vmatpush1.bf16.msra.mxu0 0
      %763 = vmatprep.subr.bf16.mxu0 0
      %764 = vmatpush1.bf16.msra.mxu0 0
      %765 = vmatprep.subr.bf16.mxu0 0
      %766 = vmatpush1.bf16.msra.mxu0 0
      %767 = vmatprep.subr.bf16.mxu0 0
      %768 = vmatpush1.bf16.msra.mxu0 0
      %769 = vmatprep.subr.bf16.mxu0 0
      %770 = vmatpush1.bf16.msra.mxu0 0
      %771 = vmatprep.mubr.bf16.mxu0 0
      %772 = vmatmul.mubr.bf16.gmra.mrb[0].mxu0 %v734
      %v773 = vpop.f32.mrb[0].mxu0
      %v774 = vadd.f32 0.0, %v773
      %v775 = vpop.f32.mrb[0].mxu0
      %v776 = vpop.f32.mrb[0].mxu0
      %v777 = vpop.f32.mrb[0].mxu0
      %778 = vdwg.mxu0
      %v779 = vrcp.pop %v726
      %v780 = vmul.f32 %v774, %v779
      %v781 = vpack.c.bf16 %v780, %v780
      %v783 = vunpack.c.l.b16 %v781
      %v784 = vpack.c.b16 %v783, %v783
      %785 = vrot.lane.b32.xlu0 %v784, 24
      %v786 = vpop.permute.xlu0 %785
      %vm788 = vcmask 257216
      %789 = vst.msk [vmem:[%s270] sm:$0xf] %vm788, %v786
      %s790 = sadd.s32 %s19, %s21
      %p791 = scmp.lt.s32.totalorder %s790, 1
      %s792 = scalar_select %p791, %s790, 1
      %p793 = scmp.lt.s32.totalorder %s20, 0
      %s794 = scalar_select %p793, %s20, 0
      %s795 = sadd.s32 %s794, %s792
      %s796 = smul.addr %s795, 4
      %s797 = scalar_lea.vmem %s3, %s796
      // Predicated region
      $region33: #{_forward.15} parent=31 // pred_check
        %p798 = pneg %p141
      $region34: #{_forward.15} parent=31 // pred_check_branch
        %800 = sbr.rel (%p798) target = $region36
      $region35: #{_forward.15} parent=31 // pred_region
        %s801 = sadd.s32 %s19, %s21
      $region36: #{_forward.15} parent=31 // pred_fallthru
        _
    $region32: #{_forward.15} parent=5 // pred_fallthru
      _
    %p802 = scmp.le.s32.totalorder 2, %s9
    // Predicated region
    $region37: #{_forward.15} parent=5 // pred_check
      %p803 = pneg %p802
    $region38: #{_forward.15} parent=5 // pred_check_branch
      %805 = sbr.rel (%p803) target = $region40
    $region39: #{_forward.15} parent=5 // pred_region
      %s806 = ssub.s32 %s9, 2
      // Predicated region
      $region41: #{_forward.15} parent=39 // pred_check
        %p807 = pneg %p147
      $region42: #{_forward.15} parent=39 // pred_check_branch
        %809 = sbr.rel (%p807) target = $region44
      $region43: #{_forward.15} parent=39 // pred_region
        %s810 = sadd.s32 %s22, %s24
        %p811 = scmp.lt.s32.totalorder %s810, 1
        %s812 = scalar_select %p811, %s810, 1
        %p813 = scmp.lt.s32.totalorder %s23, 0
        %s814 = scalar_select %p813, %s23, 0
        %s815 = sadd.s32 %s814, %s812
        %s816 = smul.addr %s815, 4
        %s817 = scalar_lea.vmem %s3, %s816
      $region44: #{_forward.15} parent=39 // pred_fallthru
        _
    $region40: #{_forward.15} parent=5 // pred_fallthru
      _
  $region6: #{_forward.15} parent=0 // loop_footer
    %s13 = sadd.s32 1, %s9
  $region7: #{_forward.15} parent=0 // loop_footer_branch
    %8 = sbr.rel target = $region3
  $region8: #{_forward.15} parent=0 // loop_exit
    _

// kernel: _forward.16
$region0: #{_forward.16}
  #allocation0 [shape = 'u32[]', space=smem, size = 0x4, offset = 0x4, fixed_abs, tag = 'smem constant byte address 0x4 - core index']
  #allocation1 [shape = 'u32[144,128]{1,0:T(1,128)}', space=vmem, size = 0x12000, scoped, tag = 'internal scratch']
  %s0 = inlined_call_operand.vmem [shape: bf16[16,32], index: 0, kind: input, shape index: {}]
  %s1 = inlined_call_operand.vmem [shape: bf16[32,32], index: 1, kind: input, shape index: {}]
  %s2 = inlined_call_operand.vmem [shape: f32[1,32], index: 2, kind: input, shape index: {}]
  %s3 = inlined_call_operand.vmem [shape: bf16[16,32], index: 3, kind: input, shape index: {}]
  %s4 = inlined_call_operand.vmem [shape: bf16[16,32], index: 4, kind: output, shape index: {}]
  %s5 = sld [smem:[#allocation0]]
  $region26: #{_forward.16} parent=0
    _
  %s7 = ssub.s32 1, %s5
  %s8 = scalar_select 0, %s7, %s5
  // Predicated region
  $region2: #{_forward.16} parent=0 // pred_check
    _
  $region3: #{_forward.16} parent=0 // pred_check_branch
    %10 = sbr.rel (0) target = $region5
  $region4: #{_forward.16} parent=0 // pred_region
    _
  $region5: #{_forward.16} parent=0 // pred_fallthru
    _
  // Predicated region
  $region6: #{_forward.16} parent=0 // pred_check
    _
  $region7: #{_forward.16} parent=0 // pred_check_branch
    %12 = sbr.rel (0) target = $region9
  $region8: #{_forward.16} parent=0 // pred_region
    _
  $region9: #{_forward.16} parent=0 // pred_fallthru
    _
  // Predicated region
  $region10: #{_forward.16} parent=0 // pred_check
    _
  $region11: #{_forward.16} parent=0 // pred_check_branch
    %14 = sbr.rel (0) target = $region13
  $region12: #{_forward.16} parent=0 // pred_region
    _
  $region13: #{_forward.16} parent=0 // pred_fallthru
    _
  // Predicated region
  $region14: #{_forward.16} parent=0 // pred_check
    _
  $region15: #{_forward.16} parent=0 // pred_check_branch
    %16 = sbr.rel (0) target = $region17
  $region16: #{_forward.16} parent=0 // pred_region
    _
  $region17: #{_forward.16} parent=0 // pred_fallthru
    _
  %v18 = vld [vmem:[%s0] sm:$0xf]
  %v19 = vld [vmem:[%s0 + $0x4] sm:$0xf]
  %v20 = vld [vmem:[%s1] sm:$0xf]
  %v21 = vld [vmem:[%s1 + $0x4] sm:$0xf]
  %v22 = vld [vmem:[%s1 + $0x8] sm:$0xf]
  %v23 = vld [vmem:[%s1 + $0xc] sm:$0xf]
  %v24 = vld [vmem:[%s2] sm:$0x1]
  %v26 = vlaneseq
  %v27 = vshrl.u32 %v26, 7
  %v28 = vsub.s32 0, %v27
  %v29 = vrot.slane %v24, %v28
  %v33 = vunpack.c.l.b16 %v18
  %v34 = vunpack.c.l.b16 %v19
  %v35 = vpack.c.b16 %v34, %v33
  %v40 = vunpack.c.l.b16 %v20
  %v41 = vunpack.c.l.b16 %v21
  %v42 = vunpack.c.l.b16 %v22
  %v43 = vunpack.c.l.b16 %v23
  %v44 = vpack.c.b16 %v41, %v40
  %v45 = vpack.c.b16 %v43, %v42
  %vm48 = vcmask 261120
  %v50 = vsel %vm48, %v35, 0
  %52 = vmatprep.subr.bf16.mxu0 0
  %53 = vmatpush1.bf16.msra.mxu0 %v44
  %54 = vmatprep.subr.bf16.mxu0 0
  %55 = vmatpush1.bf16.msra.mxu0 %v45
  %56 = vmatprep.subr.bf16.mxu0 0
  %57 = vmatpush1.bf16.msra.mxu0 0
  %58 = vmatprep.subr.bf16.mxu0 0
  %59 = vmatpush1.bf16.msra.mxu0 0
  %60 = vmatprep.subr.bf16.mxu0 0
  %61 = vmatpush1.bf16.msra.mxu0 0
  %62 = vmatprep.subr.bf16.mxu0 0
  %63 = vmatpush1.bf16.msra.mxu0 0
  %64 = vmatprep.subr.bf16.mxu0 0
  %65 = vmatpush1.bf16.msra.mxu0 0
  %66 = vmatprep.subr.bf16.mxu0 0
  %67 = vmatpush1.bf16.msra.mxu0 0
  %68 = vmatprep.subr.bf16.mxu0 0
  %69 = vmatpush1.bf16.msra.mxu0 0
  %70 = vmatprep.subr.bf16.mxu0 0
  %71 = vmatpush1.bf16.msra.mxu0 0
  %72 = vmatprep.subr.bf16.mxu0 0
  %73 = vmatpush1.bf16.msra.mxu0 0
  %74 = vmatprep.subr.bf16.mxu0 0
  %75 = vmatpush1.bf16.msra.mxu0 0
  %76 = vmatprep.subr.bf16.mxu0 0
  %77 = vmatpush1.bf16.msra.mxu0 0
  %78 = vmatprep.subr.bf16.mxu0 0
  %79 = vmatpush1.bf16.msra.mxu0 0
  %80 = vmatprep.subr.bf16.mxu0 0
  %81 = vmatpush1.bf16.msra.mxu0 0
  %82 = vmatprep.subr.bf16.mxu0 0
  %83 = vmatpush1.bf16.msra.mxu0 0
  %84 = vmatprep.mubr.bf16.mxu0 0
  %85 = vmatmul.mubr.bf16.gmra.mrb[0].mxu0 %v50
  %v86 = vpop.f32.mrb[0].mxu0
  %v87 = vadd.f32 %v29, %v86
  %v88 = vpop.f32.mrb[0].mxu0
  %v89 = vpop.f32.mrb[0].mxu0
  %v90 = vadd.f32 %v29, %v89
  %v91 = vpop.f32.mrb[0].mxu0
  %92 = vdwg.mxu0
  %v93 = vld [vmem:[%s3] sm:$0xf]
  %v94 = vld [vmem:[%s3 + $0x4] sm:$0xf]
  %v95 = vunpack.c.l.bf16 %v93
  %v96 = vunpack.c.l.bf16 %v94
  %v97 = vadd.f32 %v87, %v95
  %v98 = vadd.f32 %v90, %v96
  %v99 = vpack.c.bf16 %v98, %v97
  %v101 = vunpack.c.l.b16 %v99
  %v102 = vunpack.c.h.b16 %v99
  %v103 = vpack.c.b16 %v101, %v101
  %v104 = vpack.c.b16 %v102, %v102
  %vm107 = vcmask 257024
  %108 = vst.msk [vmem:[%s4] sm:$0xf] %vm107, %v103
  %109 = vst.msk [vmem:[%s4 + $0x4] sm:$0xf] %vm107, %v104
  // Predicated region
  $region18: #{_forward.16} parent=0 // pred_check
    _
  $region19: #{_forward.16} parent=0 // pred_check_branch
    %111 = sbr.rel (0) target = $region21
  $region20: #{_forward.16} parent=0 // pred_region
    _
  $region21: #{_forward.16} parent=0 // pred_fallthru
    _
  // Predicated region
  $region22: #{_forward.16} parent=0 // pred_check
    _
  $region23: #{_forward.16} parent=0 // pred_check_branch
    %113 = sbr.rel (0) target = $region25
  $region24: #{_forward.16} parent=0 // pred_region
    _
  $region25: #{_forward.16} parent=0 // pred_fallthru
    _

// kernel: _forward.13
$region0: #{_forward.13}
  #allocation0 [shape = 'u32[]', space=smem, size = 0x4, offset = 0x4, fixed_abs, tag = 'smem constant byte address 0x4 - core index']
  #allocation1 [shape = 'u32[144,128]{1,0:T(1,128)}', space=vmem, size = 0x12000, scoped, tag = 'internal scratch']
  %s0 = inlined_call_operand.vmem [shape: bf16[16,32], index: 0, kind: input, shape index: {}]
  %s1 = inlined_call_operand.vmem [shape: bf16[32,96], index: 1, kind: input, shape index: {}]
  %s2 = inlined_call_operand.vmem [shape: f32[1,96], index: 2, kind: input, shape index: {}]
  %s3 = inlined_call_operand.vmem [shape: f32[1,32], index: 3, kind: input, shape index: {}]
  %s4 = inlined_call_operand.vmem [shape: f32[1,32], index: 4, kind: input, shape index: {}]
  %s5 = inlined_call_operand.vmem [shape: bf16[16,96], index: 5, kind: output, shape index: {}]
  %s6 = sld [smem:[#allocation0]]
  $region30: #{_forward.13} parent=0
    _
  %s8 = ssub.s32 1, %s6
  %s9 = scalar_select 0, %s8, %s6
  // Predicated region
  $region2: #{_forward.13} parent=0 // pred_check
    _
  $region3: #{_forward.13} parent=0 // pred_check_branch
    %11 = sbr.rel (0) target = $region5
  $region4: #{_forward.13} parent=0 // pred_region
    _
  $region5: #{_forward.13} parent=0 // pred_fallthru
    _
  // Predicated region
  $region6: #{_forward.13} parent=0 // pred_check
    _
  $region7: #{_forward.13} parent=0 // pred_check_branch
    %13 = sbr.rel (0) target = $region9
  $region8: #{_forward.13} parent=0 // pred_region
    _
  $region9: #{_forward.13} parent=0 // pred_fallthru
    _
  // Predicated region
  $region10: #{_forward.13} parent=0 // pred_check
    _
  $region11: #{_forward.13} parent=0 // pred_check_branch
    %15 = sbr.rel (0) target = $region13
  $region12: #{_forward.13} parent=0 // pred_region
    _
  $region13: #{_forward.13} parent=0 // pred_fallthru
    _
  // Predicated region
  $region14: #{_forward.13} parent=0 // pred_check
    _
  $region15: #{_forward.13} parent=0 // pred_check_branch
    %17 = sbr.rel (0) target = $region17
  $region16: #{_forward.13} parent=0 // pred_region
    _
  $region17: #{_forward.13} parent=0 // pred_fallthru
    _
  // Predicated region
  $region18: #{_forward.13} parent=0 // pred_check
    _
  $region19: #{_forward.13} parent=0 // pred_check_branch
    %19 = sbr.rel (0) target = $region21
  $region20: #{_forward.13} parent=0 // pred_region
    _
  $region21: #{_forward.13} parent=0 // pred_fallthru
    _
  %v21 = vld [vmem:[%s0] sm:$0xf]
  %v22 = vld [vmem:[%s0 + $0x4] sm:$0xf]
  %v23 = vld [vmem:[%s3] sm:$0x1]
  %v24 = vld [vmem:[%s4] sm:$0x1]
  %v25 = vunpack.c.l.bf16 %v21
  %v26 = vunpack.c.l.bf16 %v22
  %vm27 = vcmask 261120
  %v28 = vsel %vm27, %v25, 0.0
  %29 = vadd.xlane.f32.xlu0 %v28
  %v30 = vpop.xlane.xlu0 %29
  %v31 = vsel %vm27, %v26, 0.0
  %32 = vadd.xlane.f32.xlu0 %v31
  %v33 = vpop.xlane.xlu0 %32
  %v34 = vrcp.pop 32.0
  %v35 = vmul.f32 %v30, %v34
  %v36 = vmul.f32 %v33, %v34
  %v37 = vsub.f32 %v25, %v35
  %v38 = vsub.f32 %v26, %v36
  %v39 = vmul.f32 %v37, %v37
  %v40 = vmul.f32 %v38, %v38
  %v41 = vsel %vm27, %v39, 0.0
  %42 = vadd.xlane.f32.xlu0 %v41
  %v43 = vpop.xlane.xlu0 %42
  %v44 = vsel %vm27, %v40, 0.0
  %45 = vadd.xlane.f32.xlu0 %v44
  %v46 = vpop.xlane.xlu0 %45
  %v47 = vmul.f32 %v43, %v34
  %v48 = vmul.f32 %v46, %v34
  %v49 = vadd.f32 %v47, 1e-05
  %v50 = vadd.f32 %v48, 1e-05
  %v51 = vrsqrt.pop %v49
  %v52 = vrsqrt.pop %v50
  %v53 = vmul.f32 %v37, %v51
  %v54 = vmul.f32 %v38, %v52
  %v56 = vlaneseq
  %v57 = vshrl.u32 %v56, 7
  %v58 = vsub.s32 0, %v57
  %v59 = vrot.slane %v23, %v58
  %v61 = vmul.f32 %v53, %v59
  %v62 = vmul.f32 %v54, %v59
  %v64 = vlaneseq
  %v65 = vshrl.u32 %v64, 7
  %v66 = vsub.s32 0, %v65
  %v67 = vrot.slane %v24, %v66
  %v69 = vadd.f32 %v61, %v67
  %v70 = vadd.f32 %v62, %v67
  %v71 = vpack.c.bf16 %v70, %v69
  %v72 = vld [vmem:[%s1] sm:$0xf]
  %v73 = vld [vmem:[%s1 + $0x4] sm:$0xf]
  %v74 = vld [vmem:[%s1 + $0x8] sm:$0xf]
  %v75 = vld [vmem:[%s1 + $0xc] sm:$0xf]
  %v76 = vld [vmem:[%s2] sm:$0x1]
  %v78 = vlaneseq
  %v79 = vshrl.u32 %v78, 7
  %v80 = vsub.s32 0, %v79
  %v81 = vrot.slane %v76, %v80
  %v87 = vunpack.c.l.b16 %v72
  %v88 = vunpack.c.l.b16 %v73
  %v89 = vunpack.c.l.b16 %v74
  %v90 = vunpack.c.l.b16 %v75
  %v91 = vpack.c.b16 %v88, %v87
  %v92 = vpack.c.b16 %v90, %v89
  %v96 = vsel %vm27, %v71, 0
  %98 = vmatprep.subr.bf16.mxu0 0
  %99 = vmatpush1.bf16.msra.mxu0 %v91
  %100 = vmatprep.subr.bf16.mxu0 0
  %101 = vmatpush1.bf16.msra.mxu0 %v92
  %102 = vmatprep.subr.bf16.mxu0 0
  %103 = vmatpush1.bf16.msra.mxu0 0
  %104 = vmatprep.subr.bf16.mxu0 0
  %105 = vmatpush1.bf16.msra.mxu0 0
  %106 = vmatprep.subr.bf16.mxu0 0
  %107 = vmatpush1.bf16.msra.mxu0 0
  %108 = vmatprep.subr.bf16.mxu0 0
  %109 = vmatpush1.bf16.msra.mxu0 0
  %110 = vmatprep.subr.bf16.mxu0 0
  %111 = vmatpush1.bf16.msra.mxu0 0
  %112 = vmatprep.subr.bf16.mxu0 0
  %113 = vmatpush1.bf16.msra.mxu0 0
  %114 = vmatprep.subr.bf16.mxu0 0
  %115 = vmatpush1.bf16.msra.mxu0 0
  %116 = vmatprep.subr.bf16.mxu0 0
  %117 = vmatpush1.bf16.msra.mxu0 0
  %118 = vmatprep.subr.bf16.mxu0 0
  %119 = vmatpush1.bf16.msra.mxu0 0
  %120 = vmatprep.subr.bf16.mxu0 0
  %121 = vmatpush1.bf16.msra.mxu0 0
  %122 = vmatprep.subr.bf16.mxu0 0
  %123 = vmatpush1.bf16.msra.mxu0 0
  %124 = vmatprep.subr.bf16.mxu0 0
  %125 = vmatpush1.bf16.msra.mxu0 0
  %126 = vmatprep.subr.bf16.mxu0 0
  %127 = vmatpush1.bf16.msra.mxu0 0
  %128 = vmatprep.subr.bf16.mxu0 0
  %129 = vmatpush1.bf16.msra.mxu0 0
  %130 = vmatprep.mubr.bf16.mxu0 0
  %131 = vmatmul.mubr.bf16.gmra.mrb[0].mxu0 %v96
  %v132 = vpop.f32.mrb[0].mxu0
  %v133 = vadd.f32 %v81, %v132
  %v134 = vpop.f32.mrb[0].mxu0
  %v135 = vpop.f32.mrb[0].mxu0
  %v136 = vadd.f32 %v81, %v135
  %v137 = vpop.f32.mrb[0].mxu0
  %138 = vdwg.mxu0
  %v139 = vpack.c.bf16 %v136, %v133
  %v141 = vunpack.c.l.b16 %v139
  %v142 = vunpack.c.h.b16 %v139
  %v143 = vpack.c.b16 %v141, %v141
  %v144 = vpack.c.b16 %v142, %v142
  %vm147 = vcmask 781312
  %148 = vst.msk [vmem:[%s5] sm:$0xf] %vm147, %v143
  %149 = vst.msk [vmem:[%s5 + $0x4] sm:$0xf] %vm147, %v144
  // Predicated region
  $region22: #{_forward.13} parent=0 // pred_check
    _
  $region23: #{_forward.13} parent=0 // pred_check_branch
    %151 = sbr.rel (0) target = $region25
  $region24: #{_forward.13} parent=0 // pred_region
    _
  $region25: #{_forward.13} parent=0 // pred_fallthru
    _
  // Predicated region
  $region26: #{_forward.13} parent=0 // pred_check
    _
  $region27: #{_forward.13} parent=0 // pred_check_branch
    %153 = sbr.rel (0) target = $region29
  $region28: #{_forward.13} parent=0 // pred_region
    _
  $region29: #{_forward.13} parent=0 // pred_fallthru
    _

// kernel: _forward.14
$region0: #{_forward.14}
  #allocation0 [shape = 'u32[]', space=smem, size = 0x4, offset = 0x4, fixed_abs, tag = 'smem constant byte address 0x4 - core index']
  #allocation1 [shape = 'u32[144,128]{1,0:T(1,128)}', space=vmem, size = 0x12000, scoped, tag = 'internal scratch']
  %s0 = inlined_call_operand.vmem [shape: bf16[16,96], index: 0, kind: input, shape index: {}]
  %s1 = inlined_call_operand.vmem [shape: f32[16,8], index: 1, kind: input, shape index: {}]
  %s2 = inlined_call_operand.vmem [shape: f32[16,8], index: 2, kind: input, shape index: {}]
  %s3 = inlined_call_operand.vmem [shape: f32[1,8], index: 3, kind: input, shape index: {}]
  %s4 = inlined_call_operand.vmem [shape: f32[1,8], index: 4, kind: input, shape index: {}]
  %s5 = inlined_call_operand.vmem [shape: f32[1,8], index: 5, kind: input, shape index: {}]
  %s6 = inlined_call_operand.vmem [shape: f32[1,8], index: 6, kind: input, shape index: {}]
  %s7 = inlined_call_operand.vmem [shape: bf16[16,32], index: 7, kind: output, shape index: {0}]
  %s8 = inlined_call_operand.vmem [shape: bf16[16,32], index: 8, kind: output, shape index: {1}]
  %s9 = inlined_call_operand.vmem [shape: bf16[16,32], index: 9, kind: output, shape index: {2}]
  %10 = xla_tuple %s7, %s8, %s9
  %s11 = sld [smem:[#allocation0]]
  $region54: #{_forward.14} parent=0
    _
  %s13 = ssub.s32 1, %s11
  %s14 = scalar_select 0, %s13, %s11
  // Predicated region
  $region2: #{_forward.14} parent=0 // pred_check
    _
  $region3: #{_forward.14} parent=0 // pred_check_branch
    %16 = sbr.rel (0) target = $region5
  $region4: #{_forward.14} parent=0 // pred_region
    _
  $region5: #{_forward.14} parent=0 // pred_fallthru
    _
  // Predicated region
  $region6: #{_forward.14} parent=0 // pred_check
    _
  $region7: #{_forward.14} parent=0 // pred_check_branch
    %18 = sbr.rel (0) target = $region9
  $region8: #{_forward.14} parent=0 // pred_region
    _
  $region9: #{_forward.14} parent=0 // pred_fallthru
    _
  // Predicated region
  $region10: #{_forward.14} parent=0 // pred_check
    _
  $region11: #{_forward.14} parent=0 // pred_check_branch
    %20 = sbr.rel (0) target = $region13
  $region12: #{_forward.14} parent=0 // pred_region
    _
  $region13: #{_forward.14} parent=0 // pred_fallthru
    _
  // Predicated region
  $region14: #{_forward.14} parent=0 // pred_check
    _
  $region15: #{_forward.14} parent=0 // pred_check_branch
    %22 = sbr.rel (0) target = $region17
  $region16: #{_forward.14} parent=0 // pred_region
    _
  $region17: #{_forward.14} parent=0 // pred_fallthru
    _
  // Predicated region
  $region18: #{_forward.14} parent=0 // pred_check
    _
  $region19: #{_forward.14} parent=0 // pred_check_branch
    %24 = sbr.rel (0) target = $region21
  $region20: #{_forward.14} parent=0 // pred_region
    _
  $region21: #{_forward.14} parent=0 // pred_fallthru
    _
  // Predicated region
  $region22: #{_forward.14} parent=0 // pred_check
    _
  $region23: #{_forward.14} parent=0 // pred_check_branch
    %26 = sbr.rel (0) target = $region25
  $region24: #{_forward.14} parent=0 // pred_region
    _
  $region25: #{_forward.14} parent=0 // pred_fallthru
    _
  // Predicated region
  $region26: #{_forward.14} parent=0 // pred_check
    _
  $region27: #{_forward.14} parent=0 // pred_check_branch
    %28 = sbr.rel (0) target = $region29
  $region28: #{_forward.14} parent=0 // pred_region
    _
  $region29: #{_forward.14} parent=0 // pred_fallthru
    _
  %v29 = vld [vmem:[%s1] sm:$0xff]
  %v30 = vld [vmem:[%s1 + $0x8] sm:$0xff]
  %v31 = vld [vmem:[%s2] sm:$0xff]
  %v32 = vld [vmem:[%s2 + $0x8] sm:$0xff]
  %v33 = vld [vmem:[%s3] sm:$0x1]
  %v34 = vld [vmem:[%s4] sm:$0x1]
  %v35 = vld [vmem:[%s5] sm:$0x1]
  %v36 = vld [vmem:[%s6] sm:$0x1]
  %v37 = vld [vmem:[%s0] sm:$0xf]
  %v38 = vld [vmem:[%s0 + $0x4] sm:$0xf]
  %41 = vrot.lane.b32.xlu0 %v37, 64
  %v42 = vpop.permute.xlu0 %41
  %43 = vrot.lane.b32.xlu0 %v38, 64
  %v44 = vpop.permute.xlu0 %43
  %vm47 = vcmask 257024
  %48 = vst.msk [vmem:[%s9] sm:$0xf] %vm47, %v42
  %49 = vst.msk [vmem:[%s9 + $0x4] sm:$0xf] %vm47, %v44
  %v50 = vld [vmem:[%s0] sm:$0xf]
  %v51 = vld [vmem:[%s0 + $0x4] sm:$0xf]
  %v52 = vunpack.c.l.bf16 %v50
  %v53 = vunpack.c.l.bf16 %v51
  %vm54 = vcmask 64512
  %v55 = vsel %vm54, %v52, 0.0
  %56 = vadd.xlane.f32.xlu0 %v55
  %v57 = vpop.xlane.xlu0 %56
  %v58 = vsel %vm54, %v53, 0.0
  %59 = vadd.xlane.f32.xlu0 %v58
  %v60 = vpop.xlane.xlu0 %59
  %v61 = vrcp.pop 8.0
  %v62 = vmul.f32 %v57, %v61
  %v63 = vmul.f32 %v60, %v61
  %v64 = vsub.f32 %v52, %v62
  %v65 = vsub.f32 %v53, %v63
  %v66 = vmul.f32 %v64, %v64
  %v67 = vmul.f32 %v65, %v65
  %v68 = vsel %vm54, %v66, 0.0
  %69 = vadd.xlane.f32.xlu0 %v68
  %v70 = vpop.xlane.xlu0 %69
  %v71 = vsel %vm54, %v67, 0.0
  %72 = vadd.xlane.f32.xlu0 %v71
  %v73 = vpop.xlane.xlu0 %72
  %v74 = vmul.f32 %v70, %v61
  %v75 = vmul.f32 %v73, %v61
  %v76 = vadd.f32 %v74, 1e-05
  %v77 = vadd.f32 %v75, 1e-05
  %v78 = vrsqrt.pop %v76
  %v79 = vrsqrt.pop %v77
  %v80 = vmul.f32 %v64, %v78
  %v81 = vmul.f32 %v65, %v79
  %v83 = vlaneseq
  %v84 = vshrl.u32 %v83, 7
  %v85 = vsub.s32 0, %v84
  %v86 = vrot.slane %v33, %v85
  %v88 = vmul.f32 %v80, %v86
  %v89 = vmul.f32 %v81, %v86
  %v91 = vlaneseq
  %v92 = vshrl.u32 %v91, 7
  %v93 = vsub.s32 0, %v92
  %v94 = vrot.slane %v34, %v93
  %v96 = vadd.f32 %v88, %v94
  %v97 = vadd.f32 %v89, %v94
  %v98 = vsub.f32 0.0, %v96
  %v99 = vsub.f32 0.0, %v97
  %102 = vrot.lane.b32.xlu0 %v98, 126
  %v103 = vpop.permute.xlu0 %102
  %104 = vrot.lane.b32.xlu0 %v99, 126
  %v105 = vpop.permute.xlu0 %104
  %110 = vrot.lane.b32.xlu0 %v96, 2
  %v111 = vpop.permute.xlu0 %110
  %112 = vrot.lane.b32.xlu0 %v97, 2
  %v113 = vpop.permute.xlu0 %112
  %vm116 = vcmask 15360
  %v117 = vsel %vm116, %v103, %v111
  %v118 = vsel %vm116, %v105, %v113
  %vm119 = vcmask 31744
  %v120 = vsel %vm119, %v117, %v96
  %v121 = vsel %vm119, %v118, %v97
  %v122 = vmul.f32 %v96, %v29
  %v123 = vmul.f32 %v97, %v30
  %v124 = vmul.f32 %v120, %v31
  %v125 = vmul.f32 %v121, %v32
  %v126 = vadd.f32 %v122, %v124
  %v127 = vadd.f32 %v123, %v125
  %v128 = vmul.f32 %v126, 0.35355338
  %v129 = vmul.f32 %v127, 0.35355338
  %v130 = vpack.c.bf16 %v129, %v128
  %v132 = vunpack.c.l.b16 %v130
  %v133 = vunpack.c.h.b16 %v130
  %v134 = vpack.c.b16 %v132, %v132
  %v135 = vpack.c.b16 %v133, %v133
  %vm138 = vcmask 60416
  %139 = vst.msk [vmem:[%s7] sm:$0xf] %vm138, %v134
  %140 = vst.msk [vmem:[%s7 + $0x4] sm:$0xf] %vm138, %v135
  %v141 = vld [vmem:[%s0] sm:$0xf]
  %v142 = vld [vmem:[%s0 + $0x4] sm:$0xf]
  %v143 = vunpack.c.l.bf16 %v141
  %v144 = vunpack.c.l.bf16 %v142
  %147 = vrot.lane.b32.xlu0 %v143, 96
  %v148 = vpop.permute.xlu0 %147
  %149 = vrot.lane.b32.xlu0 %v144, 96
  %v150 = vpop.permute.xlu0 %149
  %v153 = vsel %vm54, %v148, 0.0
  %154 = vadd.xlane.f32.xlu0 %v153
  %v155 = vpop.xlane.xlu0 %154
  %v156 = vsel %vm54, %v150, 0.0
  %157 = vadd.xlane.f32.xlu0 %v156
  %v158 = vpop.xlane.xlu0 %157
  %v159 = vmul.f32 %v155, %v61
  %v160 = vmul.f32 %v158, %v61
  %v161 = vsub.f32 %v143, %v159
  %v162 = vsub.f32 %v144, %v160
  %v163 = vmul.f32 %v161, %v161
  %v164 = vmul.f32 %v162, %v162
  %167 = vrot.lane.b32.xlu0 %v163, 96
  %v168 = vpop.permute.xlu0 %167
  %169 = vrot.lane.b32.xlu0 %v164, 96
  %v170 = vpop.permute.xlu0 %169
  %v173 = vsel %vm54, %v168, 0.0
  %174 = vadd.xlane.f32.xlu0 %v173
  %v175 = vpop.xlane.xlu0 %174
  %v176 = vsel %vm54, %v170, 0.0
  %177 = vadd.xlane.f32.xlu0 %v176
  %v178 = vpop.xlane.xlu0 %177
  %v179 = vmul.f32 %v175, %v61
  %v180 = vmul.f32 %v178, %v61
  %v181 = vadd.f32 %v179, 1e-05
  %v182 = vadd.f32 %v180, 1e-05
  %v183 = vrsqrt.pop %v181
  %v184 = vrsqrt.pop %v182
  %v185 = vmul.f32 %v161, %v183
  %v186 = vmul.f32 %v162, %v184
  %v188 = vlaneseq
  %v189 = vshrl.u32 %v188, 7
  %v190 = vsub.s32 0, %v189
  %v191 = vrot.slane %v35, %v190
  %192 = vrot.lane.b32.xlu0 %v191, 32
  %v193 = vpop.permute.xlu0 %192
  %v195 = vmul.f32 %v185, %v193
  %v196 = vmul.f32 %v186, %v193
  %v198 = vlaneseq
  %v199 = vshrl.u32 %v198, 7
  %v200 = vsub.s32 0, %v199
  %v201 = vrot.slane %v36, %v200
  %202 = vrot.lane.b32.xlu0 %v201, 32
  %v203 = vpop.permute.xlu0 %202
  %v205 = vadd.f32 %v195, %v203
  %v206 = vadd.f32 %v196, %v203
  %v207 = vsub.f32 0.0, %v205
  %v208 = vsub.f32 0.0, %v206
  %211 = vrot.lane.b32.xlu0 %v207, 94
  %v212 = vpop.permute.xlu0 %211
  %213 = vrot.lane.b32.xlu0 %v208, 94
  %v214 = vpop.permute.xlu0 %213
  %219 = vrot.lane.b32.xlu0 %v205, 98
  %v220 = vpop.permute.xlu0 %219
  %221 = vrot.lane.b32.xlu0 %v206, 98
  %v222 = vpop.permute.xlu0 %221
  %225 = vrot.lane.b32.xlu0 %v205, 96
  %v226 = vpop.permute.xlu0 %225
  %227 = vrot.lane.b32.xlu0 %v206, 96
  %v228 = vpop.permute.xlu0 %227
  %v231 = vsel %vm116, %v212, %v220
  %v232 = vsel %vm116, %v214, %v222
  %v233 = vsel %vm119, %v231, %v226
  %v234 = vsel %vm119, %v232, %v228
  %237 = vrot.lane.b32.xlu0 %v29, 32
  %v238 = vpop.permute.xlu0 %237
  %239 = vrot.lane.b32.xlu0 %v30, 32
  %v240 = vpop.permute.xlu0 %239
  %v243 = vmul.f32 %v205, %v238
  %v244 = vmul.f32 %v206, %v240
  %v245 = vmul.f32 %v233, %v31
  %v246 = vmul.f32 %v234, %v32
  %249 = vrot.lane.b32.xlu0 %v245, 32
  %v250 = vpop.permute.xlu0 %249
  %251 = vrot.lane.b32.xlu0 %v246, 32
  %v252 = vpop.permute.xlu0 %251
  %v255 = vadd.f32 %v243, %v250
  %v256 = vadd.f32 %v244, %v252
  %v257 = vpack.c.bf16 %v256, %v255
  %v259 = vunpack.c.l.b16 %v257
  %v260 = vunpack.c.h.b16 %v257
  %v261 = vpack.c.b16 %v259, %v259
  %v262 = vpack.c.b16 %v260, %v260
  %263 = vrot.lane.b32.xlu0 %v261, 96
  %v264 = vpop.permute.xlu0 %263
  %265 = vrot.lane.b32.xlu0 %v262, 96
  %v266 = vpop.permute.xlu0 %265
  %269 = vst.msk [vmem:[%s8] sm:$0xf] %vm138, %v264
  %270 = vst.msk [vmem:[%s8 + $0x4] sm:$0xf] %vm138, %v266
  %v271 = vld [vmem:[%s0] sm:$0xf]
  %v272 = vld [vmem:[%s0 + $0x4] sm:$0xf]
  %v273 = vunpack.c.l.bf16 %v271
  %v274 = vunpack.c.l.bf16 %v272
  %277 = vrot.lane.b32.xlu0 %v273, 120
  %v278 = vpop.permute.xlu0 %277
  %279 = vrot.lane.b32.xlu0 %v274, 120
  %v280 = vpop.permute.xlu0 %279
  %v283 = vsel %vm54, %v278, 0.0
  %284 = vadd.xlane.f32.xlu0 %v283
  %v285 = vpop.xlane.xlu0 %284
  %v286 = vsel %vm54, %v280, 0.0
  %287 = vadd.xlane.f32.xlu0 %v286
  %v288 = vpop.xlane.xlu0 %287
  %v289 = vmul.f32 %v285, %v61
  %v290 = vmul.f32 %v288, %v61
  %v291 = vsub.f32 %v273, %v289
  %v292 = vsub.f32 %v274, %v290
  %v293 = vmul.f32 %v291, %v291
  %v294 = vmul.f32 %v292, %v292
  %297 = vrot.lane.b32.xlu0 %v293, 120
  %v298 = vpop.permute.xlu0 %297
  %299 = vrot.lane.b32.xlu0 %v294, 120
  %v300 = vpop.permute.xlu0 %299
  %v303 = vsel %vm54, %v298, 0.0
  %304 = vadd.xlane.f32.xlu0 %v303
  %v305 = vpop.xlane.xlu0 %304
  %v306 = vsel %vm54, %v300, 0.0
  %307 = vadd.xlane.f32.xlu0 %v306
  %v308 = vpop.xlane.xlu0 %307
  %v309 = vmul.f32 %v305, %v61
  %v310 = vmul.f32 %v308, %v61
  %v311 = vadd.f32 %v309, 1e-05
  %v312 = vadd.f32 %v310, 1e-05
  %v313 = vrsqrt.pop %v311
  %v314 = vrsqrt.pop %v312
  %v315 = vmul.f32 %v291, %v313
  %v316 = vmul.f32 %v292, %v314
  %317 = vrot.lane.b32.xlu0 %v86, 8
  %v318 = vpop.permute.xlu0 %317
  %v320 = vmul.f32 %v315, %v318
  %v321 = vmul.f32 %v316, %v318
  %322 = vrot.lane.b32.xlu0 %v94, 8
  %v323 = vpop.permute.xlu0 %322
  %v325 = vadd.f32 %v320, %v323
  %v326 = vadd.f32 %v321, %v323
  %v327 = vsub.f32 0.0, %v325
  %v328 = vsub.f32 0.0, %v326
  %331 = vrot.lane.b32.xlu0 %v327, 118
  %v332 = vpop.permute.xlu0 %331
  %333 = vrot.lane.b32.xlu0 %v328, 118
  %v334 = vpop.permute.xlu0 %333
  %339 = vrot.lane.b32.xlu0 %v325, 122
  %v340 = vpop.permute.xlu0 %339
  %341 = vrot.lane.b32.xlu0 %v326, 122
  %v342 = vpop.permute.xlu0 %341
  %345 = vrot.lane.b32.xlu0 %v325, 120
  %v346 = vpop.permute.xlu0 %345
  %347 = vrot.lane.b32.xlu0 %v326, 120
  %v348 = vpop.permute.xlu0 %347
  %v351 = vsel %vm116, %v332, %v340
  %v352 = vsel %vm116, %v334, %v342
  %v353 = vsel %vm119, %v351, %v346
  %v354 = vsel %vm119, %v352, %v348
  %355 = vrot.lane.b32.xlu0 %v29, 8
  %v356 = vpop.permute.xlu0 %355
  %357 = vrot.lane.b32.xlu0 %v30, 8
  %v358 = vpop.permute.xlu0 %357
  %v361 = vmul.f32 %v325, %v356
  %v362 = vmul.f32 %v326, %v358
  %v363 = vmul.f32 %v353, %v31
  %v364 = vmul.f32 %v354, %v32
  %367 = vrot.lane.b32.xlu0 %v363, 8
  %v368 = vpop.permute.xlu0 %367
  %369 = vrot.lane.b32.xlu0 %v364, 8
  %v370 = vpop.permute.xlu0 %369
  %v373 = vadd.f32 %v361, %v368
  %v374 = vadd.f32 %v362, %v370
  %v375 = vmul.f32 %v373, 0.35355338
  %v376 = vmul.f32 %v374, 0.35355338
  %v377 = vpack.c.bf16 %v376, %v375
  %v379 = vunpack.c.l.b16 %v377
  %v380 = vunpack.c.h.b16 %v377
  %v381 = vpack.c.b16 %v379, %v379
  %v382 = vpack.c.b16 %v380, %v380
  %vm385 = vcmask 126016
  %386 = vst.msk [vmem:[%s7] sm:$0xf] %vm385, %v381
  %387 = vst.msk [vmem:[%s7 + $0x4] sm:$0xf] %vm385, %v382
  %v388 = vld [vmem:[%s0] sm:$0xf]
  %v389 = vld [vmem:[%s0 + $0x4] sm:$0xf]
  %v390 = vunpack.c.l.bf16 %v388
  %v391 = vunpack.c.l.bf16 %v389
  %394 = vrot.lane.b32.xlu0 %v390, 88
  %v395 = vpop.permute.xlu0 %394
  %396 = vrot.lane.b32.xlu0 %v391, 88
  %v397 = vpop.permute.xlu0 %396
  %v400 = vsel %vm54, %v395, 0.0
  %401 = vadd.xlane.f32.xlu0 %v400
  %v402 = vpop.xlane.xlu0 %401
  %v403 = vsel %vm54, %v397, 0.0
  %404 = vadd.xlane.f32.xlu0 %v403
  %v405 = vpop.xlane.xlu0 %404
  %v406 = vmul.f32 %v402, %v61
  %v407 = vmul.f32 %v405, %v61
  %v408 = vsub.f32 %v390, %v406
  %v409 = vsub.f32 %v391, %v407
  %v410 = vmul.f32 %v408, %v408
  %v411 = vmul.f32 %v409, %v409
  %414 = vrot.lane.b32.xlu0 %v410, 88
  %v415 = vpop.permute.xlu0 %414
  %416 = vrot.lane.b32.xlu0 %v411, 88
  %v417 = vpop.permute.xlu0 %416
  %v420 = vsel %vm54, %v415, 0.0
  %421 = vadd.xlane.f32.xlu0 %v420
  %v422 = vpop.xlane.xlu0 %421
  %v423 = vsel %vm54, %v417, 0.0
  %424 = vadd.xlane.f32.xlu0 %v423
  %v425 = vpop.xlane.xlu0 %424
  %v426 = vmul.f32 %v422, %v61
  %v427 = vmul.f32 %v425, %v61
  %v428 = vadd.f32 %v426, 1e-05
  %v429 = vadd.f32 %v427, 1e-05
  %v430 = vrsqrt.pop %v428
  %v431 = vrsqrt.pop %v429
  %v432 = vmul.f32 %v408, %v430
  %v433 = vmul.f32 %v409, %v431
  %434 = vrot.lane.b32.xlu0 %v191, 40
  %v435 = vpop.permute.xlu0 %434
  %v437 = vmul.f32 %v432, %v435
  %v438 = vmul.f32 %v433, %v435
  %439 = vrot.lane.b32.xlu0 %v201, 40
  %v440 = vpop.permute.xlu0 %439
  %v442 = vadd.f32 %v437, %v440
  %v443 = vadd.f32 %v438, %v440
  %v444 = vsub.f32 0.0, %v442
  %v445 = vsub.f32 0.0, %v443
  %448 = vrot.lane.b32.xlu0 %v444, 86
  %v449 = vpop.permute.xlu0 %448
  %450 = vrot.lane.b32.xlu0 %v445, 86
  %v451 = vpop.permute.xlu0 %450
  %456 = vrot.lane.b32.xlu0 %v442, 90
  %v457 = vpop.permute.xlu0 %456
  %458 = vrot.lane.b32.xlu0 %v443, 90
  %v459 = vpop.permute.xlu0 %458
  %462 = vrot.lane.b32.xlu0 %v442, 88
  %v463 = vpop.permute.xlu0 %462
  %464 = vrot.lane.b32.xlu0 %v443, 88
  %v465 = vpop.permute.xlu0 %464
  %v468 = vsel %vm116, %v449, %v457
  %v469 = vsel %vm116, %v451, %v459
  %v470 = vsel %vm119, %v468, %v463
  %v471 = vsel %vm119, %v469, %v465
  %472 = vrot.lane.b32.xlu0 %v29, 40
  %v473 = vpop.permute.xlu0 %472
  %474 = vrot.lane.b32.xlu0 %v30, 40
  %v475 = vpop.permute.xlu0 %474
  %v478 = vmul.f32 %v442, %v473
  %v479 = vmul.f32 %v443, %v475
  %v480 = vmul.f32 %v470, %v31
  %v481 = vmul.f32 %v471, %v32
  %484 = vrot.lane.b32.xlu0 %v480, 40
  %v485 = vpop.permute.xlu0 %484
  %486 = vrot.lane.b32.xlu0 %v481, 40
  %v487 = vpop.permute.xlu0 %486
  %v490 = vadd.f32 %v478, %v485
  %v491 = vadd.f32 %v479, %v487
  %v492 = vpack.c.bf16 %v491, %v490
  %v494 = vunpack.c.l.b16 %v492
  %v495 = vunpack.c.h.b16 %v492
  %v496 = vpack.c.b16 %v494, %v494
  %v497 = vpack.c.b16 %v495, %v495
  %498 = vrot.lane.b32.xlu0 %v496, 96
  %v499 = vpop.permute.xlu0 %498
  %500 = vrot.lane.b32.xlu0 %v497, 96
  %v501 = vpop.permute.xlu0 %500
  %504 = vst.msk [vmem:[%s8] sm:$0xf] %vm385, %v499
  %505 = vst.msk [vmem:[%s8 + $0x4] sm:$0xf] %vm385, %v501
  %v506 = vld [vmem:[%s0] sm:$0xf]
  %v507 = vld [vmem:[%s0 + $0x4] sm:$0xf]
  %v508 = vunpack.c.l.bf16 %v506
  %v509 = vunpack.c.l.bf16 %v507
  %512 = vrot.lane.b32.xlu0 %v508, 112
  %v513 = vpop.permute.xlu0 %512
  %514 = vrot.lane.b32.xlu0 %v509, 112
  %v515 = vpop.permute.xlu0 %514
  %v518 = vsel %vm54, %v513, 0.0
  %519 = vadd.xlane.f32.xlu0 %v518
  %v520 = vpop.xlane.xlu0 %519
  %v521 = vsel %vm54, %v515, 0.0
  %522 = vadd.xlane.f32.xlu0 %v521
  %v523 = vpop.xlane.xlu0 %522
  %v524 = vmul.f32 %v520, %v61
  %v525 = vmul.f32 %v523, %v61
  %v526 = vsub.f32 %v508, %v524
  %v527 = vsub.f32 %v509, %v525
  %v528 = vmul.f32 %v526, %v526
  %v529 = vmul.f32 %v527, %v527
  %532 = vrot.lane.b32.xlu0 %v528, 112
  %v533 = vpop.permute.xlu0 %532
  %534 = vrot.lane.b32.xlu0 %v529, 112
  %v535 = vpop.permute.xlu0 %534
  %v538 = vsel %vm54, %v533, 0.0
  %539 = vadd.xlane.f32.xlu0 %v538
  %v540 = vpop.xlane.xlu0 %539
  %v541 = vsel %vm54, %v535, 0.0
  %542 = vadd.xlane.f32.xlu0 %v541
  %v543 = vpop.xlane.xlu0 %542
  %v544 = vmul.f32 %v540, %v61
  %v545 = vmul.f32 %v543, %v61
  %v546 = vadd.f32 %v544, 1e-05
  %v547 = vadd.f32 %v545, 1e-05
  %v548 = vrsqrt.pop %v546
  %v549 = vrsqrt.pop %v547
  %v550 = vmul.f32 %v526, %v548
  %v551 = vmul.f32 %v527, %v549
  %552 = vrot.lane.b32.xlu0 %v86, 16
  %v553 = vpop.permute.xlu0 %552
  %v555 = vmul.f32 %v550, %v553
  %v556 = vmul.f32 %v551, %v553
  %557 = vrot.lane.b32.xlu0 %v94, 16
  %v558 = vpop.permute.xlu0 %557
  %v560 = vadd.f32 %v555, %v558
  %v561 = vadd.f32 %v556, %v558
  %v562 = vsub.f32 0.0, %v560
  %v563 = vsub.f32 0.0, %v561
  %566 = vrot.lane.b32.xlu0 %v562, 110
  %v567 = vpop.permute.xlu0 %566
  %568 = vrot.lane.b32.xlu0 %v563, 110
  %v569 = vpop.permute.xlu0 %568
  %574 = vrot.lane.b32.xlu0 %v560, 114
  %v575 = vpop.permute.xlu0 %574
  %576 = vrot.lane.b32.xlu0 %v561, 114
  %v577 = vpop.permute.xlu0 %576
  %580 = vrot.lane.b32.xlu0 %v560, 112
  %v581 = vpop.permute.xlu0 %580
  %582 = vrot.lane.b32.xlu0 %v561, 112
  %v583 = vpop.permute.xlu0 %582
  %v586 = vsel %vm116, %v567, %v575
  %v587 = vsel %vm116, %v569, %v577
  %v588 = vsel %vm119, %v586, %v581
  %v589 = vsel %vm119, %v587, %v583
  %590 = vrot.lane.b32.xlu0 %v29, 16
  %v591 = vpop.permute.xlu0 %590
  %592 = vrot.lane.b32.xlu0 %v30, 16
  %v593 = vpop.permute.xlu0 %592
  %v596 = vmul.f32 %v560, %v591
  %v597 = vmul.f32 %v561, %v593
  %v598 = vmul.f32 %v588, %v31
  %v599 = vmul.f32 %v589, %v32
  %602 = vrot.lane.b32.xlu0 %v598, 16
  %v603 = vpop.permute.xlu0 %602
  %604 = vrot.lane.b32.xlu0 %v599, 16
  %v605 = vpop.permute.xlu0 %604
  %v608 = vadd.f32 %v596, %v603
  %v609 = vadd.f32 %v597, %v605
  %v610 = vmul.f32 %v608, 0.35355338
  %v611 = vmul.f32 %v609, 0.35355338
  %v612 = vpack.c.bf16 %v611, %v610
  %v614 = vunpack.c.l.b16 %v612
  %v615 = vunpack.c.h.b16 %v612
  %v616 = vpack.c.b16 %v614, %v614
  %v617 = vpack.c.b16 %v615, %v615
  %vm620 = vcmask 191616
  %621 = vst.msk [vmem:[%s7] sm:$0xf] %vm620, %v616
  %622 = vst.msk [vmem:[%s7 + $0x4] sm:$0xf] %vm620, %v617
  %v623 = vld [vmem:[%s0] sm:$0xf]
  %v624 = vld [vmem:[%s0 + $0x4] sm:$0xf]
  %v625 = vunpack.c.l.bf16 %v623
  %v626 = vunpack.c.l.bf16 %v624
  %629 = vrot.lane.b32.xlu0 %v625, 80
  %v630 = vpop.permute.xlu0 %629
  %631 = vrot.lane.b32.xlu0 %v626, 80
  %v632 = vpop.permute.xlu0 %631
  %v635 = vsel %vm54, %v630, 0.0
  %636 = vadd.xlane.f32.xlu0 %v635
  %v637 = vpop.xlane.xlu0 %636
  %v638 = vsel %vm54, %v632, 0.0
  %639 = vadd.xlane.f32.xlu0 %v638
  %v640 = vpop.xlane.xlu0 %639
  %v641 = vmul.f32 %v637, %v61
  %v642 = vmul.f32 %v640, %v61
  %v643 = vsub.f32 %v625, %v641
  %v644 = vsub.f32 %v626, %v642
  %v645 = vmul.f32 %v643, %v643
  %v646 = vmul.f32 %v644, %v644
  %649 = vrot.lane.b32.xlu0 %v645, 80
  %v650 = vpop.permute.xlu0 %649
  %651 = vrot.lane.b32.xlu0 %v646, 80
  %v652 = vpop.permute.xlu0 %651
  %v655 = vsel %vm54, %v650, 0.0
  %656 = vadd.xlane.f32.xlu0 %v655
  %v657 = vpop.xlane.xlu0 %656
  %v658 = vsel %vm54, %v652, 0.0
  %659 = vadd.xlane.f32.xlu0 %v658
  %v660 = vpop.xlane.xlu0 %659
  %v661 = vmul.f32 %v657, %v61
  %v662 = vmul.f32 %v660, %v61
  %v663 = vadd.f32 %v661, 1e-05
  %v664 = vadd.f32 %v662, 1e-05
  %v665 = vrsqrt.pop %v663
  %v666 = vrsqrt.pop %v664
  %v667 = vmul.f32 %v643, %v665
  %v668 = vmul.f32 %v644, %v666
  %669 = vrot.lane.b32.xlu0 %v191, 48
  %v670 = vpop.permute.xlu0 %669
  %v672 = vmul.f32 %v667, %v670
  %v673 = vmul.f32 %v668, %v670
  %674 = vrot.lane.b32.xlu0 %v201, 48
  %v675 = vpop.permute.xlu0 %674
  %v677 = vadd.f32 %v672, %v675
  %v678 = vadd.f32 %v673, %v675
  %v679 = vsub.f32 0.0, %v677
  %v680 = vsub.f32 0.0, %v678
  %683 = vrot.lane.b32.xlu0 %v679, 78
  %v684 = vpop.permute.xlu0 %683
  %685 = vrot.lane.b32.xlu0 %v680, 78
  %v686 = vpop.permute.xlu0 %685
  %691 = vrot.lane.b32.xlu0 %v677, 82
  %v692 = vpop.permute.xlu0 %691
  %693 = vrot.lane.b32.xlu0 %v678, 82
  %v694 = vpop.permute.xlu0 %693
  %697 = vrot.lane.b32.xlu0 %v677, 80
  %v698 = vpop.permute.xlu0 %697
  %699 = vrot.lane.b32.xlu0 %v678, 80
  %v700 = vpop.permute.xlu0 %699
  %v703 = vsel %vm116, %v684, %v692
  %v704 = vsel %vm116, %v686, %v694
  %v705 = vsel %vm119, %v703, %v698
  %v706 = vsel %vm119, %v704, %v700
  %707 = vrot.lane.b32.xlu0 %v29, 48
  %v708 = vpop.permute.xlu0 %707
  %709 = vrot.lane.b32.xlu0 %v30, 48
  %v710 = vpop.permute.xlu0 %709
  %v713 = vmul.f32 %v677, %v708
  %v714 = vmul.f32 %v678, %v710
  %v715 = vmul.f32 %v705, %v31
  %v716 = vmul.f32 %v706, %v32
  %719 = vrot.lane.b32.xlu0 %v715, 48
  %v720 = vpop.permute.xlu0 %719
  %721 = vrot.lane.b32.xlu0 %v716, 48
  %v722 = vpop.permute.xlu0 %721
  %v725 = vadd.f32 %v713, %v720
  %v726 = vadd.f32 %v714, %v722
  %v727 = vpack.c.bf16 %v726, %v725
  %v729 = vunpack.c.l.b16 %v727
  %v730 = vunpack.c.h.b16 %v727
  %v731 = vpack.c.b16 %v729, %v729
  %v732 = vpack.c.b16 %v730, %v730
  %733 = vrot.lane.b32.xlu0 %v731, 96
  %v734 = vpop.permute.xlu0 %733
  %735 = vrot.lane.b32.xlu0 %v732, 96
  %v736 = vpop.permute.xlu0 %735
  %739 = vst.msk [vmem:[%s8] sm:$0xf] %vm620, %v734
  %740 = vst.msk [vmem:[%s8 + $0x4] sm:$0xf] %vm620, %v736
  %v741 = vld [vmem:[%s0] sm:$0xf]
  %v742 = vld [vmem:[%s0 + $0x4] sm:$0xf]
  %v743 = vunpack.c.l.bf16 %v741
  %v744 = vunpack.c.l.bf16 %v742
  %747 = vrot.lane.b32.xlu0 %v743, 104
  %v748 = vpop.permute.xlu0 %747
  %749 = vrot.lane.b32.xlu0 %v744, 104
  %v750 = vpop.permute.xlu0 %749
  %v753 = vsel %vm54, %v748, 0.0
  %754 = vadd.xlane.f32.xlu0 %v753
  %v755 = vpop.xlane.xlu0 %754
  %v756 = vsel %vm54, %v750, 0.0
  %757 = vadd.xlane.f32.xlu0 %v756
  %v758 = vpop.xlane.xlu0 %757
  %v759 = vmul.f32 %v755, %v61
  %v760 = vmul.f32 %v758, %v61
  %v761 = vsub.f32 %v743, %v759
  %v762 = vsub.f32 %v744, %v760
  %v763 = vmul.f32 %v761, %v761
  %v764 = vmul.f32 %v762, %v762
  %767 = vrot.lane.b32.xlu0 %v763, 104
  %v768 = vpop.permute.xlu0 %767
  %769 = vrot.lane.b32.xlu0 %v764, 104
  %v770 = vpop.permute.xlu0 %769
  %v773 = vsel %vm54, %v768, 0.0
  %774 = vadd.xlane.f32.xlu0 %v773
  %v775 = vpop.xlane.xlu0 %774
  %v776 = vsel %vm54, %v770, 0.0
  %777 = vadd.xlane.f32.xlu0 %v776
  %v778 = vpop.xlane.xlu0 %777
  %v779 = vmul.f32 %v775, %v61
  %v780 = vmul.f32 %v778, %v61
  %v781 = vadd.f32 %v779, 1e-05
  %v782 = vadd.f32 %v780, 1e-05
  %v783 = vrsqrt.pop %v781
  %v784 = vrsqrt.pop %v782
  %v785 = vmul.f32 %v761, %v783
  %v786 = vmul.f32 %v762, %v784
  %787 = vrot.lane.b32.xlu0 %v86, 24
  %v788 = vpop.permute.xlu0 %787
  %v790 = vmul.f32 %v785, %v788
  %v791 = vmul.f32 %v786, %v788
  %792 = vrot.lane.b32.xlu0 %v94, 24
  %v793 = vpop.permute.xlu0 %792
  %v795 = vadd.f32 %v790, %v793
  %v796 = vadd.f32 %v791, %v793
  %v797 = vsub.f32 0.0, %v795
  %v798 = vsub.f32 0.0, %v796
  %801 = vrot.lane.b32.xlu0 %v797, 102
  %v802 = vpop.permute.xlu0 %801
  %803 = vrot.lane.b32.xlu0 %v798, 102
  %v804 = vpop.permute.xlu0 %803
  %809 = vrot.lane.b32.xlu0 %v795, 106
  %v810 = vpop.permute.xlu0 %809
  %811 = vrot.lane.b32.xlu0 %v796, 106
  %v812 = vpop.permute.xlu0 %811
  %815 = vrot.lane.b32.xlu0 %v795, 104
  %v816 = vpop.permute.xlu0 %815
  %817 = vrot.lane.b32.xlu0 %v796, 104
  %v818 = vpop.permute.xlu0 %817
  %v821 = vsel %vm116, %v802, %v810
  %v822 = vsel %vm116, %v804, %v812
  %v823 = vsel %vm119, %v821, %v816
  %v824 = vsel %vm119, %v822, %v818
  %825 = vrot.lane.b32.xlu0 %v29, 24
  %v826 = vpop.permute.xlu0 %825
  %827 = vrot.lane.b32.xlu0 %v30, 24
  %v828 = vpop.permute.xlu0 %827
  %v831 = vmul.f32 %v795, %v826
  %v832 = vmul.f32 %v796, %v828
  %v833 = vmul.f32 %v823, %v31
  %v834 = vmul.f32 %v824, %v32
  %837 = vrot.lane.b32.xlu0 %v833, 24
  %v838 = vpop.permute.xlu0 %837
  %839 = vrot.lane.b32.xlu0 %v834, 24
  %v840 = vpop.permute.xlu0 %839
  %v843 = vadd.f32 %v831, %v838
  %v844 = vadd.f32 %v832, %v840
  %v845 = vmul.f32 %v843, 0.35355338
  %v846 = vmul.f32 %v844, 0.35355338
  %v847 = vpack.c.bf16 %v846, %v845
  %v849 = vunpack.c.l.b16 %v847
  %v850 = vunpack.c.h.b16 %v847
  %v851 = vpack.c.b16 %v849, %v849
  %v852 = vpack.c.b16 %v850, %v850
  %vm855 = vcmask 257216
  %856 = vst.msk [vmem:[%s7] sm:$0xf] %vm855, %v851
  %857 = vst.msk [vmem:[%s7 + $0x4] sm:$0xf] %vm855, %v852
  %v858 = vld [vmem:[%s0] sm:$0xf]
  %v859 = vld [vmem:[%s0 + $0x4] sm:$0xf]
  %v860 = vunpack.c.l.bf16 %v858
  %v861 = vunpack.c.l.bf16 %v859
  %864 = vrot.lane.b32.xlu0 %v860, 72
  %v865 = vpop.permute.xlu0 %864
  %866 = vrot.lane.b32.xlu0 %v861, 72
  %v867 = vpop.permute.xlu0 %866
  %v870 = vsel %vm54, %v865, 0.0
  %871 = vadd.xlane.f32.xlu0 %v870
  %v872 = vpop.xlane.xlu0 %871
  %v873 = vsel %vm54, %v867, 0.0
  %874 = vadd.xlane.f32.xlu0 %v873
  %v875 = vpop.xlane.xlu0 %874
  %v876 = vmul.f32 %v872, %v61
  %v877 = vmul.f32 %v875, %v61
  %v878 = vsub.f32 %v860, %v876
  %v879 = vsub.f32 %v861, %v877
  %v880 = vmul.f32 %v878, %v878
  %v881 = vmul.f32 %v879, %v879
  %884 = vrot.lane.b32.xlu0 %v880, 72
  %v885 = vpop.permute.xlu0 %884
  %886 = vrot.lane.b32.xlu0 %v881, 72
  %v887 = vpop.permute.xlu0 %886
  %v890 = vsel %vm54, %v885, 0.0
  %891 = vadd.xlane.f32.xlu0 %v890
  %v892 = vpop.xlane.xlu0 %891
  %v893 = vsel %vm54, %v887, 0.0
  %894 = vadd.xlane.f32.xlu0 %v893
  %v895 = vpop.xlane.xlu0 %894
  %v896 = vmul.f32 %v892, %v61
  %v897 = vmul.f32 %v895, %v61
  %v898 = vadd.f32 %v896, 1e-05
  %v899 = vadd.f32 %v897, 1e-05
  %v900 = vrsqrt.pop %v898
  %v901 = vrsqrt.pop %v899
  %v902 = vmul.f32 %v878, %v900
  %v903 = vmul.f32 %v879, %v901
  %904 = vrot.lane.b32.xlu0 %v191, 56
  %v905 = vpop.permute.xlu0 %904
  %v907 = vmul.f32 %v902, %v905
  %v908 = vmul.f32 %v903, %v905
  %909 = vrot.lane.b32.xlu0 %v201, 56
  %v910 = vpop.permute.xlu0 %909
  %v912 = vadd.f32 %v907, %v910
  %v913 = vadd.f32 %v908, %v910
  %v914 = vsub.f32 0.0, %v912
  %v915 = vsub.f32 0.0, %v913
  %918 = vrot.lane.b32.xlu0 %v914, 70
  %v919 = vpop.permute.xlu0 %918
  %920 = vrot.lane.b32.xlu0 %v915, 70
  %v921 = vpop.permute.xlu0 %920
  %926 = vrot.lane.b32.xlu0 %v912, 74
  %v927 = vpop.permute.xlu0 %926
  %928 = vrot.lane.b32.xlu0 %v913, 74
  %v929 = vpop.permute.xlu0 %928
  %932 = vrot.lane.b32.xlu0 %v912, 72
  %v933 = vpop.permute.xlu0 %932
  %934 = vrot.lane.b32.xlu0 %v913, 72
  %v935 = vpop.permute.xlu0 %934
  %v938 = vsel %vm116, %v919, %v927
  %v939 = vsel %vm116, %v921, %v929
  %v940 = vsel %vm119, %v938, %v933
  %v941 = vsel %vm119, %v939, %v935
  %942 = vrot.lane.b32.xlu0 %v29, 56
  %v943 = vpop.permute.xlu0 %942
  %944 = vrot.lane.b32.xlu0 %v30, 56
  %v945 = vpop.permute.xlu0 %944
  %v948 = vmul.f32 %v912, %v943
  %v949 = vmul.f32 %v913, %v945
  %v950 = vmul.f32 %v940, %v31
  %v951 = vmul.f32 %v941, %v32
  %954 = vrot.lane.b32.xlu0 %v950, 56
  %v955 = vpop.permute.xlu0 %954
  %956 = vrot.lane.b32.xlu0 %v951, 56
  %v957 = vpop.permute.xlu0 %956
  %v960 = vadd.f32 %v948, %v955
  %v961 = vadd.f32 %v949, %v957
  %v962 = vpack.c.bf16 %v961, %v960
  %v964 = vunpack.c.l.b16 %v962
  %v965 = vunpack.c.h.b16 %v962
  %v966 = vpack.c.b16 %v964, %v964
  %v967 = vpack.c.b16 %v965, %v965
  %968 = vrot.lane.b32.xlu0 %v966, 96
  %v969 = vpop.permute.xlu0 %968
  %970 = vrot.lane.b32.xlu0 %v967, 96
  %v971 = vpop.permute.xlu0 %970
  %974 = vst.msk [vmem:[%s8] sm:$0xf] %vm855, %v969
  %975 = vst.msk [vmem:[%s8 + $0x4] sm:$0xf] %vm855, %v971
  // Predicated region
  $region30: #{_forward.14} parent=0 // pred_check
    _
  $region31: #{_forward.14} parent=0 // pred_check_branch
    %977 = sbr.rel (0) target = $region33
  $region32: #{_forward.14} parent=0 // pred_region
    _
  $region33: #{_forward.14} parent=0 // pred_fallthru
    _
  // Predicated region
  $region34: #{_forward.14} parent=0 // pred_check
    _
  $region35: #{_forward.14} parent=0 // pred_check_branch
    %979 = sbr.rel (0) target = $region37
  $region36: #{_forward.14} parent=0 // pred_region
    _
  $region37: #{_forward.14} parent=0 // pred_fallthru
    _
  // Predicated region
  $region38: #{_forward.14} parent=0 // pred_check
    _
  $region39: #{_forward.14} parent=0 // pred_check_branch
    %981 = sbr.rel (0) target = $region41
  $region40: #{_forward.14} parent=0 // pred_region
    _
  $region41: #{_forward.14} parent=0 // pred_fallthru
    _
  // Predicated region
  $region42: #{_forward.14} parent=0 // pred_check
    _
  $region43: #{_forward.14} parent=0 // pred_check_branch
    %983 = sbr.rel (0) target = $region45
  $region44: #{_forward.14} parent=0 // pred_region
    _
  $region45: #{_forward.14} parent=0 // pred_fallthru
    _
  // Predicated region
  $region46: #{_forward.14} parent=0 // pred_check
    _
  $region47: #{_forward.14} parent=0 // pred_check_branch
    %985 = sbr.rel (0) target = $region49
  $region48: #{_forward.14} parent=0 // pred_region
    _
  $region49: #{_forward.14} parent=0 // pred_fallthru
    _
  // Predicated region
  $region50: #{_forward.14} parent=0 // pred_check
    _
  $region51: #{_forward.14} parent=0 // pred_check_branch
    %987 = sbr.rel (0) target = $region53
  $region52: #{_forward.14} parent=0 // pred_region
    _
  $region53: #{_forward.14} parent=0 // pred_fallthru
    _

// kernel: _forward.25
$region0: #{_forward.25}
  #allocation0 [shape = 'u32[]', space=smem, size = 0x4, offset = 0x4, fixed_abs, tag = 'smem constant byte address 0x4 - core index']
  #allocation1 [shape = 'u32[144,128]{1,0:T(1,128)}', space=vmem, size = 0x12000, scoped, tag = 'internal scratch']
  %s0 = inlined_call_operand.vmem [shape: bf16[16,32], index: 0, kind: input, shape index: {}]
  %s1 = inlined_call_operand.vmem [shape: f32[1,32], index: 1, kind: input, shape index: {}]
  %s2 = inlined_call_operand.vmem [shape: f32[1,32], index: 2, kind: input, shape index: {}]
  %s3 = inlined_call_operand.hbm [shape: f32[16,32], index: 3, kind: output, shape index: {}]
  %s4 = sld [smem:[#allocation0]]
  $region22: #{_forward.25} parent=0
    _
  %s6 = ssub.s32 1, %s4
  %s7 = scalar_select 0, %s6, %s4
  $region1: #{_forward.25} parent=0
    #allocation2 [shape = 'u8[8192]{0}', space=vmem, size = 0x2000, scoped, tag = 'output window, operand 0, single buffered']
    #allocation3 [shape = 's32[1]{0}', space=sflag, size = 0x4, scoped, tag = 'scoped memory for _forward.25']
    %8 = vsyncpa [#allocation3], 0
    // Predicated region
    $region2: #{_forward.25} parent=1 // pred_check
      _
    $region3: #{_forward.25} parent=1 // pred_check_branch
      %10 = sbr.rel (0) target = $region5
    $region4: #{_forward.25} parent=1 // pred_region
      _
    $region5: #{_forward.25} parent=1 // pred_fallthru
      _
    // Predicated region
    $region6: #{_forward.25} parent=1 // pred_check
      _
    $region7: #{_forward.25} parent=1 // pred_check_branch
      %12 = sbr.rel (0) target = $region9
    $region8: #{_forward.25} parent=1 // pred_region
      _
    $region9: #{_forward.25} parent=1 // pred_fallthru
      _
    // Predicated region
    $region10: #{_forward.25} parent=1 // pred_check
      _
    $region11: #{_forward.25} parent=1 // pred_check_branch
      %14 = sbr.rel (0) target = $region13
    $region12: #{_forward.25} parent=1 // pred_region
      _
    $region13: #{_forward.25} parent=1 // pred_fallthru
      _
    %v15 = vld [vmem:[%s0] sm:$0xf]
    %v16 = vld [vmem:[%s0 + $0x4] sm:$0xf]
    %v17 = vld [vmem:[%s1] sm:$0x1]
    %v18 = vld [vmem:[%s2] sm:$0x1]
    %v19 = vunpack.c.l.bf16 %v15
    %v20 = vunpack.c.l.bf16 %v16
    %vm21 = vcmask 261120
    %v22 = vsel %vm21, %v19, 0.0
    %23 = vadd.xlane.f32.xlu0 %v22
    %v24 = vpop.xlane.xlu0 %23
    %v25 = vsel %vm21, %v20, 0.0
    %26 = vadd.xlane.f32.xlu0 %v25
    %v27 = vpop.xlane.xlu0 %26
    %v28 = vrcp.pop 32.0
    %v29 = vmul.f32 %v24, %v28
    %v30 = vmul.f32 %v27, %v28
    %v31 = vsub.f32 %v19, %v29
    %v32 = vsub.f32 %v20, %v30
    %v33 = vmul.f32 %v31, %v31
    %v34 = vmul.f32 %v32, %v32
    %v35 = vsel %vm21, %v33, 0.0
    %36 = vadd.xlane.f32.xlu0 %v35
    %v37 = vpop.xlane.xlu0 %36
    %v38 = vsel %vm21, %v34, 0.0
    %39 = vadd.xlane.f32.xlu0 %v38
    %v40 = vpop.xlane.xlu0 %39
    %v41 = vmul.f32 %v37, %v28
    %v42 = vmul.f32 %v40, %v28
    %v43 = vadd.f32 %v41, 1e-05
    %v44 = vadd.f32 %v42, 1e-05
    %v45 = vrsqrt.pop %v43
    %v46 = vrsqrt.pop %v44
    %v47 = vmul.f32 %v31, %v45
    %v48 = vmul.f32 %v32, %v46
    %v50 = vlaneseq
    %v51 = vshrl.u32 %v50, 7
    %v52 = vsub.s32 0, %v51
    %v53 = vrot.slane %v17, %v52
    %v55 = vmul.f32 %v47, %v53
    %v56 = vmul.f32 %v48, %v53
    %v58 = vlaneseq
    %v59 = vshrl.u32 %v58, 7
    %v60 = vsub.s32 0, %v59
    %v61 = vrot.slane %v18, %v60
    %v63 = vadd.f32 %v55, %v61
    %v64 = vadd.f32 %v56, %v61
    %65 = vst.msk [vmem:[#allocation2] sm:$0xff] %vm21, %v63
    %66 = vst.msk [vmem:[#allocation2 + $0x8] sm:$0xff] %vm21, %v64
    // Predicated region
    $region14: #{_forward.25} parent=1 // pred_check
      _
    $region15: #{_forward.25} parent=1 // pred_check_branch
      %68 = sbr.rel (0) target = $region17
    $region16: #{_forward.25} parent=1 // pred_region
      %s70 = ssub.s32 256, 256
      %71 = vsyncadd [#allocation3], %s70
      %s72 = sshll.u32 [#allocation2], 4
      %s73 = int_to_ptr.vmem [resolvable:$true] %s72
      %78 = dma.vmem_to_hbm [thread:$0]  %s73, 256, %s3, [#allocation3], 128, 128, 8
    $region17: #{_forward.25} parent=1 // pred_fallthru
      _
    // Predicated region
    $region18: #{_forward.25} parent=1 // pred_check
      _
    $region19: #{_forward.25} parent=1 // pred_check_branch
      %80 = sbr.rel (0) target = $region21
    $region20: #{_forward.25} parent=1 // pred_region
      %81 = dma.done [#allocation3], 256
    $region21: #{_forward.25} parent=1 // pred_fallthru
      _
    %82 = vsyncpa [#allocation3], 1

// kernel: _forward.18
$region0: #{_forward.18}
  #allocation0 [shape = 'u32[]', space=smem, size = 0x4, offset = 0x4, fixed_abs, tag = 'smem constant byte address 0x4 - core index']
  #allocation1 [shape = 'u32[144,128]{1,0:T(1,128)}', space=vmem, size = 0x12000, scoped, tag = 'internal scratch']
  %s0 = inlined_call_operand.vmem [shape: bf16[16,128], index: 0, kind: input, shape index: {}]
  %s1 = inlined_call_operand.vmem [shape: bf16[128,32], index: 1, kind: input, shape index: {}]
  %s2 = inlined_call_operand.vmem [shape: f32[1,32], index: 2, kind: input, shape index: {}]
  %s3 = inlined_call_operand.vmem [shape: bf16[16,32], index: 3, kind: input, shape index: {}]
  %s4 = inlined_call_operand.vmem [shape: bf16[16,32], index: 4, kind: output, shape index: {}]
  %s5 = sld [smem:[#allocation0]]
  $region26: #{_forward.18} parent=0
    _
  %s7 = ssub.s32 1, %s5
  %s8 = scalar_select 0, %s7, %s5
  // Predicated region
  $region2: #{_forward.18} parent=0 // pred_check
    _
  $region3: #{_forward.18} parent=0 // pred_check_branch
    %10 = sbr.rel (0) target = $region5
  $region4: #{_forward.18} parent=0 // pred_region
    _
  $region5: #{_forward.18} parent=0 // pred_fallthru
    _
  // Predicated region
  $region6: #{_forward.18} parent=0 // pred_check
    _
  $region7: #{_forward.18} parent=0 // pred_check_branch
    %12 = sbr.rel (0) target = $region9
  $region8: #{_forward.18} parent=0 // pred_region
    _
  $region9: #{_forward.18} parent=0 // pred_fallthru
    _
  // Predicated region
  $region10: #{_forward.18} parent=0 // pred_check
    _
  $region11: #{_forward.18} parent=0 // pred_check_branch
    %14 = sbr.rel (0) target = $region13
  $region12: #{_forward.18} parent=0 // pred_region
    _
  $region13: #{_forward.18} parent=0 // pred_fallthru
    _
  // Predicated region
  $region14: #{_forward.18} parent=0 // pred_check
    _
  $region15: #{_forward.18} parent=0 // pred_check_branch
    %16 = sbr.rel (0) target = $region17
  $region16: #{_forward.18} parent=0 // pred_region
    _
  $region17: #{_forward.18} parent=0 // pred_fallthru
    _
  %v18 = vld [vmem:[%s0] sm:$0xf]
  %v19 = vld [vmem:[%s0 + $0x4] sm:$0xf]
  %v20 = vld [vmem:[%s1] sm:$0xf]
  %v21 = vld [vmem:[%s1 + $0x4] sm:$0xf]
  %v22 = vld [vmem:[%s1 + $0x8] sm:$0xf]
  %v23 = vld [vmem:[%s1 + $0xc] sm:$0xf]
  %v24 = vld [vmem:[%s1 + $0x10] sm:$0xf]
  %v25 = vld [vmem:[%s1 + $0x14] sm:$0xf]
  %v26 = vld [vmem:[%s1 + $0x18] sm:$0xf]
  %v27 = vld [vmem:[%s1 + $0x1c] sm:$0xf]
  %v28 = vld [vmem:[%s1 + $0x20] sm:$0xf]
  %v29 = vld [vmem:[%s1 + $0x24] sm:$0xf]
  %v30 = vld [vmem:[%s1 + $0x28] sm:$0xf]
  %v31 = vld [vmem:[%s1 + $0x2c] sm:$0xf]
  %v32 = vld [vmem:[%s1 + $0x30] sm:$0xf]
  %v33 = vld [vmem:[%s1 + $0x34] sm:$0xf]
  %v34 = vld [vmem:[%s1 + $0x38] sm:$0xf]
  %v35 = vld [vmem:[%s1 + $0x3c] sm:$0xf]
  %v36 = vld [vmem:[%s2] sm:$0x1]
  %v38 = vlaneseq
  %v39 = vshrl.u32 %v38, 7
  %v40 = vsub.s32 0, %v39
  %v41 = vrot.slane %v36, %v40
  %v45 = vunpack.c.l.b16 %v18
  %v46 = vunpack.c.l.b16 %v19
  %v47 = vpack.c.b16 %v46, %v45
  %v65 = vunpack.c.l.b16 %v20
  %v66 = vunpack.c.l.b16 %v21
  %v67 = vunpack.c.l.b16 %v22
  %v68 = vunpack.c.l.b16 %v23
  %v69 = vunpack.c.l.b16 %v24
  %v70 = vunpack.c.l.b16 %v25
  %v71 = vunpack.c.l.b16 %v26
  %v72 = vunpack.c.l.b16 %v27
  %v73 = vunpack.c.l.b16 %v28
  %v74 = vunpack.c.l.b16 %v29
  %v75 = vunpack.c.l.b16 %v30
  %v76 = vunpack.c.l.b16 %v31
  %v77 = vunpack.c.l.b16 %v32
  %v78 = vunpack.c.l.b16 %v33
  %v79 = vunpack.c.l.b16 %v34
  %v80 = vunpack.c.l.b16 %v35
  %v81 = vpack.c.b16 %v66, %v65
  %v82 = vpack.c.b16 %v68, %v67
  %v83 = vpack.c.b16 %v70, %v69
  %v84 = vpack.c.b16 %v72, %v71
  %v85 = vpack.c.b16 %v74, %v73
  %v86 = vpack.c.b16 %v76, %v75
  %v87 = vpack.c.b16 %v78, %v77
  %v88 = vpack.c.b16 %v80, %v79
  %97 = vmatprep.subr.bf16.mxu0 0
  %98 = vmatpush1.bf16.msra.mxu0 %v81
  %99 = vmatprep.subr.bf16.mxu0 0
  %100 = vmatpush1.bf16.msra.mxu0 %v82
  %101 = vmatprep.subr.bf16.mxu0 0
  %102 = vmatpush1.bf16.msra.mxu0 %v83
  %103 = vmatprep.subr.bf16.mxu0 0
  %104 = vmatpush1.bf16.msra.mxu0 %v84
  %105 = vmatprep.subr.bf16.mxu0 0
  %106 = vmatpush1.bf16.msra.mxu0 %v85
  %107 = vmatprep.subr.bf16.mxu0 0
  %108 = vmatpush1.bf16.msra.mxu0 %v86
  %109 = vmatprep.subr.bf16.mxu0 0
  %110 = vmatpush1.bf16.msra.mxu0 %v87
  %111 = vmatprep.subr.bf16.mxu0 0
  %112 = vmatpush1.bf16.msra.mxu0 %v88
  %113 = vmatprep.subr.bf16.mxu0 0
  %114 = vmatpush1.bf16.msra.mxu0 0
  %115 = vmatprep.subr.bf16.mxu0 0
  %116 = vmatpush1.bf16.msra.mxu0 0
  %117 = vmatprep.subr.bf16.mxu0 0
  %118 = vmatpush1.bf16.msra.mxu0 0
  %119 = vmatprep.subr.bf16.mxu0 0
  %120 = vmatpush1.bf16.msra.mxu0 0
  %121 = vmatprep.subr.bf16.mxu0 0
  %122 = vmatpush1.bf16.msra.mxu0 0
  %123 = vmatprep.subr.bf16.mxu0 0
  %124 = vmatpush1.bf16.msra.mxu0 0
  %125 = vmatprep.subr.bf16.mxu0 0
  %126 = vmatpush1.bf16.msra.mxu0 0
  %127 = vmatprep.subr.bf16.mxu0 0
  %128 = vmatpush1.bf16.msra.mxu0 0
  %129 = vmatprep.mubr.bf16.mxu0 0
  %130 = vmatmul.mubr.bf16.gmra.mrb[0].mxu0 %v47
  %v131 = vpop.f32.mrb[0].mxu0
  %v132 = vadd.f32 %v41, %v131
  %v133 = vpop.f32.mrb[0].mxu0
  %v134 = vpop.f32.mrb[0].mxu0
  %v135 = vadd.f32 %v41, %v134
  %v136 = vpop.f32.mrb[0].mxu0
  %137 = vdwg.mxu0
  %v138 = vld [vmem:[%s3] sm:$0xf]
  %v139 = vld [vmem:[%s3 + $0x4] sm:$0xf]
  %v140 = vunpack.c.l.bf16 %v138
  %v141 = vunpack.c.l.bf16 %v139
  %v142 = vadd.f32 %v132, %v140
  %v143 = vadd.f32 %v135, %v141
  %v144 = vpack.c.bf16 %v143, %v142
  %v146 = vunpack.c.l.b16 %v144
  %v147 = vunpack.c.h.b16 %v144
  %v148 = vpack.c.b16 %v146, %v146
  %v149 = vpack.c.b16 %v147, %v147
  %vm152 = vcmask 257024
  %153 = vst.msk [vmem:[%s4] sm:$0xf] %vm152, %v148
  %154 = vst.msk [vmem:[%s4 + $0x4] sm:$0xf] %vm152, %v149
  // Predicated region
  $region18: #{_forward.18} parent=0 // pred_check
    _
  $region19: #{_forward.18} parent=0 // pred_check_branch
    %156 = sbr.rel (0) target = $region21
  $region20: #{_forward.18} parent=0 // pred_region
    _
  $region21: #{_forward.18} parent=0 // pred_fallthru
    _
  // Predicated region
  $region22: #{_forward.18} parent=0 // pred_check
    _
  $region23: #{_forward.18} parent=0 // pred_check_branch
    %158 = sbr.rel (0) target = $region25
  $region24: #{_forward.18} parent=0 // pred_region
    _
  $region25: #{_forward.18} parent=0 // pred_fallthru
    _

// kernel: _forward.17
$region0: #{_forward.17}
  #allocation0 [shape = 'u32[]', space=smem, size = 0x4, offset = 0x4, fixed_abs, tag = 'smem constant byte address 0x4 - core index']
  #allocation1 [shape = 'u32[144,128]{1,0:T(1,128)}', space=vmem, size = 0x12000, scoped, tag = 'internal scratch']
  %s0 = inlined_call_operand.vmem [shape: bf16[16,32], index: 0, kind: input, shape index: {}]
  %s1 = inlined_call_operand.vmem [shape: bf16[32,128], index: 1, kind: input, shape index: {}]
  %s2 = inlined_call_operand.vmem [shape: f32[1,128], index: 2, kind: input, shape index: {}]
  %s3 = inlined_call_operand.vmem [shape: f32[1,32], index: 3, kind: input, shape index: {}]
  %s4 = inlined_call_operand.vmem [shape: f32[1,32], index: 4, kind: input, shape index: {}]
  %s5 = inlined_call_operand.vmem [shape: bf16[16,128], index: 5, kind: output, shape index: {}]
  %s6 = sld [smem:[#allocation0]]
  $region30: #{_forward.17} parent=0
    _
  %s8 = ssub.s32 1, %s6
  %s9 = scalar_select 0, %s8, %s6
  // Predicated region
  $region2: #{_forward.17} parent=0 // pred_check
    _
  $region3: #{_forward.17} parent=0 // pred_check_branch
    %11 = sbr.rel (0) target = $region5
  $region4: #{_forward.17} parent=0 // pred_region
    _
  $region5: #{_forward.17} parent=0 // pred_fallthru
    _
  // Predicated region
  $region6: #{_forward.17} parent=0 // pred_check
    _
  $region7: #{_forward.17} parent=0 // pred_check_branch
    %13 = sbr.rel (0) target = $region9
  $region8: #{_forward.17} parent=0 // pred_region
    _
  $region9: #{_forward.17} parent=0 // pred_fallthru
    _
  // Predicated region
  $region10: #{_forward.17} parent=0 // pred_check
    _
  $region11: #{_forward.17} parent=0 // pred_check_branch
    %15 = sbr.rel (0) target = $region13
  $region12: #{_forward.17} parent=0 // pred_region
    _
  $region13: #{_forward.17} parent=0 // pred_fallthru
    _
  // Predicated region
  $region14: #{_forward.17} parent=0 // pred_check
    _
  $region15: #{_forward.17} parent=0 // pred_check_branch
    %17 = sbr.rel (0) target = $region17
  $region16: #{_forward.17} parent=0 // pred_region
    _
  $region17: #{_forward.17} parent=0 // pred_fallthru
    _
  // Predicated region
  $region18: #{_forward.17} parent=0 // pred_check
    _
  $region19: #{_forward.17} parent=0 // pred_check_branch
    %19 = sbr.rel (0) target = $region21
  $region20: #{_forward.17} parent=0 // pred_region
    _
  $region21: #{_forward.17} parent=0 // pred_fallthru
    _
  %v21 = vld [vmem:[%s0] sm:$0xf]
  %v22 = vld [vmem:[%s0 + $0x4] sm:$0xf]
  %v23 = vld [vmem:[%s3] sm:$0x1]
  %v24 = vld [vmem:[%s4] sm:$0x1]
  %v25 = vunpack.c.l.bf16 %v21
  %v26 = vunpack.c.l.bf16 %v22
  %vm27 = vcmask 261120
  %v28 = vsel %vm27, %v25, 0.0
  %29 = vadd.xlane.f32.xlu0 %v28
  %v30 = vpop.xlane.xlu0 %29
  %v31 = vsel %vm27, %v26, 0.0
  %32 = vadd.xlane.f32.xlu0 %v31
  %v33 = vpop.xlane.xlu0 %32
  %v34 = vrcp.pop 32.0
  %v35 = vmul.f32 %v30, %v34
  %v36 = vmul.f32 %v33, %v34
  %v37 = vsub.f32 %v25, %v35
  %v38 = vsub.f32 %v26, %v36
  %v39 = vmul.f32 %v37, %v37
  %v40 = vmul.f32 %v38, %v38
  %v41 = vsel %vm27, %v39, 0.0
  %42 = vadd.xlane.f32.xlu0 %v41
  %v43 = vpop.xlane.xlu0 %42
  %v44 = vsel %vm27, %v40, 0.0
  %45 = vadd.xlane.f32.xlu0 %v44
  %v46 = vpop.xlane.xlu0 %45
  %v47 = vmul.f32 %v43, %v34
  %v48 = vmul.f32 %v46, %v34
  %v49 = vadd.f32 %v47, 1e-05
  %v50 = vadd.f32 %v48, 1e-05
  %v51 = vrsqrt.pop %v49
  %v52 = vrsqrt.pop %v50
  %v53 = vmul.f32 %v37, %v51
  %v54 = vmul.f32 %v38, %v52
  %v56 = vlaneseq
  %v57 = vshrl.u32 %v56, 7
  %v58 = vsub.s32 0, %v57
  %v59 = vrot.slane %v23, %v58
  %v61 = vmul.f32 %v53, %v59
  %v62 = vmul.f32 %v54, %v59
  %v64 = vlaneseq
  %v65 = vshrl.u32 %v64, 7
  %v66 = vsub.s32 0, %v65
  %v67 = vrot.slane %v24, %v66
  %v69 = vadd.f32 %v61, %v67
  %v70 = vadd.f32 %v62, %v67
  %v71 = vpack.c.bf16 %v70, %v69
  %v72 = vld [vmem:[%s1] sm:$0xf]
  %v73 = vld [vmem:[%s1 + $0x4] sm:$0xf]
  %v74 = vld [vmem:[%s1 + $0x8] sm:$0xf]
  %v75 = vld [vmem:[%s1 + $0xc] sm:$0xf]
  %v76 = vld [vmem:[%s2] sm:$0x1]
  %v78 = vlaneseq
  %v79 = vshrl.u32 %v78, 7
  %v80 = vsub.s32 0, %v79
  %v81 = vrot.slane %v76, %v80
  %v87 = vunpack.c.l.b16 %v72
  %v88 = vunpack.c.l.b16 %v73
  %v89 = vunpack.c.l.b16 %v74
  %v90 = vunpack.c.l.b16 %v75
  %v91 = vpack.c.b16 %v88, %v87
  %v92 = vpack.c.b16 %v90, %v89
  %v96 = vsel %vm27, %v71, 0
  %98 = vmatprep.subr.bf16.mxu0 0
  %99 = vmatpush1.bf16.msra.mxu0 %v91
  %100 = vmatprep.subr.bf16.mxu0 0
  %101 = vmatpush1.bf16.msra.mxu0 %v92
  %102 = vmatprep.subr.bf16.mxu0 0
  %103 = vmatpush1.bf16.msra.mxu0 0
  %104 = vmatprep.subr.bf16.mxu0 0
  %105 = vmatpush1.bf16.msra.mxu0 0
  %106 = vmatprep.subr.bf16.mxu0 0
  %107 = vmatpush1.bf16.msra.mxu0 0
  %108 = vmatprep.subr.bf16.mxu0 0
  %109 = vmatpush1.bf16.msra.mxu0 0
  %110 = vmatprep.subr.bf16.mxu0 0
  %111 = vmatpush1.bf16.msra.mxu0 0
  %112 = vmatprep.subr.bf16.mxu0 0
  %113 = vmatpush1.bf16.msra.mxu0 0
  %114 = vmatprep.subr.bf16.mxu0 0
  %115 = vmatpush1.bf16.msra.mxu0 0
  %116 = vmatprep.subr.bf16.mxu0 0
  %117 = vmatpush1.bf16.msra.mxu0 0
  %118 = vmatprep.subr.bf16.mxu0 0
  %119 = vmatpush1.bf16.msra.mxu0 0
  %120 = vmatprep.subr.bf16.mxu0 0
  %121 = vmatpush1.bf16.msra.mxu0 0
  %122 = vmatprep.subr.bf16.mxu0 0
  %123 = vmatpush1.bf16.msra.mxu0 0
  %124 = vmatprep.subr.bf16.mxu0 0
  %125 = vmatpush1.bf16.msra.mxu0 0
  %126 = vmatprep.subr.bf16.mxu0 0
  %127 = vmatpush1.bf16.msra.mxu0 0
  %128 = vmatprep.subr.bf16.mxu0 0
  %129 = vmatpush1.bf16.msra.mxu0 0
  %130 = vmatprep.mubr.bf16.mxu0 0
  %131 = vmatmul.mubr.bf16.gmra.mrb[0].mxu0 %v96
  %v132 = vpop.f32.mrb[0].mxu0
  %v133 = vadd.f32 %v81, %v132
  %v134 = vpop.f32.mrb[0].mxu0
  %v135 = vpop.f32.mrb[0].mxu0
  %v136 = vadd.f32 %v81, %v135
  %v137 = vpop.f32.mrb[0].mxu0
  %138 = vdwg.mxu0
  %v139 = vmax.f32 %v133, 0.0
  %v140 = vmax.f32 %v136, 0.0
  %v141 = vmul.f32 %v139, %v139
  %v142 = vmul.f32 %v140, %v140
  %v143 = vpack.c.bf16 %v142, %v141
  %v145 = vunpack.c.l.b16 %v143
  %v146 = vunpack.c.h.b16 %v143
  %v147 = vpack.c.b16 %v145, %v145
  %v148 = vpack.c.b16 %v146, %v146
  %151 = vst [vmem:[%s5] sm:$0xf] %v147
  %152 = vst [vmem:[%s5 + $0x4] sm:$0xf] %v148
  // Predicated region
  $region22: #{_forward.17} parent=0 // pred_check
    _
  $region23: #{_forward.17} parent=0 // pred_check_branch
    %154 = sbr.rel (0) target = $region25
  $region24: #{_forward.17} parent=0 // pred_region
    _
  $region25: #{_forward.17} parent=0 // pred_fallthru
    _
  // Predicated region
  $region26: #{_forward.17} parent=0 // pred_check
    _
  $region27: #{_forward.17} parent=0 // pred_check_branch
    %156 = sbr.rel (0) target = $region29
  $region28: #{_forward.17} parent=0 // pred_region
    _
  $region29: #{_forward.17} parent=0 // pred_fallthru
    _

</llo_original>
